<compile_context>
chip_gen: v7x
topology: tpu7x:2x2x1
jax: 0.10.0
libtpu: 0.0.40
codegen_flags: <defaults>
</compile_context>

<pallas_src>
import numpy as np
import jax
import jax.numpy as jnp
from jax.experimental import pallas as pl
from jax.experimental.pallas import tpu as pltpu


# ---------------------------------------------------------------------------
# Fused kernel: conv(+BN) -> ReLU -> 1x1 -> softmax(ch) -> maxpool -> MLP head
# ---------------------------------------------------------------------------
def _lane_exist_kernel(p_ref, wc_ref, b0_ref, w11_ref, b11_ref, pool_ref,
                       w1_ref, b1_ref, w2_ref, b2_ref, o_ref):
    # p_ref   : (1, 9*Cin, HW)  bf16  im2col patches of the dilated 3x3 conv
    # wc_ref  : (C1, 9*Cin)     bf16  conv weight with BN scale folded in
    # b0_ref  : (C1, 1)         f32   BN shift (folded bias)
    # w11_ref : (C2, C1), b11_ref: (C2, 1)        1x1 conv (+bias)
    # pool_ref: (4, HW, HWp)    f32   0/1 selection matrices for 2x2 maxpool
    # w1_ref  : (C2, HWp, D1), b1_ref: (1, D1)    Linear1 (flatten folded)
    # w2_ref  : (D1, Np), b2_ref: (1, Np)         Linear2 (lane-padded to 128)
    # o_ref   : (1, 1, Np)
    feat = jnp.dot(wc_ref[...], p_ref[0], preferred_element_type=jnp.float32)
    feat = jnp.maximum(feat + b0_ref[...], 0.0)               # BN (eval) + ReLU
    # TODO(synk): Dropout2d(0.1) is identity at inference; train-mode channel
    # dropout is not implemented.
    logits = jnp.dot(w11_ref[...], feat,
                     preferred_element_type=jnp.float32) + b11_ref[...]
    m = jnp.max(logits, axis=0, keepdims=True)                # softmax over dim=1 (channels)
    e = jnp.exp(logits - m)
    sm = e / jnp.sum(e, axis=0, keepdims=True)                # (C2, HW)

    # 2x2 maxpool: gather the four window candidates via selection matmuls, max them.
    c00 = jnp.dot(sm, pool_ref[0], preferred_element_type=jnp.float32)
    c01 = jnp.dot(sm, pool_ref[1], preferred_element_type=jnp.float32)
    c10 = jnp.dot(sm, pool_ref[2], preferred_element_type=jnp.float32)
    c11 = jnp.dot(sm, pool_ref[3], preferred_element_type=jnp.float32)
    pooled = jnp.maximum(jnp.maximum(c00, c01), jnp.maximum(c10, c11))   # (C2, HWp)

    # flatten (channel-major, matching torch .view) folded into Linear1:
    # out1 = sum_c pooled[c] @ W1[:, c*HWp:(c+1)*HWp]^T
    h1 = b1_ref[...]
    for c in range(w1_ref.shape[0]):
        h1 = h1 + jnp.dot(pooled[c:c + 1, :], w1_ref[c],
                          preferred_element_type=jnp.float32)
    h1 = jnp.maximum(h1, 0.0)                                  # ReLU
    z = jnp.dot(h1, w2_ref[...], preferred_element_type=jnp.float32) + b2_ref[...]
    o_ref[0] = 1.0 / (1.0 + jnp.exp(-z))                       # sigmoid


# ---------------------------------------------------------------------------
# Wrapper (plain-JAX glue: im2col, BN folding, flatten folding, padding)
# ---------------------------------------------------------------------------
def lane_exist_forward(x, conv_w, bn_gamma, bn_beta, bn_mean, bn_var,
                       conv1x1_w, conv1x1_b, lin1_w, lin1_b, lin2_w, lin2_b,
                       bn_eps=1e-3):
    B, Cin, H, W = x.shape
    C1 = conv_w.shape[0]          # 32
    C2 = conv1x1_w.shape[0]       # 5
    D1, Channel = lin1_w.shape    # (128, C2*(H/2)*(W/2))
    No = lin2_w.shape[0]
    HW = H * W
    Hp, Wp = H // 2, W // 2
    HWp = Hp * Wp
    assert Channel == C2 * HWp, "Linear(Channel) must equal 5*(H/2)*(W/2)"
    Np = ((No + 127) // 128) * 128                            # lane-dense output width
    f32 = jnp.float32

    # --- fold BatchNorm (eval / running stats) into the conv weight & bias ---
    scale = bn_gamma / jnp.sqrt(bn_var + bn_eps)                         # (C1,)
    wmat = conv_w.transpose(0, 2, 3, 1).reshape(C1, 9 * Cin)             # (ky*3+kx)*Cin + ci
    wfold = (wmat * scale[:, None]).astype(jnp.bfloat16)
    b0 = (bn_beta - bn_mean * scale).reshape(C1, 1).astype(f32)

    # --- im2col for 3x3 conv, dilation=4, padding=4 (spatial size preserved) ---
    xb = x.astype(jnp.bfloat16)
    xpad = jnp.pad(xb, ((0, 0), (0, 0), (4, 4), (4, 4)))
    taps = []
    for ky in range(3):
        for kx in range(3):
            dy, dx = 4 * ky, 4 * kx
            taps.append(xpad[:, :, dy:dy + H, dx:dx + W].reshape(B, Cin, HW))
    patches = jnp.concatenate(taps, axis=1)                              # (B, 9*Cin, HW) bf16

    # --- 0/1 selection matrices implementing the 2x2 stride-2 maxpool ---
    pool_np = np.zeros((4, HW, HWp), np.float32)
    for j, (dy, dx) in enumerate(((0, 0), (0, 1), (1, 0), (1, 1))):
        for yo in range(Hp):
            for xo in range(Wp):
                pool_np[j, (2 * yo + dy) * W + (2 * xo + dx), yo * Wp + xo] = 1.0
    pool_m = jnp.asarray(pool_np)

    # --- head parameters (fold torch flatten order; pad Linear2 to 128 lanes) ---
    w11 = conv1x1_w.reshape(C2, C1).astype(f32)
    b11 = conv1x1_b.reshape(C2, 1).astype(f32)
    w1r = lin1_w.reshape(D1, C2, HWp).transpose(1, 2, 0).astype(f32)     # (C2, HWp, D1)
    b1r = lin1_b.reshape(1, D1).astype(f32)
    w2r = jnp.pad(lin2_w.T.astype(f32), ((0, 0), (0, Np - No)))          # (D1, Np)
    b2r = jnp.pad(lin2_b.reshape(1, No).astype(f32), ((0, 0), (0, Np - No)))

    flops = 2 * B * (C1 * 9 * Cin * HW + C2 * C1 * HW + 4 * C2 * HW * HWp
                     + C2 * HWp * D1 + D1 * Np)
    transcendentals = B * (C2 * HW + Np)
    bytes_accessed = (patches.size * 2 + wfold.size * 2 + pool_m.size * 4
                      + w1r.size * 4 + w2r.size * 4 + B * Np * 4
                      + 4 * (C1 + 2 * C2 + D1 + Np))

    out = pl.pallas_call(
        _lane_exist_kernel,
        out_shape=jax.ShapeDtypeStruct((B, 1, Np), f32),
        grid=(B,),
        in_specs=[
            pl.BlockSpec((1, 9 * Cin, HW), lambda b: (b, 0, 0)),   # patches (per batch)
            pl.BlockSpec((C1, 9 * Cin), lambda b: (0, 0)),         # folded conv weight
            pl.BlockSpec((C1, 1), lambda b: (0, 0)),               # folded BN bias
            pl.BlockSpec((C2, C1), lambda b: (0, 0)),              # 1x1 weight
            pl.BlockSpec((C2, 1), lambda b: (0, 0)),               # 1x1 bias
            pl.BlockSpec((4, HW, HWp), lambda b: (0, 0, 0)),       # pool selection
            pl.BlockSpec((C2, HWp, D1), lambda b: (0, 0, 0)),      # linear1 weight
            pl.BlockSpec((1, D1), lambda b: (0, 0)),               # linear1 bias
            pl.BlockSpec((D1, Np), lambda b: (0, 0)),              # linear2 weight (padded)
            pl.BlockSpec((1, Np), lambda b: (0, 0)),               # linear2 bias (padded)
        ],
        out_specs=pl.BlockSpec((1, 1, Np), lambda b: (b, 0, 0)),
        compiler_params=pltpu.CompilerParams(dimension_semantics=("parallel",)),
        cost_estimate=pl.CostEstimate(flops=flops, transcendentals=transcendentals,
                                      bytes_accessed=bytes_accessed),
    )(patches, wfold, b0, w11, b11, pool_m, w1r, b1r, w2r, b2r)

    return out[:, 0, :No]


# ---------------------------------------------------------------------------
# Pure-JAX reference mirroring the PyTorch forward (eval mode), f32 path
# ---------------------------------------------------------------------------
def lane_exist_reference(x, conv_w, bn_gamma, bn_beta, bn_mean, bn_var,
                         conv1x1_w, conv1x1_b, lin1_w, lin1_b, lin2_w, lin2_b,
                         bn_eps=1e-3):
    y = jax.lax.conv_general_dilated(
        x, conv_w, window_strides=(1, 1), padding=((4, 4), (4, 4)),
        rhs_dilation=(4, 4), dimension_numbers=("NCHW", "OIHW", "NCHW"),
        precision=jax.lax.Precision.HIGHEST)
    scale = bn_gamma / jnp.sqrt(bn_var + bn_eps)
    y = y * scale[None, :, None, None] + (bn_beta - bn_mean * scale)[None, :, None, None]
    y = jnp.maximum(y, 0.0)
    z = jnp.einsum("oc,bchw->bohw", conv1x1_w.reshape(conv1x1_w.shape[0], -1), y,
                   precision=jax.lax.Precision.HIGHEST) + conv1x1_b[None, :, None, None]
    z = jax.nn.softmax(z, axis=1)
    B, C2, H, W = z.shape
    zp = z.reshape(B, C2, H // 2, 2, W // 2, 2).max(axis=(3, 5))
    v = zp.reshape(B, -1)
    h = jnp.maximum(v @ lin1_w.T + lin1_b[None, :], 0.0)
    return jax.nn.sigmoid(h @ lin2_w.T + lin2_b[None, :])


if __name__ == "__main__":
    # Lane_exist(num_output=4, Channel=320) applied to a (2, 512, 16, 16) input
    # (Channel must equal 5 * (H/2) * (W/2) for the PyTorch view/Linear to work).
    B, Cin, H, W = 2, 512, 16, 16
    C1, C2, D1 = 32, 5, 128
    No = 4
    Channel = C2 * (H // 2) * (W // 2)        # 320

    key = jax.random.PRNGKey(0)
    ks = jax.random.split(key, 12)
    x = jax.random.normal(ks[0], (B, Cin, H, W), jnp.float32)
    conv_w = jax.random.normal(ks[1], (C1, Cin, 3, 3), jnp.float32) * 0.02
    bn_gamma = 1.0 + 0.1 * jax.random.normal(ks[2], (C1,), jnp.float32)
    bn_beta = 0.1 * jax.random.normal(ks[3], (C1,), jnp.float32)
    bn_mean = 0.1 * jax.random.normal(ks[4], (C1,), jnp.float32)
    bn_var = 0.7 + 0.6 * jax.random.uniform(ks[5], (C1,), jnp.float32)
    conv1x1_w = jax.random.normal(ks[6], (C2, C1, 1, 1), jnp.float32) * 0.2
    conv1x1_b = jax.random.normal(ks[7], (C2,), jnp.float32) * 0.1
    lin1_w = jax.random.normal(ks[8], (D1, Channel), jnp.float32) * 0.05
    lin1_b = jax.random.normal(ks[9], (D1,), jnp.float32) * 0.05
    lin2_w = jax.random.normal(ks[10], (No, D1), jnp.float32) * 0.1
    lin2_b = jax.random.normal(ks[11], (No,), jnp.float32) * 0.1

    fwd = jax.jit(lane_exist_forward)
    out = jax.block_until_ready(fwd(x, conv_w, bn_gamma, bn_beta, bn_mean, bn_var,
                                    conv1x1_w, conv1x1_b, lin1_w, lin1_b,
                                    lin2_w, lin2_b))
    assert out.shape == (B, No)

    ref = lane_exist_reference(x, conv_w, bn_gamma, bn_beta, bn_mean, bn_var,
                               conv1x1_w, conv1x1_b, lin1_w, lin1_b,
                               lin2_w, lin2_b)
    # bf16 conv contraction (4608-deep) vs f32 reference => loose-ish tolerance.
    np.testing.assert_allclose(np.asarray(out), np.asarray(ref), rtol=2e-2, atol=2e-2)
    print("KERNEL_OK")
</pallas_src>

<mosaic_0001>
module attributes {stable_mosaic.version = 11 : i64} {
  func.func @_lane_exist_kernel(%arg0: i32, %arg1: memref<1x4608x256xbf16, #tpu.memory_space<vmem>>, %arg2: memref<32x4608xbf16, #tpu.memory_space<vmem>>, %arg3: memref<32x1xf32, #tpu.memory_space<vmem>>, %arg4: memref<5x32xf32, #tpu.memory_space<vmem>>, %arg5: memref<5x1xf32, #tpu.memory_space<vmem>>, %arg6: memref<4x256x64xf32, #tpu.memory_space<vmem>>, %arg7: memref<5x64x128xf32, #tpu.memory_space<vmem>>, %arg8: memref<1x128xf32, #tpu.memory_space<vmem>>, %arg9: memref<128x128xf32, #tpu.memory_space<vmem>>, %arg10: memref<1x128xf32, #tpu.memory_space<vmem>>, %arg11: memref<1x1x128xf32, #tpu.memory_space<vmem>>) attributes {dimension_semantics = [#tpu.dimension_semantics<parallel>], iteration_bounds = array<i64: 2>, scalar_prefetch = 0 : i64, scratch_operands = 0 : i64, tpu.core_type = #tpu.core_type<tc>, window_params = [{transform_indices = @transform_0, window_bounds = array<i64: 1, 4608, 256>}, {pipeline_mode = #tpu.pipeline_mode<synchronous>, transform_indices = @transform_1, window_bounds = array<i64: 32, 4608>}, {pipeline_mode = #tpu.pipeline_mode<synchronous>, transform_indices = @transform_2, window_bounds = array<i64: 32, 1>}, {pipeline_mode = #tpu.pipeline_mode<synchronous>, transform_indices = @transform_3, window_bounds = array<i64: 5, 32>}, {pipeline_mode = #tpu.pipeline_mode<synchronous>, transform_indices = @transform_4, window_bounds = array<i64: 5, 1>}, {pipeline_mode = #tpu.pipeline_mode<synchronous>, transform_indices = @transform_5, window_bounds = array<i64: 4, 256, 64>}, {pipeline_mode = #tpu.pipeline_mode<synchronous>, transform_indices = @transform_6, window_bounds = array<i64: 5, 64, 128>}, {pipeline_mode = #tpu.pipeline_mode<synchronous>, transform_indices = @transform_7, window_bounds = array<i64: 1, 128>}, {pipeline_mode = #tpu.pipeline_mode<synchronous>, transform_indices = @transform_8, window_bounds = array<i64: 128, 128>}, {pipeline_mode = #tpu.pipeline_mode<synchronous>, transform_indices = @transform_9, window_bounds = array<i64: 1, 128>}, {transform_indices = @transform_10, window_bounds = array<i64: 1, 1, 128>}]} {
    %c0 = arith.constant 0 : index
    %c0_0 = arith.constant 0 : index
    %0 = vector.load %arg2[%c0, %c0_0] : memref<32x4608xbf16, #tpu.memory_space<vmem>>, vector<32x4608xbf16>
    %c0_1 = arith.constant 0 : index
    %c0_2 = arith.constant 0 : index
    %c0_3 = arith.constant 0 : index
    %1 = vector.load %arg1[%c0_1, %c0_2, %c0_3] : memref<1x4608x256xbf16, #tpu.memory_space<vmem>>, vector<1x4608x256xbf16>
    %2 = vector.shape_cast %1 : vector<1x4608x256xbf16> to vector<4608x256xbf16>
    %cst = arith.constant dense<0.000000e+00> : vector<32x256xf32>
    %3 = tpu.matmul %0, %2, %cst {dimension_numbers = #tpu.dot_dimension_numbers<[1], [0], [0], [1], [0, 0, 1, 1], [], []>} : vector<32x4608xbf16>, vector<4608x256xbf16>, vector<32x256xf32> -> vector<32x256xf32>
    %c0_4 = arith.constant 0 : index
    %c0_5 = arith.constant 0 : index
    %4 = vector.load %arg3[%c0_4, %c0_5] : memref<32x1xf32, #tpu.memory_space<vmem>>, vector<32x1xf32>
    %5 = vector.broadcast %4 : vector<32x1xf32> to vector<32x256xf32>
    %6 = arith.addf %3, %5 : vector<32x256xf32>
    %cst_6 = arith.constant 0.000000e+00 : f32
    %7 = vector.broadcast %cst_6 : f32 to vector<32x256xf32>
    %8 = arith.maximumf %6, %7 : vector<32x256xf32>
    %c0_7 = arith.constant 0 : index
    %c0_8 = arith.constant 0 : index
    %9 = vector.load %arg4[%c0_7, %c0_8] : memref<5x32xf32, #tpu.memory_space<vmem>>, vector<5x32xf32>
    %cst_9 = arith.constant dense<0.000000e+00> : vector<5x256xf32>
    %10 = tpu.matmul %9, %8, %cst_9 {dimension_numbers = #tpu.dot_dimension_numbers<[1], [0], [0], [1], [0, 0, 1, 1], [], []>} : vector<5x32xf32>, vector<32x256xf32>, vector<5x256xf32> -> vector<5x256xf32>
    %c0_10 = arith.constant 0 : index
    %c0_11 = arith.constant 0 : index
    %11 = vector.load %arg5[%c0_10, %c0_11] : memref<5x1xf32, #tpu.memory_space<vmem>>, vector<5x1xf32>
    %12 = vector.broadcast %11 : vector<5x1xf32> to vector<5x256xf32>
    %13 = arith.addf %10, %12 : vector<5x256xf32>
    %cst_12 = arith.constant dense<0xFF800000> : vector<256xf32>
    %14 = vector.multi_reduction <maximumf>, %13, %cst_12 [0] : vector<5x256xf32> to vector<256xf32>
    %15 = vector.shape_cast %14 : vector<256xf32> to vector<1x256xf32>
    %16 = vector.broadcast %15 : vector<1x256xf32> to vector<5x256xf32>
    %17 = arith.subf %13, %16 : vector<5x256xf32>
    %18 = math.exp %17 : vector<5x256xf32>
    %cst_13 = arith.constant dense<0.000000e+00> : vector<256xf32>
    %19 = vector.multi_reduction <add>, %18, %cst_13 [0] : vector<5x256xf32> to vector<256xf32>
    %20 = vector.shape_cast %19 : vector<256xf32> to vector<1x256xf32>
    %21 = vector.broadcast %20 : vector<1x256xf32> to vector<5x256xf32>
    %22 = arith.divf %18, %21 : vector<5x256xf32>
    %c0_14 = arith.constant 0 : index
    %c0_15 = arith.constant 0 : index
    %c0_16 = arith.constant 0 : index
    %23 = vector.load %arg6[%c0_14, %c0_15, %c0_16] : memref<4x256x64xf32, #tpu.memory_space<vmem>>, vector<1x256x64xf32>
    %24 = vector.shape_cast %23 : vector<1x256x64xf32> to vector<256x64xf32>
    %cst_17 = arith.constant dense<0.000000e+00> : vector<5x64xf32>
    %25 = tpu.matmul %22, %24, %cst_17 {dimension_numbers = #tpu.dot_dimension_numbers<[1], [0], [0], [1], [0, 0, 1, 1], [], []>} : vector<5x256xf32>, vector<256x64xf32>, vector<5x64xf32> -> vector<5x64xf32>
    %c1 = arith.constant 1 : index
    %c0_18 = arith.constant 0 : index
    %c0_19 = arith.constant 0 : index
    %26 = vector.load %arg6[%c1, %c0_18, %c0_19] : memref<4x256x64xf32, #tpu.memory_space<vmem>>, vector<1x256x64xf32>
    %27 = vector.shape_cast %26 : vector<1x256x64xf32> to vector<256x64xf32>
    %cst_20 = arith.constant dense<0.000000e+00> : vector<5x64xf32>
    %28 = tpu.matmul %22, %27, %cst_20 {dimension_numbers = #tpu.dot_dimension_numbers<[1], [0], [0], [1], [0, 0, 1, 1], [], []>} : vector<5x256xf32>, vector<256x64xf32>, vector<5x64xf32> -> vector<5x64xf32>
    %c2 = arith.constant 2 : index
    %c0_21 = arith.constant 0 : index
    %c0_22 = arith.constant 0 : index
    %29 = vector.load %arg6[%c2, %c0_21, %c0_22] : memref<4x256x64xf32, #tpu.memory_space<vmem>>, vector<1x256x64xf32>
    %30 = vector.shape_cast %29 : vector<1x256x64xf32> to vector<256x64xf32>
    %cst_23 = arith.constant dense<0.000000e+00> : vector<5x64xf32>
    %31 = tpu.matmul %22, %30, %cst_23 {dimension_numbers = #tpu.dot_dimension_numbers<[1], [0], [0], [1], [0, 0, 1, 1], [], []>} : vector<5x256xf32>, vector<256x64xf32>, vector<5x64xf32> -> vector<5x64xf32>
    %c3 = arith.constant 3 : index
    %c0_24 = arith.constant 0 : index
    %c0_25 = arith.constant 0 : index
    %32 = vector.load %arg6[%c3, %c0_24, %c0_25] : memref<4x256x64xf32, #tpu.memory_space<vmem>>, vector<1x256x64xf32>
    %33 = vector.shape_cast %32 : vector<1x256x64xf32> to vector<256x64xf32>
    %cst_26 = arith.constant dense<0.000000e+00> : vector<5x64xf32>
    %34 = tpu.matmul %22, %33, %cst_26 {dimension_numbers = #tpu.dot_dimension_numbers<[1], [0], [0], [1], [0, 0, 1, 1], [], []>} : vector<5x256xf32>, vector<256x64xf32>, vector<5x64xf32> -> vector<5x64xf32>
    %35 = arith.maximumf %25, %28 : vector<5x64xf32>
    %36 = arith.maximumf %31, %34 : vector<5x64xf32>
    %37 = arith.maximumf %35, %36 : vector<5x64xf32>
    %c0_27 = arith.constant 0 : index
    %c0_28 = arith.constant 0 : index
    %38 = vector.load %arg8[%c0_27, %c0_28] : memref<1x128xf32, #tpu.memory_space<vmem>>, vector<1x128xf32>
    %39 = vector.extract_strided_slice %37 {offsets = [0, 0], sizes = [1, 64], strides = [1, 1]} : vector<5x64xf32> to vector<1x64xf32>
    %c0_29 = arith.constant 0 : index
    %c0_30 = arith.constant 0 : index
    %c0_31 = arith.constant 0 : index
    %40 = vector.load %arg7[%c0_29, %c0_30, %c0_31] : memref<5x64x128xf32, #tpu.memory_space<vmem>>, vector<1x64x128xf32>
    %41 = vector.shape_cast %40 : vector<1x64x128xf32> to vector<64x128xf32>
    %cst_32 = arith.constant dense<0.000000e+00> : vector<1x128xf32>
    %42 = tpu.matmul %39, %41, %cst_32 {dimension_numbers = #tpu.dot_dimension_numbers<[1], [0], [0], [1], [0, 0, 1, 1], [], []>} : vector<1x64xf32>, vector<64x128xf32>, vector<1x128xf32> -> vector<1x128xf32>
    %43 = arith.addf %38, %42 : vector<1x128xf32>
    %44 = vector.extract_strided_slice %37 {offsets = [1, 0], sizes = [1, 64], strides = [1, 1]} : vector<5x64xf32> to vector<1x64xf32>
    %c1_33 = arith.constant 1 : index
    %c0_34 = arith.constant 0 : index
    %c0_35 = arith.constant 0 : index
    %45 = vector.load %arg7[%c1_33, %c0_34, %c0_35] : memref<5x64x128xf32, #tpu.memory_space<vmem>>, vector<1x64x128xf32>
    %46 = vector.shape_cast %45 : vector<1x64x128xf32> to vector<64x128xf32>
    %cst_36 = arith.constant dense<0.000000e+00> : vector<1x128xf32>
    %47 = tpu.matmul %44, %46, %cst_36 {dimension_numbers = #tpu.dot_dimension_numbers<[1], [0], [0], [1], [0, 0, 1, 1], [], []>} : vector<1x64xf32>, vector<64x128xf32>, vector<1x128xf32> -> vector<1x128xf32>
    %48 = arith.addf %43, %47 : vector<1x128xf32>
    %49 = vector.extract_strided_slice %37 {offsets = [2, 0], sizes = [1, 64], strides = [1, 1]} : vector<5x64xf32> to vector<1x64xf32>
    %c2_37 = arith.constant 2 : index
    %c0_38 = arith.constant 0 : index
    %c0_39 = arith.constant 0 : index
    %50 = vector.load %arg7[%c2_37, %c0_38, %c0_39] : memref<5x64x128xf32, #tpu.memory_space<vmem>>, vector<1x64x128xf32>
    %51 = vector.shape_cast %50 : vector<1x64x128xf32> to vector<64x128xf32>
    %cst_40 = arith.constant dense<0.000000e+00> : vector<1x128xf32>
    %52 = tpu.matmul %49, %51, %cst_40 {dimension_numbers = #tpu.dot_dimension_numbers<[1], [0], [0], [1], [0, 0, 1, 1], [], []>} : vector<1x64xf32>, vector<64x128xf32>, vector<1x128xf32> -> vector<1x128xf32>
    %53 = arith.addf %48, %52 : vector<1x128xf32>
    %54 = vector.extract_strided_slice %37 {offsets = [3, 0], sizes = [1, 64], strides = [1, 1]} : vector<5x64xf32> to vector<1x64xf32>
    %c3_41 = arith.constant 3 : index
    %c0_42 = arith.constant 0 : index
    %c0_43 = arith.constant 0 : index
    %55 = vector.load %arg7[%c3_41, %c0_42, %c0_43] : memref<5x64x128xf32, #tpu.memory_space<vmem>>, vector<1x64x128xf32>
    %56 = vector.shape_cast %55 : vector<1x64x128xf32> to vector<64x128xf32>
    %cst_44 = arith.constant dense<0.000000e+00> : vector<1x128xf32>
    %57 = tpu.matmul %54, %56, %cst_44 {dimension_numbers = #tpu.dot_dimension_numbers<[1], [0], [0], [1], [0, 0, 1, 1], [], []>} : vector<1x64xf32>, vector<64x128xf32>, vector<1x128xf32> -> vector<1x128xf32>
    %58 = arith.addf %53, %57 : vector<1x128xf32>
    %59 = vector.extract_strided_slice %37 {offsets = [4, 0], sizes = [1, 64], strides = [1, 1]} : vector<5x64xf32> to vector<1x64xf32>
    %c4 = arith.constant 4 : index
    %c0_45 = arith.constant 0 : index
    %c0_46 = arith.constant 0 : index
    %60 = vector.load %arg7[%c4, %c0_45, %c0_46] : memref<5x64x128xf32, #tpu.memory_space<vmem>>, vector<1x64x128xf32>
    %61 = vector.shape_cast %60 : vector<1x64x128xf32> to vector<64x128xf32>
    %cst_47 = arith.constant dense<0.000000e+00> : vector<1x128xf32>
    %62 = tpu.matmul %59, %61, %cst_47 {dimension_numbers = #tpu.dot_dimension_numbers<[1], [0], [0], [1], [0, 0, 1, 1], [], []>} : vector<1x64xf32>, vector<64x128xf32>, vector<1x128xf32> -> vector<1x128xf32>
    %63 = arith.addf %58, %62 : vector<1x128xf32>
    %cst_48 = arith.constant 0.000000e+00 : f32
    %64 = vector.broadcast %cst_48 : f32 to vector<1x128xf32>
    %65 = arith.maximumf %63, %64 : vector<1x128xf32>
    %c0_49 = arith.constant 0 : index
    %c0_50 = arith.constant 0 : index
    %66 = vector.load %arg9[%c0_49, %c0_50] : memref<128x128xf32, #tpu.memory_space<vmem>>, vector<128x128xf32>
    %cst_51 = arith.constant dense<0.000000e+00> : vector<1x128xf32>
    %67 = tpu.matmul %65, %66, %cst_51 {dimension_numbers = #tpu.dot_dimension_numbers<[1], [0], [0], [1], [0, 0, 1, 1], [], []>} : vector<1x128xf32>, vector<128x128xf32>, vector<1x128xf32> -> vector<1x128xf32>
    %c0_52 = arith.constant 0 : index
    %c0_53 = arith.constant 0 : index
    %68 = vector.load %arg10[%c0_52, %c0_53] : memref<1x128xf32, #tpu.memory_space<vmem>>, vector<1x128xf32>
    %69 = arith.addf %67, %68 : vector<1x128xf32>
    %cst_54 = arith.constant 0.000000e+00 : f32
    %70 = vector.broadcast %cst_54 : f32 to vector<1x128xf32>
    %71 = arith.subf %70, %69 : vector<1x128xf32>
    %72 = math.exp %71 : vector<1x128xf32>
    %cst_55 = arith.constant 1.000000e+00 : f32
    %73 = vector.broadcast %cst_55 : f32 to vector<1x128xf32>
    %74 = arith.addf %73, %72 : vector<1x128xf32>
    %cst_56 = arith.constant 1.000000e+00 : f32
    %75 = vector.broadcast %cst_56 : f32 to vector<1x128xf32>
    %76 = arith.divf %75, %74 : vector<1x128xf32>
    %c0_57 = arith.constant 0 : index
    %c0_58 = arith.constant 0 : index
    %c0_59 = arith.constant 0 : index
    %77 = vector.load %arg11[%c0_57, %c0_58, %c0_59] : memref<1x1x128xf32, #tpu.memory_space<vmem>>, vector<1x1x128xf32>
    %78 = vector.shape_cast %77 : vector<1x1x128xf32> to vector<1x128xf32>
    %79 = vector.shape_cast %76 : vector<1x128xf32> to vector<1x1x128xf32>
    tpu.vector_store %arg11[%c0_57, %c0_58, %c0_59], %79 {strides = array<i32>} : memref<1x1x128xf32, #tpu.memory_space<vmem>>, vector<1x1x128xf32>,
    return
  }
  func.func @transform_0(%arg0: i32) -> (i32, i32, i32) {
    %c0_i32 = arith.constant 0 : i32
    %c0_i32_0 = arith.constant 0 : i32
    %c0_i32_1 = arith.constant 0 : i32
    return %arg0, %c0_i32, %c0_i32_0 : i32, i32, i32
  }
  func.func @transform_1(%arg0: i32) -> (i32, i32) {
    %c0_i32 = arith.constant 0 : i32
    %c0_i32_0 = arith.constant 0 : i32
    %c0_i32_1 = arith.constant 0 : i32
    return %c0_i32, %c0_i32_0 : i32, i32
  }
  func.func @transform_2(%arg0: i32) -> (i32, i32) {
    %c0_i32 = arith.constant 0 : i32
    %c0_i32_0 = arith.constant 0 : i32
    %c0_i32_1 = arith.constant 0 : i32
    return %c0_i32, %c0_i32_0 : i32, i32
  }
  func.func @transform_3(%arg0: i32) -> (i32, i32) {
    %c0_i32 = arith.constant 0 : i32
    %c0_i32_0 = arith.constant 0 : i32
    %c0_i32_1 = arith.constant 0 : i32
    return %c0_i32, %c0_i32_0 : i32, i32
  }
  func.func @transform_4(%arg0: i32) -> (i32, i32) {
    %c0_i32 = arith.constant 0 : i32
    %c0_i32_0 = arith.constant 0 : i32
    %c0_i32_1 = arith.constant 0 : i32
    return %c0_i32, %c0_i32_0 : i32, i32
  }
  func.func @transform_5(%arg0: i32) -> (i32, i32, i32) {
    %c0_i32 = arith.constant 0 : i32
    %c0_i32_0 = arith.constant 0 : i32
    %c0_i32_1 = arith.constant 0 : i32
    %c0_i32_2 = arith.constant 0 : i32
    return %c0_i32, %c0_i32_0, %c0_i32_1 : i32, i32, i32
  }
  func.func @transform_6(%arg0: i32) -> (i32, i32, i32) {
    %c0_i32 = arith.constant 0 : i32
    %c0_i32_0 = arith.constant 0 : i32
    %c0_i32_1 = arith.constant 0 : i32
    %c0_i32_2 = arith.constant 0 : i32
    return %c0_i32, %c0_i32_0, %c0_i32_1 : i32, i32, i32
  }
  func.func @transform_7(%arg0: i32) -> (i32, i32) {
    %c0_i32 = arith.constant 0 : i32
    %c0_i32_0 = arith.constant 0 : i32
    %c0_i32_1 = arith.constant 0 : i32
    return %c0_i32, %c0_i32_0 : i32, i32
  }
  func.func @transform_8(%arg0: i32) -> (i32, i32) {
    %c0_i32 = arith.constant 0 : i32
    %c0_i32_0 = arith.constant 0 : i32
    %c0_i32_1 = arith.constant 0 : i32
    return %c0_i32, %c0_i32_0 : i32, i32
  }
  func.func @transform_9(%arg0: i32) -> (i32, i32) {
    %c0_i32 = arith.constant 0 : i32
    %c0_i32_0 = arith.constant 0 : i32
    %c0_i32_1 = arith.constant 0 : i32
    return %c0_i32, %c0_i32_0 : i32, i32
  }
  func.func @transform_10(%arg0: i32) -> (i32, i32, i32) {
    %c0_i32 = arith.constant 0 : i32
    %c0_i32_0 = arith.constant 0 : i32
    %c0_i32_1 = arith.constant 0 : i32
    return %arg0, %c0_i32, %c0_i32_0 : i32, i32, i32
  }
}

</mosaic_0001>

<llo_original>
// kernel: lane_exist_forward.1
$region0: #{lane_exist_forward.1}
  #allocation0 [shape = 'u32[]', space=smem, size = 0x4, offset = 0x4, fixed_abs, tag = 'smem constant byte address 0x4 - core index']
  #allocation1 [shape = 'u32[144,128]{1,0:T(1,128)}', space=vmem, size = 0x12000, scoped, tag = 'internal scratch']
  %s0 = inlined_call_operand.vmem [shape: bf16[2,4608,256], index: 0, kind: input, shape index: {}]
  %s1 = inlined_call_operand.vmem [shape: bf16[32,4608], index: 1, kind: input, shape index: {}]
  %s2 = inlined_call_operand.vmem [shape: f32[32,1], index: 2, kind: input, shape index: {}]
  %s3 = inlined_call_operand.vmem [shape: f32[5,32], index: 3, kind: input, shape index: {}]
  %s4 = inlined_call_operand.vmem [shape: f32[5,1], index: 4, kind: input, shape index: {}]
  %s5 = inlined_call_operand.vmem [shape: f32[4,256,64], index: 5, kind: input, shape index: {}]
  %s6 = inlined_call_operand.vmem [shape: f32[5,64,128], index: 6, kind: input, shape index: {}]
  %s7 = inlined_call_operand.vmem [shape: f32[1,128], index: 7, kind: input, shape index: {}]
  %s8 = inlined_call_operand.vmem [shape: f32[128,128], index: 8, kind: input, shape index: {}]
  %s9 = inlined_call_operand.vmem [shape: f32[1,128], index: 9, kind: input, shape index: {}]
  %s10 = inlined_call_operand.hbm [shape: f32[2,1,128], index: 10, kind: output, shape index: {}]
  %s11 = sld [smem:[#allocation0]]
  $region73: #{lane_exist_forward.1} parent=0
    _
  %s13 = ssub.s32 1, %s11
  %s14 = scalar_select 0, %s13, %s11
  $region1: #{lane_exist_forward.1} parent=0
    #allocation2 [shape = 'u8[1024]{0}', space=vmem, size = 0x400, scoped, tag = 'output window, operand 0']
    #allocation3 [shape = 's32[2]{0}', space=sflag, size = 0x8, scoped, tag = 'scoped memory for lane_exist_forward.1']
    %15 = vsyncpa [#allocation3], 0
    %s16 = scalar_lea.sflag [#allocation3], 1
    %17 = vsyncpa %s16, 0
    loop: start=0, step=1, limit=4
    $region2: #{lane_exist_forward.1} parent=1 // loop_pre_header
      _
    $region3: #{lane_exist_forward.1} parent=1 // loop_header
      %s19 = sphi 0, %s23
      %p20 = scmp.ge.s32.totalorder %s19, 4
      %s29 = sphi 0, %s31
      %s32 = sphi 0, %s29
      %s33 = sphi 0, %s32
      %s49 = sphi 0, %s33
      %s53 = sphi 0, %s53
      %s55 = sphi 0, %s53
      %s56 = sphi 0, %s55
      %s70 = sphi 0, %s56
      %s74 = sphi 0, %s74
      %s76 = sphi 0, %s74
      %s77 = sphi 0, %s76
      %s91 = sphi 0, %s77
      %s95 = sphi 0, %s95
      %s97 = sphi 0, %s95
      %s98 = sphi 0, %s97
      %s112 = sphi 0, %s98
      %s116 = sphi 0, %s116
      %s118 = sphi 0, %s116
      %s119 = sphi 0, %s118
      %s133 = sphi 0, %s119
      %s137 = sphi 0, %s137
      %s139 = sphi 0, %s137
      %s140 = sphi 0, %s139
      %s154 = sphi 0, %s140
      %s158 = sphi 0, %s158
      %s160 = sphi 0, %s158
      %s161 = sphi 0, %s160
      %s175 = sphi 0, %s161
      %s179 = sphi 0, %s179
      %s181 = sphi 0, %s179
      %s182 = sphi 0, %s181
      %s196 = sphi 0, %s182
      %s200 = sphi 0, %s200
      %s202 = sphi 0, %s200
      %s203 = sphi 0, %s202
      %s217 = sphi 0, %s203
      %s221 = sphi 0, %s221
      %s223 = sphi 0, %s221
      %s224 = sphi 0, %s223
      %s238 = sphi 0, %s224
      %s244 = sphi 0, %s246
      %s247 = sphi 0, %s244
      %s248 = sphi 0, %s247
      %s264 = sphi 0, %s248
    $region4: #{lane_exist_forward.1} parent=1 // loop_header_branch
      %22 = sbr.rel (%p20) target = $region8
    $region5: #{lane_exist_forward.1} parent=1 // loop_body
      %s24 = ssub.s32 %s19, 1
      %s25 = ssub.s32 %s19, 2
      %s26 = sadd.s32 %s19, 1
      %s27 = ssub.s32 %s19, %s26
      %p28 = scmp.eq.s32.totalorder %s27, 0
      %s30 = sadd.s32 %s29, 1
      %s31 = scalar_select %p28, %s29, %s30
      %p34 = pneg %p28
      %p35 = scmp.eq.s32.totalorder %s19, 1
      %p36 = por %p34, %p35
      %p37 = scmp.ne.s32.totalorder %s29, %s32
      %p38 = scmp.eq.s32.totalorder %s19, 0
      %p39 = por %p37, %p38
      %p40 = scmp.ne.s32.totalorder %s29, %s32
      %p41 = scmp.eq.s32.totalorder %s24, 1
      %p42 = por %p40, %p41
      %p43 = scmp.ne.s32.totalorder %s32, %s33
      %p44 = scmp.eq.s32.totalorder %s24, 0
      %p45 = por %p43, %p44
      %p46 = scmp.ne.s32.totalorder %s32, %s33
      %p47 = scmp.eq.s32.totalorder %s25, 1
      %p48 = por %p46, %p47
      %p50 = scmp.ne.s32.totalorder %s33, %s49
      %p51 = scmp.eq.s32.totalorder %s25, 0
      %p52 = por %p50, %p51
      %s54 = sadd.s32 %s53, 1
      %p57 = scmp.eq.s32.totalorder %s19, 1
      %p58 = scmp.ne.s32.totalorder %s53, %s55
      %p59 = scmp.eq.s32.totalorder %s19, 0
      %p60 = por %p58, %p59
      %p61 = scmp.ne.s32.totalorder %s53, %s55
      %p62 = scmp.eq.s32.totalorder %s24, 1
      %p63 = por %p61, %p62
      %p64 = scmp.ne.s32.totalorder %s55, %s56
      %p65 = scmp.eq.s32.totalorder %s24, 0
      %p66 = por %p64, %p65
      %p67 = scmp.ne.s32.totalorder %s55, %s56
      %p68 = scmp.eq.s32.totalorder %s25, 1
      %p69 = por %p67, %p68
      %p71 = scmp.ne.s32.totalorder %s56, %s70
      %p72 = scmp.eq.s32.totalorder %s25, 0
      %p73 = por %p71, %p72
      %s75 = sadd.s32 %s74, 1
      %p78 = scmp.eq.s32.totalorder %s19, 1
      %p79 = scmp.ne.s32.totalorder %s74, %s76
      %p80 = scmp.eq.s32.totalorder %s19, 0
      %p81 = por %p79, %p80
      %p82 = scmp.ne.s32.totalorder %s74, %s76
      %p83 = scmp.eq.s32.totalorder %s24, 1
      %p84 = por %p82, %p83
      %p85 = scmp.ne.s32.totalorder %s76, %s77
      %p86 = scmp.eq.s32.totalorder %s24, 0
      %p87 = por %p85, %p86
      %p88 = scmp.ne.s32.totalorder %s76, %s77
      %p89 = scmp.eq.s32.totalorder %s25, 1
      %p90 = por %p88, %p89
      %p92 = scmp.ne.s32.totalorder %s77, %s91
      %p93 = scmp.eq.s32.totalorder %s25, 0
      %p94 = por %p92, %p93
      %s96 = sadd.s32 %s95, 1
      %p99 = scmp.eq.s32.totalorder %s19, 1
      %p100 = scmp.ne.s32.totalorder %s95, %s97
      %p101 = scmp.eq.s32.totalorder %s19, 0
      %p102 = por %p100, %p101
      %p103 = scmp.ne.s32.totalorder %s95, %s97
      %p104 = scmp.eq.s32.totalorder %s24, 1
      %p105 = por %p103, %p104
      %p106 = scmp.ne.s32.totalorder %s97, %s98
      %p107 = scmp.eq.s32.totalorder %s24, 0
      %p108 = por %p106, %p107
      %p109 = scmp.ne.s32.totalorder %s97, %s98
      %p110 = scmp.eq.s32.totalorder %s25, 1
      %p111 = por %p109, %p110
      %p113 = scmp.ne.s32.totalorder %s98, %s112
      %p114 = scmp.eq.s32.totalorder %s25, 0
      %p115 = por %p113, %p114
      %s117 = sadd.s32 %s116, 1
      %p120 = scmp.eq.s32.totalorder %s19, 1
      %p121 = scmp.ne.s32.totalorder %s116, %s118
      %p122 = scmp.eq.s32.totalorder %s19, 0
      %p123 = por %p121, %p122
      %p124 = scmp.ne.s32.totalorder %s116, %s118
      %p125 = scmp.eq.s32.totalorder %s24, 1
      %p126 = por %p124, %p125
      %p127 = scmp.ne.s32.totalorder %s118, %s119
      %p128 = scmp.eq.s32.totalorder %s24, 0
      %p129 = por %p127, %p128
      %p130 = scmp.ne.s32.totalorder %s118, %s119
      %p131 = scmp.eq.s32.totalorder %s25, 1
      %p132 = por %p130, %p131
      %p134 = scmp.ne.s32.totalorder %s119, %s133
      %p135 = scmp.eq.s32.totalorder %s25, 0
      %p136 = por %p134, %p135
      %s138 = sadd.s32 %s137, 1
      %p141 = scmp.eq.s32.totalorder %s19, 1
      %p142 = scmp.ne.s32.totalorder %s137, %s139
      %p143 = scmp.eq.s32.totalorder %s19, 0
      %p144 = por %p142, %p143
      %p145 = scmp.ne.s32.totalorder %s137, %s139
      %p146 = scmp.eq.s32.totalorder %s24, 1
      %p147 = por %p145, %p146
      %p148 = scmp.ne.s32.totalorder %s139, %s140
      %p149 = scmp.eq.s32.totalorder %s24, 0
      %p150 = por %p148, %p149
      %p151 = scmp.ne.s32.totalorder %s139, %s140
      %p152 = scmp.eq.s32.totalorder %s25, 1
      %p153 = por %p151, %p152
      %p155 = scmp.ne.s32.totalorder %s140, %s154
      %p156 = scmp.eq.s32.totalorder %s25, 0
      %p157 = por %p155, %p156
      %s159 = sadd.s32 %s158, 1
      %p162 = scmp.eq.s32.totalorder %s19, 1
      %p163 = scmp.ne.s32.totalorder %s158, %s160
      %p164 = scmp.eq.s32.totalorder %s19, 0
      %p165 = por %p163, %p164
      %p166 = scmp.ne.s32.totalorder %s158, %s160
      %p167 = scmp.eq.s32.totalorder %s24, 1
      %p168 = por %p166, %p167
      %p169 = scmp.ne.s32.totalorder %s160, %s161
      %p170 = scmp.eq.s32.totalorder %s24, 0
      %p171 = por %p169, %p170
      %p172 = scmp.ne.s32.totalorder %s160, %s161
      %p173 = scmp.eq.s32.totalorder %s25, 1
      %p174 = por %p172, %p173
      %p176 = scmp.ne.s32.totalorder %s161, %s175
      %p177 = scmp.eq.s32.totalorder %s25, 0
      %p178 = por %p176, %p177
      %s180 = sadd.s32 %s179, 1
      %p183 = scmp.eq.s32.totalorder %s19, 1
      %p184 = scmp.ne.s32.totalorder %s179, %s181
      %p185 = scmp.eq.s32.totalorder %s19, 0
      %p186 = por %p184, %p185
      %p187 = scmp.ne.s32.totalorder %s179, %s181
      %p188 = scmp.eq.s32.totalorder %s24, 1
      %p189 = por %p187, %p188
      %p190 = scmp.ne.s32.totalorder %s181, %s182
      %p191 = scmp.eq.s32.totalorder %s24, 0
      %p192 = por %p190, %p191
      %p193 = scmp.ne.s32.totalorder %s181, %s182
      %p194 = scmp.eq.s32.totalorder %s25, 1
      %p195 = por %p193, %p194
      %p197 = scmp.ne.s32.totalorder %s182, %s196
      %p198 = scmp.eq.s32.totalorder %s25, 0
      %p199 = por %p197, %p198
      %s201 = sadd.s32 %s200, 1
      %p204 = scmp.eq.s32.totalorder %s19, 1
      %p205 = scmp.ne.s32.totalorder %s200, %s202
      %p206 = scmp.eq.s32.totalorder %s19, 0
      %p207 = por %p205, %p206
      %p208 = scmp.ne.s32.totalorder %s200, %s202
      %p209 = scmp.eq.s32.totalorder %s24, 1
      %p210 = por %p208, %p209
      %p211 = scmp.ne.s32.totalorder %s202, %s203
      %p212 = scmp.eq.s32.totalorder %s24, 0
      %p213 = por %p211, %p212
      %p214 = scmp.ne.s32.totalorder %s202, %s203
      %p215 = scmp.eq.s32.totalorder %s25, 1
      %p216 = por %p214, %p215
      %p218 = scmp.ne.s32.totalorder %s203, %s217
      %p219 = scmp.eq.s32.totalorder %s25, 0
      %p220 = por %p218, %p219
      %s222 = sadd.s32 %s221, 1
      %p225 = scmp.eq.s32.totalorder %s19, 1
      %p226 = scmp.ne.s32.totalorder %s221, %s223
      %p227 = scmp.eq.s32.totalorder %s19, 0
      %p228 = por %p226, %p227
      %p229 = scmp.ne.s32.totalorder %s221, %s223
      %p230 = scmp.eq.s32.totalorder %s24, 1
      %p231 = por %p229, %p230
      %p232 = scmp.ne.s32.totalorder %s223, %s224
      %p233 = scmp.eq.s32.totalorder %s24, 0
      %p234 = por %p232, %p233
      %p235 = scmp.ne.s32.totalorder %s223, %s224
      %p236 = scmp.eq.s32.totalorder %s25, 1
      %p237 = por %p235, %p236
      %p239 = scmp.ne.s32.totalorder %s224, %s238
      %p240 = scmp.eq.s32.totalorder %s25, 0
      %p241 = por %p239, %p240
      %s242 = ssub.s32 %s19, %s26
      %p243 = scmp.eq.s32.totalorder %s242, 0
      %s245 = sadd.s32 %s244, 1
      %s246 = scalar_select %p243, %s244, %s245
      %p249 = pneg %p243
      %p250 = scmp.eq.s32.totalorder %s19, 1
      %p251 = por %p249, %p250
      %p252 = scmp.ne.s32.totalorder %s244, %s247
      %p253 = scmp.eq.s32.totalorder %s19, 0
      %p254 = por %p252, %p253
      %p255 = scmp.ne.s32.totalorder %s244, %s247
      %p256 = scmp.eq.s32.totalorder %s24, 1
      %p257 = por %p255, %p256
      %p258 = scmp.ne.s32.totalorder %s247, %s248
      %p259 = scmp.eq.s32.totalorder %s24, 0
      %p260 = por %p258, %p259
      %p261 = scmp.ne.s32.totalorder %s247, %s248
      %p262 = scmp.eq.s32.totalorder %s25, 1
      %p263 = por %p261, %p262
      %p265 = scmp.ne.s32.totalorder %s248, %s264
      %p266 = scmp.eq.s32.totalorder %s25, 0
      %p267 = por %p265, %p266
      %p268 = scmp.le.s32.totalorder 1, %s19
      %p269 = scmp.lt.s32.totalorder %s19, 3
      %p270 = pnand %p268, %p269
      %p271 = pneg %p270
      // Predicated region
      $region9: #{lane_exist_forward.1} parent=5 // pred_check
        _
      $region10: #{lane_exist_forward.1} parent=5 // pred_check_branch
        %273 = sbr.rel (%p270) target = $region12
      $region11: #{lane_exist_forward.1} parent=5 // pred_region
        %s274 = ssub.s32 %s19, 1
        // Predicated region
        $region13: #{lane_exist_forward.1} parent=11 // pred_check
          %p275 = pneg %p66
        $region14: #{lane_exist_forward.1} parent=11 // pred_check_branch
          %277 = sbr.rel (%p275) target = $region16
        $region15: #{lane_exist_forward.1} parent=11 // pred_region
          _
        $region16: #{lane_exist_forward.1} parent=11 // pred_fallthru
          _
        // Predicated region
        $region17: #{lane_exist_forward.1} parent=11 // pred_check
          %p278 = pneg %p87
        $region18: #{lane_exist_forward.1} parent=11 // pred_check_branch
          %280 = sbr.rel (%p278) target = $region20
        $region19: #{lane_exist_forward.1} parent=11 // pred_region
          _
        $region20: #{lane_exist_forward.1} parent=11 // pred_fallthru
          _
        // Predicated region
        $region21: #{lane_exist_forward.1} parent=11 // pred_check
          %p281 = pneg %p108
        $region22: #{lane_exist_forward.1} parent=11 // pred_check_branch
          %283 = sbr.rel (%p281) target = $region24
        $region23: #{lane_exist_forward.1} parent=11 // pred_region
          _
        $region24: #{lane_exist_forward.1} parent=11 // pred_fallthru
          _
        // Predicated region
        $region25: #{lane_exist_forward.1} parent=11 // pred_check
          %p284 = pneg %p129
        $region26: #{lane_exist_forward.1} parent=11 // pred_check_branch
          %286 = sbr.rel (%p284) target = $region28
        $region27: #{lane_exist_forward.1} parent=11 // pred_region
          _
        $region28: #{lane_exist_forward.1} parent=11 // pred_fallthru
          _
        // Predicated region
        $region29: #{lane_exist_forward.1} parent=11 // pred_check
          %p287 = pneg %p150
        $region30: #{lane_exist_forward.1} parent=11 // pred_check_branch
          %289 = sbr.rel (%p287) target = $region32
        $region31: #{lane_exist_forward.1} parent=11 // pred_region
          _
        $region32: #{lane_exist_forward.1} parent=11 // pred_fallthru
          _
        // Predicated region
        $region33: #{lane_exist_forward.1} parent=11 // pred_check
          %p290 = pneg %p171
        $region34: #{lane_exist_forward.1} parent=11 // pred_check_branch
          %292 = sbr.rel (%p290) target = $region36
        $region35: #{lane_exist_forward.1} parent=11 // pred_region
          _
        $region36: #{lane_exist_forward.1} parent=11 // pred_fallthru
          _
        // Predicated region
        $region37: #{lane_exist_forward.1} parent=11 // pred_check
          %p293 = pneg %p192
        $region38: #{lane_exist_forward.1} parent=11 // pred_check_branch
          %295 = sbr.rel (%p293) target = $region40
        $region39: #{lane_exist_forward.1} parent=11 // pred_region
          _
        $region40: #{lane_exist_forward.1} parent=11 // pred_fallthru
          _
        // Predicated region
        $region41: #{lane_exist_forward.1} parent=11 // pred_check
          %p296 = pneg %p213
        $region42: #{lane_exist_forward.1} parent=11 // pred_check_branch
          %298 = sbr.rel (%p296) target = $region44
        $region43: #{lane_exist_forward.1} parent=11 // pred_region
          _
        $region44: #{lane_exist_forward.1} parent=11 // pred_fallthru
          _
        // Predicated region
        $region45: #{lane_exist_forward.1} parent=11 // pred_check
          %p299 = pneg %p234
        $region46: #{lane_exist_forward.1} parent=11 // pred_check_branch
          %301 = sbr.rel (%p299) target = $region48
        $region47: #{lane_exist_forward.1} parent=11 // pred_region
          _
        $region48: #{lane_exist_forward.1} parent=11 // pred_fallthru
          _
      $region12: #{lane_exist_forward.1} parent=5 // pred_fallthru
        _
      %p302 = scmp.lt.s32.totalorder %s19, 2
      // Predicated region
      $region49: #{lane_exist_forward.1} parent=5 // pred_check
        %p303 = pneg %p302
      $region50: #{lane_exist_forward.1} parent=5 // pred_check_branch
        %305 = sbr.rel (%p303) target = $region52
      $region51: #{lane_exist_forward.1} parent=5 // pred_region
        // Predicated region
        $region53: #{lane_exist_forward.1} parent=51 // pred_check
          %p306 = pneg %p39
        $region54: #{lane_exist_forward.1} parent=51 // pred_check_branch
          %308 = sbr.rel (%p306) target = $region56
        $region55: #{lane_exist_forward.1} parent=51 // pred_region
          %p309 = scmp.lt.s32.totalorder %s19, 1
          %s310 = scalar_select %p309, %s19, 1
          %s311 = smul.addr %s310, 1152
          %s312 = smul.addr %s311, 4
          %s313 = scalar_lea.vmem %s0, %s312
        $region56: #{lane_exist_forward.1} parent=51 // pred_fallthru
          _
      $region52: #{lane_exist_forward.1} parent=5 // pred_fallthru
        _
      %p314 = scmp.le.s32.totalorder 1, %s19
      %p315 = scmp.lt.s32.totalorder %s19, 3
      %p316 = pnand %p314, %p315
      %p317 = pneg %p316
      // Predicated region
      $region57: #{lane_exist_forward.1} parent=5 // pred_check
        _
      $region58: #{lane_exist_forward.1} parent=5 // pred_check_branch
        %319 = sbr.rel (%p316) target = $region60
      $region59: #{lane_exist_forward.1} parent=5 // pred_region
        %s320 = ssub.s32 %s19, 1
        %p321 = scmp.lt.s32.totalorder %s24, 1
        %s322 = scalar_select %p321, %s24, 1
        %s323 = smul.addr %s322, 1152
        %s324 = smul.addr %s323, 4
        %s325 = scalar_lea.vmem %s0, %s324
        %p326 = pneg %p45
        %p327 = pneg %p42
        %p328 = pneg %p66
        %p329 = pneg %p63
        %p330 = pneg %p87
        %p331 = pneg %p84
        %p332 = pneg %p108
        %p333 = pneg %p105
        %p334 = pneg %p129
        %p335 = pneg %p126
        %p336 = pneg %p150
        %p337 = pneg %p147
        %p338 = pneg %p171
        %p339 = pneg %p168
        %p340 = pneg %p192
        %p341 = pneg %p189
        %p342 = pneg %p213
        %p343 = pneg %p210
        %p344 = pneg %p234
        %p345 = pneg %p231
        %p346 = pneg %p260
        %p347 = pneg %p257
        %s348 = sand.u32 %s247, 1
        %s349 = scalar_lea.sflag [#allocation3], %s348
        %s350 = sand.u32 %s247, 1
        %s351 = scalar_lea.vmem [#allocation2], %s350
        %p352 = scmp.lt.s32.totalorder %s24, 1
        %s353 = scalar_select %p352, %s24, 1
        %s354 = smul.addr %s353, 1152
        %s355 = smul.addr %s354, 4
        %s356 = scalar_lea.vmem %s0, %s355
        %v357 = vld [vmem:[%s1] sm:$0xff]
        %v358 = vld [vmem:[%s1 + $0x8] sm:$0xff]
        %v359 = vld [vmem:[%s1 + $0x10] sm:$0xff]
        %v360 = vld [vmem:[%s1 + $0x18] sm:$0xff]
        %v361 = vld [vmem:[%s1 + $0x20] sm:$0xff]
        %v362 = vld [vmem:[%s1 + $0x28] sm:$0xff]
        %v363 = vld [vmem:[%s1 + $0x30] sm:$0xff]
        %v364 = vld [vmem:[%s1 + $0x38] sm:$0xff]
        %v365 = vld [vmem:[%s1 + $0x40] sm:$0xff]
        %v366 = vld [vmem:[%s1 + $0x48] sm:$0xff]
        %v367 = vld [vmem:[%s1 + $0x50] sm:$0xff]
        %v368 = vld [vmem:[%s1 + $0x58] sm:$0xff]
        %v369 = vld [vmem:[%s1 + $0x60] sm:$0xff]
        %v370 = vld [vmem:[%s1 + $0x68] sm:$0xff]
        %v371 = vld [vmem:[%s1 + $0x70] sm:$0xff]
        %v372 = vld [vmem:[%s1 + $0x78] sm:$0xff]
        %v373 = vld [vmem:[%s1 + $0x80] sm:$0xff]
        %v374 = vld [vmem:[%s1 + $0x88] sm:$0xff]
        %v375 = vld [vmem:[%s1 + $0x90] sm:$0xff]
        %v376 = vld [vmem:[%s1 + $0x98] sm:$0xff]
        %v377 = vld [vmem:[%s1 + $0xa0] sm:$0xff]
        %v378 = vld [vmem:[%s1 + $0xa8] sm:$0xff]
        %v379 = vld [vmem:[%s1 + $0xb0] sm:$0xff]
        %v380 = vld [vmem:[%s1 + $0xb8] sm:$0xff]
        %v381 = vld [vmem:[%s1 + $0xc0] sm:$0xff]
        %v382 = vld [vmem:[%s1 + $0xc8] sm:$0xff]
        %v383 = vld [vmem:[%s1 + $0xd0] sm:$0xff]
        %v384 = vld [vmem:[%s1 + $0xd8] sm:$0xff]
        %v385 = vld [vmem:[%s1 + $0xe0] sm:$0xff]
        %v386 = vld [vmem:[%s1 + $0xe8] sm:$0xff]
        %v387 = vld [vmem:[%s1 + $0xf0] sm:$0xff]
        %v388 = vld [vmem:[%s1 + $0xf8] sm:$0xff]
        %v389 = vld [vmem:[%s1 + $0x100] sm:$0xff]
        %v390 = vld [vmem:[%s1 + $0x108] sm:$0xff]
        %v391 = vld [vmem:[%s1 + $0x110] sm:$0xff]
        %v392 = vld [vmem:[%s1 + $0x118] sm:$0xff]
        %v393 = vld [vmem:[%s1 + $0x120] sm:$0xff]
        %v394 = vld [vmem:[%s1 + $0x128] sm:$0xff]
        %v395 = vld [vmem:[%s1 + $0x130] sm:$0xff]
        %v396 = vld [vmem:[%s1 + $0x138] sm:$0xff]
        %v397 = vld [vmem:[%s1 + $0x140] sm:$0xff]
        %v398 = vld [vmem:[%s1 + $0x148] sm:$0xff]
        %v399 = vld [vmem:[%s1 + $0x150] sm:$0xff]
        %v400 = vld [vmem:[%s1 + $0x158] sm:$0xff]
        %v401 = vld [vmem:[%s1 + $0x160] sm:$0xff]
        %v402 = vld [vmem:[%s1 + $0x168] sm:$0xff]
        %v403 = vld [vmem:[%s1 + $0x170] sm:$0xff]
        %v404 = vld [vmem:[%s1 + $0x178] sm:$0xff]
        %v405 = vld [vmem:[%s1 + $0x180] sm:$0xff]
        %v406 = vld [vmem:[%s1 + $0x188] sm:$0xff]
        %v407 = vld [vmem:[%s1 + $0x190] sm:$0xff]
        %v408 = vld [vmem:[%s1 + $0x198] sm:$0xff]
        %v409 = vld [vmem:[%s1 + $0x1a0] sm:$0xff]
        %v410 = vld [vmem:[%s1 + $0x1a8] sm:$0xff]
        %v411 = vld [vmem:[%s1 + $0x1b0] sm:$0xff]
        %v412 = vld [vmem:[%s1 + $0x1b8] sm:$0xff]
        %v413 = vld [vmem:[%s1 + $0x1c0] sm:$0xff]
        %v414 = vld [vmem:[%s1 + $0x1c8] sm:$0xff]
        %v415 = vld [vmem:[%s1 + $0x1d0] sm:$0xff]
        %v416 = vld [vmem:[%s1 + $0x1d8] sm:$0xff]
        %v417 = vld [vmem:[%s1 + $0x1e0] sm:$0xff]
        %v418 = vld [vmem:[%s1 + $0x1e8] sm:$0xff]
        %v419 = vld [vmem:[%s1 + $0x1f0] sm:$0xff]
        %v420 = vld [vmem:[%s1 + $0x1f8] sm:$0xff]
        %v421 = vld [vmem:[%s1 + $0x200] sm:$0xff]
        %v422 = vld [vmem:[%s1 + $0x208] sm:$0xff]
        %v423 = vld [vmem:[%s1 + $0x210] sm:$0xff]
        %v424 = vld [vmem:[%s1 + $0x218] sm:$0xff]
        %v425 = vld [vmem:[%s1 + $0x220] sm:$0xff]
        %v426 = vld [vmem:[%s1 + $0x228] sm:$0xff]
        %v427 = vld [vmem:[%s1 + $0x230] sm:$0xff]
        %v428 = vld [vmem:[%s1 + $0x238] sm:$0xff]
        %v429 = vld [vmem:[%s356] sm:$0xff]
        %v430 = vld [vmem:[%s356 + $0x8] sm:$0xff]
        %v431 = vld [vmem:[%s356 + $0x10] sm:$0xff]
        %v432 = vld [vmem:[%s356 + $0x18] sm:$0xff]
        %v433 = vld [vmem:[%s356 + $0x20] sm:$0xff]
        %v434 = vld [vmem:[%s356 + $0x28] sm:$0xff]
        %v435 = vld [vmem:[%s356 + $0x30] sm:$0xff]
        %v436 = vld [vmem:[%s356 + $0x38] sm:$0xff]
        %v437 = vld [vmem:[%s356 + $0x40] sm:$0xff]
        %v438 = vld [vmem:[%s356 + $0x48] sm:$0xff]
        %v439 = vld [vmem:[%s356 + $0x50] sm:$0xff]
        %v440 = vld [vmem:[%s356 + $0x58] sm:$0xff]
        %v441 = vld [vmem:[%s356 + $0x60] sm:$0xff]
        %v442 = vld [vmem:[%s356 + $0x68] sm:$0xff]
        %v443 = vld [vmem:[%s356 + $0x70] sm:$0xff]
        %v444 = vld [vmem:[%s356 + $0x78] sm:$0xff]
        %v445 = vld [vmem:[%s356 + $0x80] sm:$0xff]
        %v446 = vld [vmem:[%s356 + $0x88] sm:$0xff]
        %v447 = vld [vmem:[%s356 + $0x90] sm:$0xff]
        %v448 = vld [vmem:[%s356 + $0x98] sm:$0xff]
        %v449 = vld [vmem:[%s356 + $0xa0] sm:$0xff]
        %v450 = vld [vmem:[%s356 + $0xa8] sm:$0xff]
        %v451 = vld [vmem:[%s356 + $0xb0] sm:$0xff]
        %v452 = vld [vmem:[%s356 + $0xb8] sm:$0xff]
        %v453 = vld [vmem:[%s356 + $0xc0] sm:$0xff]
        %v454 = vld [vmem:[%s356 + $0xc8] sm:$0xff]
        %v455 = vld [vmem:[%s356 + $0xd0] sm:$0xff]
        %v456 = vld [vmem:[%s356 + $0xd8] sm:$0xff]
        %v457 = vld [vmem:[%s356 + $0xe0] sm:$0xff]
        %v458 = vld [vmem:[%s356 + $0xe8] sm:$0xff]
        %v459 = vld [vmem:[%s356 + $0xf0] sm:$0xff]
        %v460 = vld [vmem:[%s356 + $0xf8] sm:$0xff]
        %v461 = vld [vmem:[%s356 + $0x100] sm:$0xff]
        %v462 = vld [vmem:[%s356 + $0x108] sm:$0xff]
        %v463 = vld [vmem:[%s356 + $0x110] sm:$0xff]
        %v464 = vld [vmem:[%s356 + $0x118] sm:$0xff]
        %v465 = vld [vmem:[%s356 + $0x120] sm:$0xff]
        %v466 = vld [vmem:[%s356 + $0x128] sm:$0xff]
        %v467 = vld [vmem:[%s356 + $0x130] sm:$0xff]
        %v468 = vld [vmem:[%s356 + $0x138] sm:$0xff]
        %v469 = vld [vmem:[%s356 + $0x140] sm:$0xff]
        %v470 = vld [vmem:[%s356 + $0x148] sm:$0xff]
        %v471 = vld [vmem:[%s356 + $0x150] sm:$0xff]
        %v472 = vld [vmem:[%s356 + $0x158] sm:$0xff]
        %v473 = vld [vmem:[%s356 + $0x160] sm:$0xff]
        %v474 = vld [vmem:[%s356 + $0x168] sm:$0xff]
        %v475 = vld [vmem:[%s356 + $0x170] sm:$0xff]
        %v476 = vld [vmem:[%s356 + $0x178] sm:$0xff]
        %v477 = vld [vmem:[%s356 + $0x180] sm:$0xff]
        %v478 = vld [vmem:[%s356 + $0x188] sm:$0xff]
        %v479 = vld [vmem:[%s356 + $0x190] sm:$0xff]
        %v480 = vld [vmem:[%s356 + $0x198] sm:$0xff]
        %v481 = vld [vmem:[%s356 + $0x1a0] sm:$0xff]
        %v482 = vld [vmem:[%s356 + $0x1a8] sm:$0xff]
        %v483 = vld [vmem:[%s356 + $0x1b0] sm:$0xff]
        %v484 = vld [vmem:[%s356 + $0x1b8] sm:$0xff]
        %v485 = vld [vmem:[%s356 + $0x1c0] sm:$0xff]
        %v486 = vld [vmem:[%s356 + $0x1c8] sm:$0xff]
        %v487 = vld [vmem:[%s356 + $0x1d0] sm:$0xff]
        %v488 = vld [vmem:[%s356 + $0x1d8] sm:$0xff]
        %v489 = vld [vmem:[%s356 + $0x1e0] sm:$0xff]
        %v490 = vld [vmem:[%s356 + $0x1e8] sm:$0xff]
        %v491 = vld [vmem:[%s356 + $0x1f0] sm:$0xff]
        %v492 = vld [vmem:[%s356 + $0x1f8] sm:$0xff]
        %v493 = vld [vmem:[%s356 + $0x200] sm:$0xff]
        %v494 = vld [vmem:[%s356 + $0x208] sm:$0xff]
        %v495 = vld [vmem:[%s356 + $0x210] sm:$0xff]
        %v496 = vld [vmem:[%s356 + $0x218] sm:$0xff]
        %v497 = vld [vmem:[%s356 + $0x220] sm:$0xff]
        %v498 = vld [vmem:[%s356 + $0x228] sm:$0xff]
        %v499 = vld [vmem:[%s356 + $0x230] sm:$0xff]
        %v500 = vld [vmem:[%s356 + $0x238] sm:$0xff]
        %v501 = vld [vmem:[%s356 + $0x240] sm:$0xff]
        %v502 = vld [vmem:[%s356 + $0x248] sm:$0xff]
        %v503 = vld [vmem:[%s356 + $0x250] sm:$0xff]
        %v504 = vld [vmem:[%s356 + $0x258] sm:$0xff]
        %v505 = vld [vmem:[%s356 + $0x260] sm:$0xff]
        %v506 = vld [vmem:[%s356 + $0x268] sm:$0xff]
        %v507 = vld [vmem:[%s356 + $0x270] sm:$0xff]
        %v508 = vld [vmem:[%s356 + $0x278] sm:$0xff]
        %v509 = vld [vmem:[%s356 + $0x280] sm:$0xff]
        %v510 = vld [vmem:[%s356 + $0x288] sm:$0xff]
        %v511 = vld [vmem:[%s356 + $0x290] sm:$0xff]
        %v512 = vld [vmem:[%s356 + $0x298] sm:$0xff]
        %v513 = vld [vmem:[%s356 + $0x2a0] sm:$0xff]
        %v514 = vld [vmem:[%s356 + $0x2a8] sm:$0xff]
        %v515 = vld [vmem:[%s356 + $0x2b0] sm:$0xff]
        %v516 = vld [vmem:[%s356 + $0x2b8] sm:$0xff]
        %v517 = vld [vmem:[%s356 + $0x2c0] sm:$0xff]
        %v518 = vld [vmem:[%s356 + $0x2c8] sm:$0xff]
        %v519 = vld [vmem:[%s356 + $0x2d0] sm:$0xff]
        %v520 = vld [vmem:[%s356 + $0x2d8] sm:$0xff]
        %v521 = vld [vmem:[%s356 + $0x2e0] sm:$0xff]
        %v522 = vld [vmem:[%s356 + $0x2e8] sm:$0xff]
        %v523 = vld [vmem:[%s356 + $0x2f0] sm:$0xff]
        %v524 = vld [vmem:[%s356 + $0x2f8] sm:$0xff]
        %v525 = vld [vmem:[%s356 + $0x300] sm:$0xff]
        %v526 = vld [vmem:[%s356 + $0x308] sm:$0xff]
        %v527 = vld [vmem:[%s356 + $0x310] sm:$0xff]
        %v528 = vld [vmem:[%s356 + $0x318] sm:$0xff]
        %v529 = vld [vmem:[%s356 + $0x320] sm:$0xff]
        %v530 = vld [vmem:[%s356 + $0x328] sm:$0xff]
        %v531 = vld [vmem:[%s356 + $0x330] sm:$0xff]
        %v532 = vld [vmem:[%s356 + $0x338] sm:$0xff]
        %v533 = vld [vmem:[%s356 + $0x340] sm:$0xff]
        %v534 = vld [vmem:[%s356 + $0x348] sm:$0xff]
        %v535 = vld [vmem:[%s356 + $0x350] sm:$0xff]
        %v536 = vld [vmem:[%s356 + $0x358] sm:$0xff]
        %v537 = vld [vmem:[%s356 + $0x360] sm:$0xff]
        %v538 = vld [vmem:[%s356 + $0x368] sm:$0xff]
        %v539 = vld [vmem:[%s356 + $0x370] sm:$0xff]
        %v540 = vld [vmem:[%s356 + $0x378] sm:$0xff]
        %v541 = vld [vmem:[%s356 + $0x380] sm:$0xff]
        %v542 = vld [vmem:[%s356 + $0x388] sm:$0xff]
        %v543 = vld [vmem:[%s356 + $0x390] sm:$0xff]
        %v544 = vld [vmem:[%s356 + $0x398] sm:$0xff]
        %v545 = vld [vmem:[%s356 + $0x3a0] sm:$0xff]
        %v546 = vld [vmem:[%s356 + $0x3a8] sm:$0xff]
        %v547 = vld [vmem:[%s356 + $0x3b0] sm:$0xff]
        %v548 = vld [vmem:[%s356 + $0x3b8] sm:$0xff]
        %v549 = vld [vmem:[%s356 + $0x3c0] sm:$0xff]
        %v550 = vld [vmem:[%s356 + $0x3c8] sm:$0xff]
        %v551 = vld [vmem:[%s356 + $0x3d0] sm:$0xff]
        %v552 = vld [vmem:[%s356 + $0x3d8] sm:$0xff]
        %v553 = vld [vmem:[%s356 + $0x3e0] sm:$0xff]
        %v554 = vld [vmem:[%s356 + $0x3e8] sm:$0xff]
        %v555 = vld [vmem:[%s356 + $0x3f0] sm:$0xff]
        %v556 = vld [vmem:[%s356 + $0x3f8] sm:$0xff]
        %v557 = vld [vmem:[%s356 + $0x400] sm:$0xff]
        %v558 = vld [vmem:[%s356 + $0x408] sm:$0xff]
        %v559 = vld [vmem:[%s356 + $0x410] sm:$0xff]
        %v560 = vld [vmem:[%s356 + $0x418] sm:$0xff]
        %v561 = vld [vmem:[%s356 + $0x420] sm:$0xff]
        %v562 = vld [vmem:[%s356 + $0x428] sm:$0xff]
        %v563 = vld [vmem:[%s356 + $0x430] sm:$0xff]
        %v564 = vld [vmem:[%s356 + $0x438] sm:$0xff]
        %v565 = vld [vmem:[%s356 + $0x440] sm:$0xff]
        %v566 = vld [vmem:[%s356 + $0x448] sm:$0xff]
        %v567 = vld [vmem:[%s356 + $0x450] sm:$0xff]
        %v568 = vld [vmem:[%s356 + $0x458] sm:$0xff]
        %v569 = vld [vmem:[%s356 + $0x460] sm:$0xff]
        %v570 = vld [vmem:[%s356 + $0x468] sm:$0xff]
        %v571 = vld [vmem:[%s356 + $0x470] sm:$0xff]
        %v572 = vld [vmem:[%s356 + $0x478] sm:$0xff]
        %v573 = vld [vmem:[%s356 + $0x480] sm:$0xff]
        %v574 = vld [vmem:[%s356 + $0x488] sm:$0xff]
        %v575 = vld [vmem:[%s356 + $0x490] sm:$0xff]
        %v576 = vld [vmem:[%s356 + $0x498] sm:$0xff]
        %v577 = vld [vmem:[%s356 + $0x4a0] sm:$0xff]
        %v578 = vld [vmem:[%s356 + $0x4a8] sm:$0xff]
        %v579 = vld [vmem:[%s356 + $0x4b0] sm:$0xff]
        %v580 = vld [vmem:[%s356 + $0x4b8] sm:$0xff]
        %v581 = vld [vmem:[%s356 + $0x4c0] sm:$0xff]
        %v582 = vld [vmem:[%s356 + $0x4c8] sm:$0xff]
        %v583 = vld [vmem:[%s356 + $0x4d0] sm:$0xff]
        %v584 = vld [vmem:[%s356 + $0x4d8] sm:$0xff]
        %v585 = vld [vmem:[%s356 + $0x4e0] sm:$0xff]
        %v586 = vld [vmem:[%s356 + $0x4e8] sm:$0xff]
        %v587 = vld [vmem:[%s356 + $0x4f0] sm:$0xff]
        %v588 = vld [vmem:[%s356 + $0x4f8] sm:$0xff]
        %v589 = vld [vmem:[%s356 + $0x500] sm:$0xff]
        %v590 = vld [vmem:[%s356 + $0x508] sm:$0xff]
        %v591 = vld [vmem:[%s356 + $0x510] sm:$0xff]
        %v592 = vld [vmem:[%s356 + $0x518] sm:$0xff]
        %v593 = vld [vmem:[%s356 + $0x520] sm:$0xff]
        %v594 = vld [vmem:[%s356 + $0x528] sm:$0xff]
        %v595 = vld [vmem:[%s356 + $0x530] sm:$0xff]
        %v596 = vld [vmem:[%s356 + $0x538] sm:$0xff]
        %v597 = vld [vmem:[%s356 + $0x540] sm:$0xff]
        %v598 = vld [vmem:[%s356 + $0x548] sm:$0xff]
        %v599 = vld [vmem:[%s356 + $0x550] sm:$0xff]
        %v600 = vld [vmem:[%s356 + $0x558] sm:$0xff]
        %v601 = vld [vmem:[%s356 + $0x560] sm:$0xff]
        %v602 = vld [vmem:[%s356 + $0x568] sm:$0xff]
        %v603 = vld [vmem:[%s356 + $0x570] sm:$0xff]
        %v604 = vld [vmem:[%s356 + $0x578] sm:$0xff]
        %v605 = vld [vmem:[%s356 + $0x580] sm:$0xff]
        %v606 = vld [vmem:[%s356 + $0x588] sm:$0xff]
        %v607 = vld [vmem:[%s356 + $0x590] sm:$0xff]
        %v608 = vld [vmem:[%s356 + $0x598] sm:$0xff]
        %v609 = vld [vmem:[%s356 + $0x5a0] sm:$0xff]
        %v610 = vld [vmem:[%s356 + $0x5a8] sm:$0xff]
        %v611 = vld [vmem:[%s356 + $0x5b0] sm:$0xff]
        %v612 = vld [vmem:[%s356 + $0x5b8] sm:$0xff]
        %v613 = vld [vmem:[%s356 + $0x5c0] sm:$0xff]
        %v614 = vld [vmem:[%s356 + $0x5c8] sm:$0xff]
        %v615 = vld [vmem:[%s356 + $0x5d0] sm:$0xff]
        %v616 = vld [vmem:[%s356 + $0x5d8] sm:$0xff]
        %v617 = vld [vmem:[%s356 + $0x5e0] sm:$0xff]
        %v618 = vld [vmem:[%s356 + $0x5e8] sm:$0xff]
        %v619 = vld [vmem:[%s356 + $0x5f0] sm:$0xff]
        %v620 = vld [vmem:[%s356 + $0x5f8] sm:$0xff]
        %v621 = vld [vmem:[%s356 + $0x600] sm:$0xff]
        %v622 = vld [vmem:[%s356 + $0x608] sm:$0xff]
        %v623 = vld [vmem:[%s356 + $0x610] sm:$0xff]
        %v624 = vld [vmem:[%s356 + $0x618] sm:$0xff]
        %v625 = vld [vmem:[%s356 + $0x620] sm:$0xff]
        %v626 = vld [vmem:[%s356 + $0x628] sm:$0xff]
        %v627 = vld [vmem:[%s356 + $0x630] sm:$0xff]
        %v628 = vld [vmem:[%s356 + $0x638] sm:$0xff]
        %v629 = vld [vmem:[%s356 + $0x640] sm:$0xff]
        %v630 = vld [vmem:[%s356 + $0x648] sm:$0xff]
        %v631 = vld [vmem:[%s356 + $0x650] sm:$0xff]
        %v632 = vld [vmem:[%s356 + $0x658] sm:$0xff]
        %v633 = vld [vmem:[%s356 + $0x660] sm:$0xff]
        %v634 = vld [vmem:[%s356 + $0x668] sm:$0xff]
        %v635 = vld [vmem:[%s356 + $0x670] sm:$0xff]
        %v636 = vld [vmem:[%s356 + $0x678] sm:$0xff]
        %v637 = vld [vmem:[%s356 + $0x680] sm:$0xff]
        %v638 = vld [vmem:[%s356 + $0x688] sm:$0xff]
        %v639 = vld [vmem:[%s356 + $0x690] sm:$0xff]
        %v640 = vld [vmem:[%s356 + $0x698] sm:$0xff]
        %v641 = vld [vmem:[%s356 + $0x6a0] sm:$0xff]
        %v642 = vld [vmem:[%s356 + $0x6a8] sm:$0xff]
        %v643 = vld [vmem:[%s356 + $0x6b0] sm:$0xff]
        %v644 = vld [vmem:[%s356 + $0x6b8] sm:$0xff]
        %v645 = vld [vmem:[%s356 + $0x6c0] sm:$0xff]
        %v646 = vld [vmem:[%s356 + $0x6c8] sm:$0xff]
        %v647 = vld [vmem:[%s356 + $0x6d0] sm:$0xff]
        %v648 = vld [vmem:[%s356 + $0x6d8] sm:$0xff]
        %v649 = vld [vmem:[%s356 + $0x6e0] sm:$0xff]
        %v650 = vld [vmem:[%s356 + $0x6e8] sm:$0xff]
        %v651 = vld [vmem:[%s356 + $0x6f0] sm:$0xff]
        %v652 = vld [vmem:[%s356 + $0x6f8] sm:$0xff]
        %v653 = vld [vmem:[%s356 + $0x700] sm:$0xff]
        %v654 = vld [vmem:[%s356 + $0x708] sm:$0xff]
        %v655 = vld [vmem:[%s356 + $0x710] sm:$0xff]
        %v656 = vld [vmem:[%s356 + $0x718] sm:$0xff]
        %v657 = vld [vmem:[%s356 + $0x720] sm:$0xff]
        %v658 = vld [vmem:[%s356 + $0x728] sm:$0xff]
        %v659 = vld [vmem:[%s356 + $0x730] sm:$0xff]
        %v660 = vld [vmem:[%s356 + $0x738] sm:$0xff]
        %v661 = vld [vmem:[%s356 + $0x740] sm:$0xff]
        %v662 = vld [vmem:[%s356 + $0x748] sm:$0xff]
        %v663 = vld [vmem:[%s356 + $0x750] sm:$0xff]
        %v664 = vld [vmem:[%s356 + $0x758] sm:$0xff]
        %v665 = vld [vmem:[%s356 + $0x760] sm:$0xff]
        %v666 = vld [vmem:[%s356 + $0x768] sm:$0xff]
        %v667 = vld [vmem:[%s356 + $0x770] sm:$0xff]
        %v668 = vld [vmem:[%s356 + $0x778] sm:$0xff]
        %v669 = vld [vmem:[%s356 + $0x780] sm:$0xff]
        %v670 = vld [vmem:[%s356 + $0x788] sm:$0xff]
        %v671 = vld [vmem:[%s356 + $0x790] sm:$0xff]
        %v672 = vld [vmem:[%s356 + $0x798] sm:$0xff]
        %v673 = vld [vmem:[%s356 + $0x7a0] sm:$0xff]
        %v674 = vld [vmem:[%s356 + $0x7a8] sm:$0xff]
        %v675 = vld [vmem:[%s356 + $0x7b0] sm:$0xff]
        %v676 = vld [vmem:[%s356 + $0x7b8] sm:$0xff]
        %v677 = vld [vmem:[%s356 + $0x7c0] sm:$0xff]
        %v678 = vld [vmem:[%s356 + $0x7c8] sm:$0xff]
        %v679 = vld [vmem:[%s356 + $0x7d0] sm:$0xff]
        %v680 = vld [vmem:[%s356 + $0x7d8] sm:$0xff]
        %v681 = vld [vmem:[%s356 + $0x7e0] sm:$0xff]
        %v682 = vld [vmem:[%s356 + $0x7e8] sm:$0xff]
        %v683 = vld [vmem:[%s356 + $0x7f0] sm:$0xff]
        %v684 = vld [vmem:[%s356 + $0x7f8] sm:$0xff]
        %v685 = vld [vmem:[%s356 + $0x800] sm:$0xff]
        %v686 = vld [vmem:[%s356 + $0x808] sm:$0xff]
        %v687 = vld [vmem:[%s356 + $0x810] sm:$0xff]
        %v688 = vld [vmem:[%s356 + $0x818] sm:$0xff]
        %v689 = vld [vmem:[%s356 + $0x820] sm:$0xff]
        %v690 = vld [vmem:[%s356 + $0x828] sm:$0xff]
        %v691 = vld [vmem:[%s356 + $0x830] sm:$0xff]
        %v692 = vld [vmem:[%s356 + $0x838] sm:$0xff]
        %v693 = vld [vmem:[%s356 + $0x840] sm:$0xff]
        %v694 = vld [vmem:[%s356 + $0x848] sm:$0xff]
        %v695 = vld [vmem:[%s356 + $0x850] sm:$0xff]
        %v696 = vld [vmem:[%s356 + $0x858] sm:$0xff]
        %v697 = vld [vmem:[%s356 + $0x860] sm:$0xff]
        %v698 = vld [vmem:[%s356 + $0x868] sm:$0xff]
        %v699 = vld [vmem:[%s356 + $0x870] sm:$0xff]
        %v700 = vld [vmem:[%s356 + $0x878] sm:$0xff]
        %v701 = vld [vmem:[%s356 + $0x880] sm:$0xff]
        %v702 = vld [vmem:[%s356 + $0x888] sm:$0xff]
        %v703 = vld [vmem:[%s356 + $0x890] sm:$0xff]
        %v704 = vld [vmem:[%s356 + $0x898] sm:$0xff]
        %v705 = vld [vmem:[%s356 + $0x8a0] sm:$0xff]
        %v706 = vld [vmem:[%s356 + $0x8a8] sm:$0xff]
        %v707 = vld [vmem:[%s356 + $0x8b0] sm:$0xff]
        %v708 = vld [vmem:[%s356 + $0x8b8] sm:$0xff]
        %v709 = vld [vmem:[%s356 + $0x8c0] sm:$0xff]
        %v710 = vld [vmem:[%s356 + $0x8c8] sm:$0xff]
        %v711 = vld [vmem:[%s356 + $0x8d0] sm:$0xff]
        %v712 = vld [vmem:[%s356 + $0x8d8] sm:$0xff]
        %v713 = vld [vmem:[%s356 + $0x8e0] sm:$0xff]
        %v714 = vld [vmem:[%s356 + $0x8e8] sm:$0xff]
        %v715 = vld [vmem:[%s356 + $0x8f0] sm:$0xff]
        %v716 = vld [vmem:[%s356 + $0x8f8] sm:$0xff]
        %v717 = vld [vmem:[%s356 + $0x900] sm:$0xff]
        %v718 = vld [vmem:[%s356 + $0x908] sm:$0xff]
        %v719 = vld [vmem:[%s356 + $0x910] sm:$0xff]
        %v720 = vld [vmem:[%s356 + $0x918] sm:$0xff]
        %v721 = vld [vmem:[%s356 + $0x920] sm:$0xff]
        %v722 = vld [vmem:[%s356 + $0x928] sm:$0xff]
        %v723 = vld [vmem:[%s356 + $0x930] sm:$0xff]
        %v724 = vld [vmem:[%s356 + $0x938] sm:$0xff]
        %v725 = vld [vmem:[%s356 + $0x940] sm:$0xff]
        %v726 = vld [vmem:[%s356 + $0x948] sm:$0xff]
        %v727 = vld [vmem:[%s356 + $0x950] sm:$0xff]
        %v728 = vld [vmem:[%s356 + $0x958] sm:$0xff]
        %v729 = vld [vmem:[%s356 + $0x960] sm:$0xff]
        %v730 = vld [vmem:[%s356 + $0x968] sm:$0xff]
        %v731 = vld [vmem:[%s356 + $0x970] sm:$0xff]
        %v732 = vld [vmem:[%s356 + $0x978] sm:$0xff]
        %v733 = vld [vmem:[%s356 + $0x980] sm:$0xff]
        %v734 = vld [vmem:[%s356 + $0x988] sm:$0xff]
        %v735 = vld [vmem:[%s356 + $0x990] sm:$0xff]
        %v736 = vld [vmem:[%s356 + $0x998] sm:$0xff]
        %v737 = vld [vmem:[%s356 + $0x9a0] sm:$0xff]
        %v738 = vld [vmem:[%s356 + $0x9a8] sm:$0xff]
        %v739 = vld [vmem:[%s356 + $0x9b0] sm:$0xff]
        %v740 = vld [vmem:[%s356 + $0x9b8] sm:$0xff]
        %v741 = vld [vmem:[%s356 + $0x9c0] sm:$0xff]
        %v742 = vld [vmem:[%s356 + $0x9c8] sm:$0xff]
        %v743 = vld [vmem:[%s356 + $0x9d0] sm:$0xff]
        %v744 = vld [vmem:[%s356 + $0x9d8] sm:$0xff]
        %v745 = vld [vmem:[%s356 + $0x9e0] sm:$0xff]
        %v746 = vld [vmem:[%s356 + $0x9e8] sm:$0xff]
        %v747 = vld [vmem:[%s356 + $0x9f0] sm:$0xff]
        %v748 = vld [vmem:[%s356 + $0x9f8] sm:$0xff]
        %v749 = vld [vmem:[%s356 + $0xa00] sm:$0xff]
        %v750 = vld [vmem:[%s356 + $0xa08] sm:$0xff]
        %v751 = vld [vmem:[%s356 + $0xa10] sm:$0xff]
        %v752 = vld [vmem:[%s356 + $0xa18] sm:$0xff]
        %v753 = vld [vmem:[%s356 + $0xa20] sm:$0xff]
        %v754 = vld [vmem:[%s356 + $0xa28] sm:$0xff]
        %v755 = vld [vmem:[%s356 + $0xa30] sm:$0xff]
        %v756 = vld [vmem:[%s356 + $0xa38] sm:$0xff]
        %v757 = vld [vmem:[%s356 + $0xa40] sm:$0xff]
        %v758 = vld [vmem:[%s356 + $0xa48] sm:$0xff]
        %v759 = vld [vmem:[%s356 + $0xa50] sm:$0xff]
        %v760 = vld [vmem:[%s356 + $0xa58] sm:$0xff]
        %v761 = vld [vmem:[%s356 + $0xa60] sm:$0xff]
        %v762 = vld [vmem:[%s356 + $0xa68] sm:$0xff]
        %v763 = vld [vmem:[%s356 + $0xa70] sm:$0xff]
        %v764 = vld [vmem:[%s356 + $0xa78] sm:$0xff]
        %v765 = vld [vmem:[%s356 + $0xa80] sm:$0xff]
        %v766 = vld [vmem:[%s356 + $0xa88] sm:$0xff]
        %v767 = vld [vmem:[%s356 + $0xa90] sm:$0xff]
        %v768 = vld [vmem:[%s356 + $0xa98] sm:$0xff]
        %v769 = vld [vmem:[%s356 + $0xaa0] sm:$0xff]
        %v770 = vld [vmem:[%s356 + $0xaa8] sm:$0xff]
        %v771 = vld [vmem:[%s356 + $0xab0] sm:$0xff]
        %v772 = vld [vmem:[%s356 + $0xab8] sm:$0xff]
        %v773 = vld [vmem:[%s356 + $0xac0] sm:$0xff]
        %v774 = vld [vmem:[%s356 + $0xac8] sm:$0xff]
        %v775 = vld [vmem:[%s356 + $0xad0] sm:$0xff]
        %v776 = vld [vmem:[%s356 + $0xad8] sm:$0xff]
        %v777 = vld [vmem:[%s356 + $0xae0] sm:$0xff]
        %v778 = vld [vmem:[%s356 + $0xae8] sm:$0xff]
        %v779 = vld [vmem:[%s356 + $0xaf0] sm:$0xff]
        %v780 = vld [vmem:[%s356 + $0xaf8] sm:$0xff]
        %v781 = vld [vmem:[%s356 + $0xb00] sm:$0xff]
        %v782 = vld [vmem:[%s356 + $0xb08] sm:$0xff]
        %v783 = vld [vmem:[%s356 + $0xb10] sm:$0xff]
        %v784 = vld [vmem:[%s356 + $0xb18] sm:$0xff]
        %v785 = vld [vmem:[%s356 + $0xb20] sm:$0xff]
        %v786 = vld [vmem:[%s356 + $0xb28] sm:$0xff]
        %v787 = vld [vmem:[%s356 + $0xb30] sm:$0xff]
        %v788 = vld [vmem:[%s356 + $0xb38] sm:$0xff]
        %v789 = vld [vmem:[%s356 + $0xb40] sm:$0xff]
        %v790 = vld [vmem:[%s356 + $0xb48] sm:$0xff]
        %v791 = vld [vmem:[%s356 + $0xb50] sm:$0xff]
        %v792 = vld [vmem:[%s356 + $0xb58] sm:$0xff]
        %v793 = vld [vmem:[%s356 + $0xb60] sm:$0xff]
        %v794 = vld [vmem:[%s356 + $0xb68] sm:$0xff]
        %v795 = vld [vmem:[%s356 + $0xb70] sm:$0xff]
        %v796 = vld [vmem:[%s356 + $0xb78] sm:$0xff]
        %v797 = vld [vmem:[%s356 + $0xb80] sm:$0xff]
        %v798 = vld [vmem:[%s356 + $0xb88] sm:$0xff]
        %v799 = vld [vmem:[%s356 + $0xb90] sm:$0xff]
        %v800 = vld [vmem:[%s356 + $0xb98] sm:$0xff]
        %v801 = vld [vmem:[%s356 + $0xba0] sm:$0xff]
        %v802 = vld [vmem:[%s356 + $0xba8] sm:$0xff]
        %v803 = vld [vmem:[%s356 + $0xbb0] sm:$0xff]
        %v804 = vld [vmem:[%s356 + $0xbb8] sm:$0xff]
        %v805 = vld [vmem:[%s356 + $0xbc0] sm:$0xff]
        %v806 = vld [vmem:[%s356 + $0xbc8] sm:$0xff]
        %v807 = vld [vmem:[%s356 + $0xbd0] sm:$0xff]
        %v808 = vld [vmem:[%s356 + $0xbd8] sm:$0xff]
        %v809 = vld [vmem:[%s356 + $0xbe0] sm:$0xff]
        %v810 = vld [vmem:[%s356 + $0xbe8] sm:$0xff]
        %v811 = vld [vmem:[%s356 + $0xbf0] sm:$0xff]
        %v812 = vld [vmem:[%s356 + $0xbf8] sm:$0xff]
        %v813 = vld [vmem:[%s356 + $0xc00] sm:$0xff]
        %v814 = vld [vmem:[%s356 + $0xc08] sm:$0xff]
        %v815 = vld [vmem:[%s356 + $0xc10] sm:$0xff]
        %v816 = vld [vmem:[%s356 + $0xc18] sm:$0xff]
        %v817 = vld [vmem:[%s356 + $0xc20] sm:$0xff]
        %v818 = vld [vmem:[%s356 + $0xc28] sm:$0xff]
        %v819 = vld [vmem:[%s356 + $0xc30] sm:$0xff]
        %v820 = vld [vmem:[%s356 + $0xc38] sm:$0xff]
        %v821 = vld [vmem:[%s356 + $0xc40] sm:$0xff]
        %v822 = vld [vmem:[%s356 + $0xc48] sm:$0xff]
        %v823 = vld [vmem:[%s356 + $0xc50] sm:$0xff]
        %v824 = vld [vmem:[%s356 + $0xc58] sm:$0xff]
        %v825 = vld [vmem:[%s356 + $0xc60] sm:$0xff]
        %v826 = vld [vmem:[%s356 + $0xc68] sm:$0xff]
        %v827 = vld [vmem:[%s356 + $0xc70] sm:$0xff]
        %v828 = vld [vmem:[%s356 + $0xc78] sm:$0xff]
        %v829 = vld [vmem:[%s356 + $0xc80] sm:$0xff]
        %v830 = vld [vmem:[%s356 + $0xc88] sm:$0xff]
        %v831 = vld [vmem:[%s356 + $0xc90] sm:$0xff]
        %v832 = vld [vmem:[%s356 + $0xc98] sm:$0xff]
        %v833 = vld [vmem:[%s356 + $0xca0] sm:$0xff]
        %v834 = vld [vmem:[%s356 + $0xca8] sm:$0xff]
        %v835 = vld [vmem:[%s356 + $0xcb0] sm:$0xff]
        %v836 = vld [vmem:[%s356 + $0xcb8] sm:$0xff]
        %v837 = vld [vmem:[%s356 + $0xcc0] sm:$0xff]
        %v838 = vld [vmem:[%s356 + $0xcc8] sm:$0xff]
        %v839 = vld [vmem:[%s356 + $0xcd0] sm:$0xff]
        %v840 = vld [vmem:[%s356 + $0xcd8] sm:$0xff]
        %v841 = vld [vmem:[%s356 + $0xce0] sm:$0xff]
        %v842 = vld [vmem:[%s356 + $0xce8] sm:$0xff]
        %v843 = vld [vmem:[%s356 + $0xcf0] sm:$0xff]
        %v844 = vld [vmem:[%s356 + $0xcf8] sm:$0xff]
        %v845 = vld [vmem:[%s356 + $0xd00] sm:$0xff]
        %v846 = vld [vmem:[%s356 + $0xd08] sm:$0xff]
        %v847 = vld [vmem:[%s356 + $0xd10] sm:$0xff]
        %v848 = vld [vmem:[%s356 + $0xd18] sm:$0xff]
        %v849 = vld [vmem:[%s356 + $0xd20] sm:$0xff]
        %v850 = vld [vmem:[%s356 + $0xd28] sm:$0xff]
        %v851 = vld [vmem:[%s356 + $0xd30] sm:$0xff]
        %v852 = vld [vmem:[%s356 + $0xd38] sm:$0xff]
        %v853 = vld [vmem:[%s356 + $0xd40] sm:$0xff]
        %v854 = vld [vmem:[%s356 + $0xd48] sm:$0xff]
        %v855 = vld [vmem:[%s356 + $0xd50] sm:$0xff]
        %v856 = vld [vmem:[%s356 + $0xd58] sm:$0xff]
        %v857 = vld [vmem:[%s356 + $0xd60] sm:$0xff]
        %v858 = vld [vmem:[%s356 + $0xd68] sm:$0xff]
        %v859 = vld [vmem:[%s356 + $0xd70] sm:$0xff]
        %v860 = vld [vmem:[%s356 + $0xd78] sm:$0xff]
        %v861 = vld [vmem:[%s356 + $0xd80] sm:$0xff]
        %v862 = vld [vmem:[%s356 + $0xd88] sm:$0xff]
        %v863 = vld [vmem:[%s356 + $0xd90] sm:$0xff]
        %v864 = vld [vmem:[%s356 + $0xd98] sm:$0xff]
        %v865 = vld [vmem:[%s356 + $0xda0] sm:$0xff]
        %v866 = vld [vmem:[%s356 + $0xda8] sm:$0xff]
        %v867 = vld [vmem:[%s356 + $0xdb0] sm:$0xff]
        %v868 = vld [vmem:[%s356 + $0xdb8] sm:$0xff]
        %v869 = vld [vmem:[%s356 + $0xdc0] sm:$0xff]
        %v870 = vld [vmem:[%s356 + $0xdc8] sm:$0xff]
        %v871 = vld [vmem:[%s356 + $0xdd0] sm:$0xff]
        %v872 = vld [vmem:[%s356 + $0xdd8] sm:$0xff]
        %v873 = vld [vmem:[%s356 + $0xde0] sm:$0xff]
        %v874 = vld [vmem:[%s356 + $0xde8] sm:$0xff]
        %v875 = vld [vmem:[%s356 + $0xdf0] sm:$0xff]
        %v876 = vld [vmem:[%s356 + $0xdf8] sm:$0xff]
        %v877 = vld [vmem:[%s356 + $0xe00] sm:$0xff]
        %v878 = vld [vmem:[%s356 + $0xe08] sm:$0xff]
        %v879 = vld [vmem:[%s356 + $0xe10] sm:$0xff]
        %v880 = vld [vmem:[%s356 + $0xe18] sm:$0xff]
        %v881 = vld [vmem:[%s356 + $0xe20] sm:$0xff]
        %v882 = vld [vmem:[%s356 + $0xe28] sm:$0xff]
        %v883 = vld [vmem:[%s356 + $0xe30] sm:$0xff]
        %v884 = vld [vmem:[%s356 + $0xe38] sm:$0xff]
        %v885 = vld [vmem:[%s356 + $0xe40] sm:$0xff]
        %v886 = vld [vmem:[%s356 + $0xe48] sm:$0xff]
        %v887 = vld [vmem:[%s356 + $0xe50] sm:$0xff]
        %v888 = vld [vmem:[%s356 + $0xe58] sm:$0xff]
        %v889 = vld [vmem:[%s356 + $0xe60] sm:$0xff]
        %v890 = vld [vmem:[%s356 + $0xe68] sm:$0xff]
        %v891 = vld [vmem:[%s356 + $0xe70] sm:$0xff]
        %v892 = vld [vmem:[%s356 + $0xe78] sm:$0xff]
        %v893 = vld [vmem:[%s356 + $0xe80] sm:$0xff]
        %v894 = vld [vmem:[%s356 + $0xe88] sm:$0xff]
        %v895 = vld [vmem:[%s356 + $0xe90] sm:$0xff]
        %v896 = vld [vmem:[%s356 + $0xe98] sm:$0xff]
        %v897 = vld [vmem:[%s356 + $0xea0] sm:$0xff]
        %v898 = vld [vmem:[%s356 + $0xea8] sm:$0xff]
        %v899 = vld [vmem:[%s356 + $0xeb0] sm:$0xff]
        %v900 = vld [vmem:[%s356 + $0xeb8] sm:$0xff]
        %v901 = vld [vmem:[%s356 + $0xec0] sm:$0xff]
        %v902 = vld [vmem:[%s356 + $0xec8] sm:$0xff]
        %v903 = vld [vmem:[%s356 + $0xed0] sm:$0xff]
        %v904 = vld [vmem:[%s356 + $0xed8] sm:$0xff]
        %v905 = vld [vmem:[%s356 + $0xee0] sm:$0xff]
        %v906 = vld [vmem:[%s356 + $0xee8] sm:$0xff]
        %v907 = vld [vmem:[%s356 + $0xef0] sm:$0xff]
        %v908 = vld [vmem:[%s356 + $0xef8] sm:$0xff]
        %v909 = vld [vmem:[%s356 + $0xf00] sm:$0xff]
        %v910 = vld [vmem:[%s356 + $0xf08] sm:$0xff]
        %v911 = vld [vmem:[%s356 + $0xf10] sm:$0xff]
        %v912 = vld [vmem:[%s356 + $0xf18] sm:$0xff]
        %v913 = vld [vmem:[%s356 + $0xf20] sm:$0xff]
        %v914 = vld [vmem:[%s356 + $0xf28] sm:$0xff]
        %v915 = vld [vmem:[%s356 + $0xf30] sm:$0xff]
        %v916 = vld [vmem:[%s356 + $0xf38] sm:$0xff]
        %v917 = vld [vmem:[%s356 + $0xf40] sm:$0xff]
        %v918 = vld [vmem:[%s356 + $0xf48] sm:$0xff]
        %v919 = vld [vmem:[%s356 + $0xf50] sm:$0xff]
        %v920 = vld [vmem:[%s356 + $0xf58] sm:$0xff]
        %v921 = vld [vmem:[%s356 + $0xf60] sm:$0xff]
        %v922 = vld [vmem:[%s356 + $0xf68] sm:$0xff]
        %v923 = vld [vmem:[%s356 + $0xf70] sm:$0xff]
        %v924 = vld [vmem:[%s356 + $0xf78] sm:$0xff]
        %v925 = vld [vmem:[%s356 + $0xf80] sm:$0xff]
        %v926 = vld [vmem:[%s356 + $0xf88] sm:$0xff]
        %v927 = vld [vmem:[%s356 + $0xf90] sm:$0xff]
        %v928 = vld [vmem:[%s356 + $0xf98] sm:$0xff]
        %v929 = vld [vmem:[%s356 + $0xfa0] sm:$0xff]
        %v930 = vld [vmem:[%s356 + $0xfa8] sm:$0xff]
        %v931 = vld [vmem:[%s356 + $0xfb0] sm:$0xff]
        %v932 = vld [vmem:[%s356 + $0xfb8] sm:$0xff]
        %v933 = vld [vmem:[%s356 + $0xfc0] sm:$0xff]
        %v934 = vld [vmem:[%s356 + $0xfc8] sm:$0xff]
        %v935 = vld [vmem:[%s356 + $0xfd0] sm:$0xff]
        %v936 = vld [vmem:[%s356 + $0xfd8] sm:$0xff]
        %v937 = vld [vmem:[%s356 + $0xfe0] sm:$0xff]
        %v938 = vld [vmem:[%s356 + $0xfe8] sm:$0xff]
        %v939 = vld [vmem:[%s356 + $0xff0] sm:$0xff]
        %v940 = vld [vmem:[%s356 + $0xff8] sm:$0xff]
        %v941 = vld [vmem:[%s356 + $0x1000] sm:$0xff]
        %v942 = vld [vmem:[%s356 + $0x1008] sm:$0xff]
        %v943 = vld [vmem:[%s356 + $0x1010] sm:$0xff]
        %v944 = vld [vmem:[%s356 + $0x1018] sm:$0xff]
        %v945 = vld [vmem:[%s356 + $0x1020] sm:$0xff]
        %v946 = vld [vmem:[%s356 + $0x1028] sm:$0xff]
        %v947 = vld [vmem:[%s356 + $0x1030] sm:$0xff]
        %v948 = vld [vmem:[%s356 + $0x1038] sm:$0xff]
        %v949 = vld [vmem:[%s356 + $0x1040] sm:$0xff]
        %v950 = vld [vmem:[%s356 + $0x1048] sm:$0xff]
        %v951 = vld [vmem:[%s356 + $0x1050] sm:$0xff]
        %v952 = vld [vmem:[%s356 + $0x1058] sm:$0xff]
        %v953 = vld [vmem:[%s356 + $0x1060] sm:$0xff]
        %v954 = vld [vmem:[%s356 + $0x1068] sm:$0xff]
        %v955 = vld [vmem:[%s356 + $0x1070] sm:$0xff]
        %v956 = vld [vmem:[%s356 + $0x1078] sm:$0xff]
        %v957 = vld [vmem:[%s356 + $0x1080] sm:$0xff]
        %v958 = vld [vmem:[%s356 + $0x1088] sm:$0xff]
        %v959 = vld [vmem:[%s356 + $0x1090] sm:$0xff]
        %v960 = vld [vmem:[%s356 + $0x1098] sm:$0xff]
        %v961 = vld [vmem:[%s356 + $0x10a0] sm:$0xff]
        %v962 = vld [vmem:[%s356 + $0x10a8] sm:$0xff]
        %v963 = vld [vmem:[%s356 + $0x10b0] sm:$0xff]
        %v964 = vld [vmem:[%s356 + $0x10b8] sm:$0xff]
        %v965 = vld [vmem:[%s356 + $0x10c0] sm:$0xff]
        %v966 = vld [vmem:[%s356 + $0x10c8] sm:$0xff]
        %v967 = vld [vmem:[%s356 + $0x10d0] sm:$0xff]
        %v968 = vld [vmem:[%s356 + $0x10d8] sm:$0xff]
        %v969 = vld [vmem:[%s356 + $0x10e0] sm:$0xff]
        %v970 = vld [vmem:[%s356 + $0x10e8] sm:$0xff]
        %v971 = vld [vmem:[%s356 + $0x10f0] sm:$0xff]
        %v972 = vld [vmem:[%s356 + $0x10f8] sm:$0xff]
        %v973 = vld [vmem:[%s356 + $0x1100] sm:$0xff]
        %v974 = vld [vmem:[%s356 + $0x1108] sm:$0xff]
        %v975 = vld [vmem:[%s356 + $0x1110] sm:$0xff]
        %v976 = vld [vmem:[%s356 + $0x1118] sm:$0xff]
        %v977 = vld [vmem:[%s356 + $0x1120] sm:$0xff]
        %v978 = vld [vmem:[%s356 + $0x1128] sm:$0xff]
        %v979 = vld [vmem:[%s356 + $0x1130] sm:$0xff]
        %v980 = vld [vmem:[%s356 + $0x1138] sm:$0xff]
        %v981 = vld [vmem:[%s356 + $0x1140] sm:$0xff]
        %v982 = vld [vmem:[%s356 + $0x1148] sm:$0xff]
        %v983 = vld [vmem:[%s356 + $0x1150] sm:$0xff]
        %v984 = vld [vmem:[%s356 + $0x1158] sm:$0xff]
        %v985 = vld [vmem:[%s356 + $0x1160] sm:$0xff]
        %v986 = vld [vmem:[%s356 + $0x1168] sm:$0xff]
        %v987 = vld [vmem:[%s356 + $0x1170] sm:$0xff]
        %v988 = vld [vmem:[%s356 + $0x1178] sm:$0xff]
        %v989 = vld [vmem:[%s356 + $0x1180] sm:$0xff]
        %v990 = vld [vmem:[%s356 + $0x1188] sm:$0xff]
        %v991 = vld [vmem:[%s356 + $0x1190] sm:$0xff]
        %v992 = vld [vmem:[%s356 + $0x1198] sm:$0xff]
        %v993 = vld [vmem:[%s356 + $0x11a0] sm:$0xff]
        %v994 = vld [vmem:[%s356 + $0x11a8] sm:$0xff]
        %v995 = vld [vmem:[%s356 + $0x11b0] sm:$0xff]
        %v996 = vld [vmem:[%s356 + $0x11b8] sm:$0xff]
        %v997 = vld [vmem:[%s356 + $0x11c0] sm:$0xff]
        %v998 = vld [vmem:[%s356 + $0x11c8] sm:$0xff]
        %v999 = vld [vmem:[%s356 + $0x11d0] sm:$0xff]
        %v1000 = vld [vmem:[%s356 + $0x11d8] sm:$0xff]
        %v1001 = vld [vmem:[%s356 + $0x11e0] sm:$0xff]
        %v1002 = vld [vmem:[%s356 + $0x11e8] sm:$0xff]
        %v1003 = vld [vmem:[%s356 + $0x11f0] sm:$0xff]
        %v1004 = vld [vmem:[%s356 + $0x11f8] sm:$0xff]
        %v1005 = vld [vmem:[%s2] sm:$0xff]
        %v1006 = vld [vmem:[%s2 + $0x8] sm:$0xff]
        %v1007 = vld [vmem:[%s2 + $0x10] sm:$0xff]
        %v1008 = vld [vmem:[%s2 + $0x18] sm:$0xff]
        %1010 = vset.pattern.permute.xlu0 0
        %1011 = vperm.xlu0 %1010, %v1005
        %v1012 = vpop.permute.xlu0 %1011
        %1015 = vset.pattern.permute.xlu0 0
        %1016 = vperm.xlu0 %1015, %v1006
        %v1017 = vpop.permute.xlu0 %1016
        %1020 = vset.pattern.permute.xlu0 0
        %1021 = vperm.xlu0 %1020, %v1007
        %v1022 = vpop.permute.xlu0 %1021
        %1025 = vset.pattern.permute.xlu0 0
        %1026 = vperm.xlu0 %1025, %v1008
        %v1027 = vpop.permute.xlu0 %1026
        %v1101 = vunpack.c.l.b16 %v357
        %v1102 = vunpack.c.h.b16 %v357
        %v1103 = vunpack.c.l.b16 %v358
        %v1104 = vunpack.c.h.b16 %v358
        %v1105 = vunpack.c.l.b16 %v359
        %v1106 = vunpack.c.h.b16 %v359
        %v1107 = vunpack.c.l.b16 %v360
        %v1108 = vunpack.c.h.b16 %v360
        %v1109 = vunpack.c.l.b16 %v361
        %v1110 = vunpack.c.h.b16 %v361
        %v1111 = vunpack.c.l.b16 %v362
        %v1112 = vunpack.c.h.b16 %v362
        %v1113 = vunpack.c.l.b16 %v363
        %v1114 = vunpack.c.h.b16 %v363
        %v1115 = vunpack.c.l.b16 %v364
        %v1116 = vunpack.c.h.b16 %v364
        %v1117 = vunpack.c.l.b16 %v365
        %v1118 = vunpack.c.h.b16 %v365
        %v1119 = vunpack.c.l.b16 %v366
        %v1120 = vunpack.c.h.b16 %v366
        %v1121 = vunpack.c.l.b16 %v367
        %v1122 = vunpack.c.h.b16 %v367
        %v1123 = vunpack.c.l.b16 %v368
        %v1124 = vunpack.c.h.b16 %v368
        %v1125 = vunpack.c.l.b16 %v369
        %v1126 = vunpack.c.h.b16 %v369
        %v1127 = vunpack.c.l.b16 %v370
        %v1128 = vunpack.c.h.b16 %v370
        %v1129 = vunpack.c.l.b16 %v371
        %v1130 = vunpack.c.h.b16 %v371
        %v1131 = vunpack.c.l.b16 %v372
        %v1132 = vunpack.c.h.b16 %v372
        %v1133 = vunpack.c.l.b16 %v373
        %v1134 = vunpack.c.h.b16 %v373
        %v1135 = vunpack.c.l.b16 %v374
        %v1136 = vunpack.c.h.b16 %v374
        %v1137 = vunpack.c.l.b16 %v375
        %v1138 = vunpack.c.h.b16 %v375
        %v1139 = vunpack.c.l.b16 %v376
        %v1140 = vunpack.c.h.b16 %v376
        %v1141 = vunpack.c.l.b16 %v377
        %v1142 = vunpack.c.h.b16 %v377
        %v1143 = vunpack.c.l.b16 %v378
        %v1144 = vunpack.c.h.b16 %v378
        %v1145 = vunpack.c.l.b16 %v379
        %v1146 = vunpack.c.h.b16 %v379
        %v1147 = vunpack.c.l.b16 %v380
        %v1148 = vunpack.c.h.b16 %v380
        %v1149 = vunpack.c.l.b16 %v381
        %v1150 = vunpack.c.h.b16 %v381
        %v1151 = vunpack.c.l.b16 %v382
        %v1152 = vunpack.c.h.b16 %v382
        %v1153 = vunpack.c.l.b16 %v383
        %v1154 = vunpack.c.h.b16 %v383
        %v1155 = vunpack.c.l.b16 %v384
        %v1156 = vunpack.c.h.b16 %v384
        %v1157 = vunpack.c.l.b16 %v385
        %v1158 = vunpack.c.h.b16 %v385
        %v1159 = vunpack.c.l.b16 %v386
        %v1160 = vunpack.c.h.b16 %v386
        %v1161 = vunpack.c.l.b16 %v387
        %v1162 = vunpack.c.h.b16 %v387
        %v1163 = vunpack.c.l.b16 %v388
        %v1164 = vunpack.c.h.b16 %v388
        %v1165 = vunpack.c.l.b16 %v389
        %v1166 = vunpack.c.h.b16 %v389
        %v1167 = vunpack.c.l.b16 %v390
        %v1168 = vunpack.c.h.b16 %v390
        %v1169 = vunpack.c.l.b16 %v391
        %v1170 = vunpack.c.h.b16 %v391
        %v1171 = vunpack.c.l.b16 %v392
        %v1172 = vunpack.c.h.b16 %v392
        %v1173 = vunpack.c.l.b16 %v393
        %v1174 = vunpack.c.h.b16 %v393
        %v1175 = vunpack.c.l.b16 %v394
        %v1176 = vunpack.c.h.b16 %v394
        %v1177 = vunpack.c.l.b16 %v395
        %v1178 = vunpack.c.h.b16 %v395
        %v1179 = vunpack.c.l.b16 %v396
        %v1180 = vunpack.c.h.b16 %v396
        %v1181 = vunpack.c.l.b16 %v397
        %v1182 = vunpack.c.h.b16 %v397
        %v1183 = vunpack.c.l.b16 %v398
        %v1184 = vunpack.c.h.b16 %v398
        %v1185 = vunpack.c.l.b16 %v399
        %v1186 = vunpack.c.h.b16 %v399
        %v1187 = vunpack.c.l.b16 %v400
        %v1188 = vunpack.c.h.b16 %v400
        %v1189 = vunpack.c.l.b16 %v401
        %v1190 = vunpack.c.h.b16 %v401
        %v1191 = vunpack.c.l.b16 %v402
        %v1192 = vunpack.c.h.b16 %v402
        %v1193 = vunpack.c.l.b16 %v403
        %v1194 = vunpack.c.h.b16 %v403
        %v1195 = vunpack.c.l.b16 %v404
        %v1196 = vunpack.c.h.b16 %v404
        %v1197 = vunpack.c.l.b16 %v405
        %v1198 = vunpack.c.h.b16 %v405
        %v1199 = vunpack.c.l.b16 %v406
        %v1200 = vunpack.c.h.b16 %v406
        %v1201 = vunpack.c.l.b16 %v407
        %v1202 = vunpack.c.h.b16 %v407
        %v1203 = vunpack.c.l.b16 %v408
        %v1204 = vunpack.c.h.b16 %v408
        %v1205 = vunpack.c.l.b16 %v409
        %v1206 = vunpack.c.h.b16 %v409
        %v1207 = vunpack.c.l.b16 %v410
        %v1208 = vunpack.c.h.b16 %v410
        %v1209 = vunpack.c.l.b16 %v411
        %v1210 = vunpack.c.h.b16 %v411
        %v1211 = vunpack.c.l.b16 %v412
        %v1212 = vunpack.c.h.b16 %v412
        %v1213 = vunpack.c.l.b16 %v413
        %v1214 = vunpack.c.h.b16 %v413
        %v1215 = vunpack.c.l.b16 %v414
        %v1216 = vunpack.c.h.b16 %v414
        %v1217 = vunpack.c.l.b16 %v415
        %v1218 = vunpack.c.h.b16 %v415
        %v1219 = vunpack.c.l.b16 %v416
        %v1220 = vunpack.c.h.b16 %v416
        %v1221 = vunpack.c.l.b16 %v417
        %v1222 = vunpack.c.h.b16 %v417
        %v1223 = vunpack.c.l.b16 %v418
        %v1224 = vunpack.c.h.b16 %v418
        %v1225 = vunpack.c.l.b16 %v419
        %v1226 = vunpack.c.h.b16 %v419
        %v1227 = vunpack.c.l.b16 %v420
        %v1228 = vunpack.c.h.b16 %v420
        %v1229 = vunpack.c.l.b16 %v421
        %v1230 = vunpack.c.h.b16 %v421
        %v1231 = vunpack.c.l.b16 %v422
        %v1232 = vunpack.c.h.b16 %v422
        %v1233 = vunpack.c.l.b16 %v423
        %v1234 = vunpack.c.h.b16 %v423
        %v1235 = vunpack.c.l.b16 %v424
        %v1236 = vunpack.c.h.b16 %v424
        %v1237 = vunpack.c.l.b16 %v425
        %v1238 = vunpack.c.h.b16 %v425
        %v1239 = vunpack.c.l.b16 %v426
        %v1240 = vunpack.c.h.b16 %v426
        %v1241 = vunpack.c.l.b16 %v427
        %v1242 = vunpack.c.h.b16 %v427
        %v1243 = vunpack.c.l.b16 %v428
        %v1244 = vunpack.c.h.b16 %v428
        %v1245 = vpack.c.b16 %v1137, %v1101
        %v1246 = vpack.c.b16 %v1138, %v1102
        %v1247 = vpack.c.b16 %v1139, %v1103
        %v1248 = vpack.c.b16 %v1140, %v1104
        %v1249 = vpack.c.b16 %v1141, %v1105
        %v1250 = vpack.c.b16 %v1142, %v1106
        %v1251 = vpack.c.b16 %v1143, %v1107
        %v1252 = vpack.c.b16 %v1144, %v1108
        %v1253 = vpack.c.b16 %v1145, %v1109
        %v1254 = vpack.c.b16 %v1146, %v1110
        %v1255 = vpack.c.b16 %v1147, %v1111
        %v1256 = vpack.c.b16 %v1148, %v1112
        %v1257 = vpack.c.b16 %v1149, %v1113
        %v1258 = vpack.c.b16 %v1150, %v1114
        %v1259 = vpack.c.b16 %v1151, %v1115
        %v1260 = vpack.c.b16 %v1152, %v1116
        %v1261 = vpack.c.b16 %v1153, %v1117
        %v1262 = vpack.c.b16 %v1154, %v1118
        %v1263 = vpack.c.b16 %v1155, %v1119
        %v1264 = vpack.c.b16 %v1156, %v1120
        %v1265 = vpack.c.b16 %v1157, %v1121
        %v1266 = vpack.c.b16 %v1158, %v1122
        %v1267 = vpack.c.b16 %v1159, %v1123
        %v1268 = vpack.c.b16 %v1160, %v1124
        %v1269 = vpack.c.b16 %v1161, %v1125
        %v1270 = vpack.c.b16 %v1162, %v1126
        %v1271 = vpack.c.b16 %v1163, %v1127
        %v1272 = vpack.c.b16 %v1164, %v1128
        %v1273 = vpack.c.b16 %v1165, %v1129
        %v1274 = vpack.c.b16 %v1166, %v1130
        %v1275 = vpack.c.b16 %v1167, %v1131
        %v1276 = vpack.c.b16 %v1168, %v1132
        %v1277 = vpack.c.b16 %v1169, %v1133
        %v1278 = vpack.c.b16 %v1170, %v1134
        %v1279 = vpack.c.b16 %v1171, %v1135
        %v1280 = vpack.c.b16 %v1172, %v1136
        %v1281 = vpack.c.b16 %v1209, %v1173
        %v1282 = vpack.c.b16 %v1210, %v1174
        %v1283 = vpack.c.b16 %v1211, %v1175
        %v1284 = vpack.c.b16 %v1212, %v1176
        %v1285 = vpack.c.b16 %v1213, %v1177
        %v1286 = vpack.c.b16 %v1214, %v1178
        %v1287 = vpack.c.b16 %v1215, %v1179
        %v1288 = vpack.c.b16 %v1216, %v1180
        %v1289 = vpack.c.b16 %v1217, %v1181
        %v1290 = vpack.c.b16 %v1218, %v1182
        %v1291 = vpack.c.b16 %v1219, %v1183
        %v1292 = vpack.c.b16 %v1220, %v1184
        %v1293 = vpack.c.b16 %v1221, %v1185
        %v1294 = vpack.c.b16 %v1222, %v1186
        %v1295 = vpack.c.b16 %v1223, %v1187
        %v1296 = vpack.c.b16 %v1224, %v1188
        %v1297 = vpack.c.b16 %v1225, %v1189
        %v1298 = vpack.c.b16 %v1226, %v1190
        %v1299 = vpack.c.b16 %v1227, %v1191
        %v1300 = vpack.c.b16 %v1228, %v1192
        %v1301 = vpack.c.b16 %v1229, %v1193
        %v1302 = vpack.c.b16 %v1230, %v1194
        %v1303 = vpack.c.b16 %v1231, %v1195
        %v1304 = vpack.c.b16 %v1232, %v1196
        %v1305 = vpack.c.b16 %v1233, %v1197
        %v1306 = vpack.c.b16 %v1234, %v1198
        %v1307 = vpack.c.b16 %v1235, %v1199
        %v1308 = vpack.c.b16 %v1236, %v1200
        %v1309 = vpack.c.b16 %v1237, %v1201
        %v1310 = vpack.c.b16 %v1238, %v1202
        %v1311 = vpack.c.b16 %v1239, %v1203
        %v1312 = vpack.c.b16 %v1240, %v1204
        %v1313 = vpack.c.b16 %v1241, %v1205
        %v1314 = vpack.c.b16 %v1242, %v1206
        %v1315 = vpack.c.b16 %v1243, %v1207
        %v1316 = vpack.c.b16 %v1244, %v1208
        %v1965 = vunpack.c.l.b16 %v429
        %v1966 = vunpack.c.h.b16 %v429
        %v1967 = vunpack.c.l.b16 %v430
        %v1968 = vunpack.c.h.b16 %v430
        %v1969 = vunpack.c.l.b16 %v431
        %v1970 = vunpack.c.h.b16 %v431
        %v1971 = vunpack.c.l.b16 %v432
        %v1972 = vunpack.c.h.b16 %v432
        %v1973 = vunpack.c.l.b16 %v433
        %v1974 = vunpack.c.h.b16 %v433
        %v1975 = vunpack.c.l.b16 %v434
        %v1976 = vunpack.c.h.b16 %v434
        %v1977 = vunpack.c.l.b16 %v435
        %v1978 = vunpack.c.h.b16 %v435
        %v1979 = vunpack.c.l.b16 %v436
        %v1980 = vunpack.c.h.b16 %v436
        %v1981 = vunpack.c.l.b16 %v437
        %v1982 = vunpack.c.h.b16 %v437
        %v1983 = vunpack.c.l.b16 %v438
        %v1984 = vunpack.c.h.b16 %v438
        %v1985 = vunpack.c.l.b16 %v439
        %v1986 = vunpack.c.h.b16 %v439
        %v1987 = vunpack.c.l.b16 %v440
        %v1988 = vunpack.c.h.b16 %v440
        %v1989 = vunpack.c.l.b16 %v441
        %v1990 = vunpack.c.h.b16 %v441
        %v1991 = vunpack.c.l.b16 %v442
        %v1992 = vunpack.c.h.b16 %v442
        %v1993 = vunpack.c.l.b16 %v443
        %v1994 = vunpack.c.h.b16 %v443
        %v1995 = vunpack.c.l.b16 %v444
        %v1996 = vunpack.c.h.b16 %v444
        %v1997 = vunpack.c.l.b16 %v445
        %v1998 = vunpack.c.h.b16 %v445
        %v1999 = vunpack.c.l.b16 %v446
        %v2000 = vunpack.c.h.b16 %v446
        %v2001 = vunpack.c.l.b16 %v447
        %v2002 = vunpack.c.h.b16 %v447
        %v2003 = vunpack.c.l.b16 %v448
        %v2004 = vunpack.c.h.b16 %v448
        %v2005 = vunpack.c.l.b16 %v449
        %v2006 = vunpack.c.h.b16 %v449
        %v2007 = vunpack.c.l.b16 %v450
        %v2008 = vunpack.c.h.b16 %v450
        %v2009 = vunpack.c.l.b16 %v451
        %v2010 = vunpack.c.h.b16 %v451
        %v2011 = vunpack.c.l.b16 %v452
        %v2012 = vunpack.c.h.b16 %v452
        %v2013 = vunpack.c.l.b16 %v453
        %v2014 = vunpack.c.h.b16 %v453
        %v2015 = vunpack.c.l.b16 %v454
        %v2016 = vunpack.c.h.b16 %v454
        %v2017 = vunpack.c.l.b16 %v455
        %v2018 = vunpack.c.h.b16 %v455
        %v2019 = vunpack.c.l.b16 %v456
        %v2020 = vunpack.c.h.b16 %v456
        %v2021 = vunpack.c.l.b16 %v457
        %v2022 = vunpack.c.h.b16 %v457
        %v2023 = vunpack.c.l.b16 %v458
        %v2024 = vunpack.c.h.b16 %v458
        %v2025 = vunpack.c.l.b16 %v459
        %v2026 = vunpack.c.h.b16 %v459
        %v2027 = vunpack.c.l.b16 %v460
        %v2028 = vunpack.c.h.b16 %v460
        %v2029 = vunpack.c.l.b16 %v461
        %v2030 = vunpack.c.h.b16 %v461
        %v2031 = vunpack.c.l.b16 %v462
        %v2032 = vunpack.c.h.b16 %v462
        %v2033 = vunpack.c.l.b16 %v463
        %v2034 = vunpack.c.h.b16 %v463
        %v2035 = vunpack.c.l.b16 %v464
        %v2036 = vunpack.c.h.b16 %v464
        %v2037 = vunpack.c.l.b16 %v465
        %v2038 = vunpack.c.h.b16 %v465
        %v2039 = vunpack.c.l.b16 %v466
        %v2040 = vunpack.c.h.b16 %v466
        %v2041 = vunpack.c.l.b16 %v467
        %v2042 = vunpack.c.h.b16 %v467
        %v2043 = vunpack.c.l.b16 %v468
        %v2044 = vunpack.c.h.b16 %v468
        %v2045 = vunpack.c.l.b16 %v469
        %v2046 = vunpack.c.h.b16 %v469
        %v2047 = vunpack.c.l.b16 %v470
        %v2048 = vunpack.c.h.b16 %v470
        %v2049 = vunpack.c.l.b16 %v471
        %v2050 = vunpack.c.h.b16 %v471
        %v2051 = vunpack.c.l.b16 %v472
        %v2052 = vunpack.c.h.b16 %v472
        %v2053 = vunpack.c.l.b16 %v473
        %v2054 = vunpack.c.h.b16 %v473
        %v2055 = vunpack.c.l.b16 %v474
        %v2056 = vunpack.c.h.b16 %v474
        %v2057 = vunpack.c.l.b16 %v475
        %v2058 = vunpack.c.h.b16 %v475
        %v2059 = vunpack.c.l.b16 %v476
        %v2060 = vunpack.c.h.b16 %v476
        %v2061 = vunpack.c.l.b16 %v477
        %v2062 = vunpack.c.h.b16 %v477
        %v2063 = vunpack.c.l.b16 %v478
        %v2064 = vunpack.c.h.b16 %v478
        %v2065 = vunpack.c.l.b16 %v479
        %v2066 = vunpack.c.h.b16 %v479
        %v2067 = vunpack.c.l.b16 %v480
        %v2068 = vunpack.c.h.b16 %v480
        %v2069 = vunpack.c.l.b16 %v481
        %v2070 = vunpack.c.h.b16 %v481
        %v2071 = vunpack.c.l.b16 %v482
        %v2072 = vunpack.c.h.b16 %v482
        %v2073 = vunpack.c.l.b16 %v483
        %v2074 = vunpack.c.h.b16 %v483
        %v2075 = vunpack.c.l.b16 %v484
        %v2076 = vunpack.c.h.b16 %v484
        %v2077 = vunpack.c.l.b16 %v485
        %v2078 = vunpack.c.h.b16 %v485
        %v2079 = vunpack.c.l.b16 %v486
        %v2080 = vunpack.c.h.b16 %v486
        %v2081 = vunpack.c.l.b16 %v487
        %v2082 = vunpack.c.h.b16 %v487
        %v2083 = vunpack.c.l.b16 %v488
        %v2084 = vunpack.c.h.b16 %v488
        %v2085 = vunpack.c.l.b16 %v489
        %v2086 = vunpack.c.h.b16 %v489
        %v2087 = vunpack.c.l.b16 %v490
        %v2088 = vunpack.c.h.b16 %v490
        %v2089 = vunpack.c.l.b16 %v491
        %v2090 = vunpack.c.h.b16 %v491
        %v2091 = vunpack.c.l.b16 %v492
        %v2092 = vunpack.c.h.b16 %v492
        %v2093 = vunpack.c.l.b16 %v493
        %v2094 = vunpack.c.h.b16 %v493
        %v2095 = vunpack.c.l.b16 %v494
        %v2096 = vunpack.c.h.b16 %v494
        %v2097 = vunpack.c.l.b16 %v495
        %v2098 = vunpack.c.h.b16 %v495
        %v2099 = vunpack.c.l.b16 %v496
        %v2100 = vunpack.c.h.b16 %v496
        %v2101 = vunpack.c.l.b16 %v497
        %v2102 = vunpack.c.h.b16 %v497
        %v2103 = vunpack.c.l.b16 %v498
        %v2104 = vunpack.c.h.b16 %v498
        %v2105 = vunpack.c.l.b16 %v499
        %v2106 = vunpack.c.h.b16 %v499
        %v2107 = vunpack.c.l.b16 %v500
        %v2108 = vunpack.c.h.b16 %v500
        %v2109 = vunpack.c.l.b16 %v501
        %v2110 = vunpack.c.h.b16 %v501
        %v2111 = vunpack.c.l.b16 %v502
        %v2112 = vunpack.c.h.b16 %v502
        %v2113 = vunpack.c.l.b16 %v503
        %v2114 = vunpack.c.h.b16 %v503
        %v2115 = vunpack.c.l.b16 %v504
        %v2116 = vunpack.c.h.b16 %v504
        %v2117 = vunpack.c.l.b16 %v505
        %v2118 = vunpack.c.h.b16 %v505
        %v2119 = vunpack.c.l.b16 %v506
        %v2120 = vunpack.c.h.b16 %v506
        %v2121 = vunpack.c.l.b16 %v507
        %v2122 = vunpack.c.h.b16 %v507
        %v2123 = vunpack.c.l.b16 %v508
        %v2124 = vunpack.c.h.b16 %v508
        %v2125 = vunpack.c.l.b16 %v509
        %v2126 = vunpack.c.h.b16 %v509
        %v2127 = vunpack.c.l.b16 %v510
        %v2128 = vunpack.c.h.b16 %v510
        %v2129 = vunpack.c.l.b16 %v511
        %v2130 = vunpack.c.h.b16 %v511
        %v2131 = vunpack.c.l.b16 %v512
        %v2132 = vunpack.c.h.b16 %v512
        %v2133 = vunpack.c.l.b16 %v513
        %v2134 = vunpack.c.h.b16 %v513
        %v2135 = vunpack.c.l.b16 %v514
        %v2136 = vunpack.c.h.b16 %v514
        %v2137 = vunpack.c.l.b16 %v515
        %v2138 = vunpack.c.h.b16 %v515
        %v2139 = vunpack.c.l.b16 %v516
        %v2140 = vunpack.c.h.b16 %v516
        %v2141 = vunpack.c.l.b16 %v517
        %v2142 = vunpack.c.h.b16 %v517
        %v2143 = vunpack.c.l.b16 %v518
        %v2144 = vunpack.c.h.b16 %v518
        %v2145 = vunpack.c.l.b16 %v519
        %v2146 = vunpack.c.h.b16 %v519
        %v2147 = vunpack.c.l.b16 %v520
        %v2148 = vunpack.c.h.b16 %v520
        %v2149 = vunpack.c.l.b16 %v521
        %v2150 = vunpack.c.h.b16 %v521
        %v2151 = vunpack.c.l.b16 %v522
        %v2152 = vunpack.c.h.b16 %v522
        %v2153 = vunpack.c.l.b16 %v523
        %v2154 = vunpack.c.h.b16 %v523
        %v2155 = vunpack.c.l.b16 %v524
        %v2156 = vunpack.c.h.b16 %v524
        %v2157 = vunpack.c.l.b16 %v525
        %v2158 = vunpack.c.h.b16 %v525
        %v2159 = vunpack.c.l.b16 %v526
        %v2160 = vunpack.c.h.b16 %v526
        %v2161 = vunpack.c.l.b16 %v527
        %v2162 = vunpack.c.h.b16 %v527
        %v2163 = vunpack.c.l.b16 %v528
        %v2164 = vunpack.c.h.b16 %v528
        %v2165 = vunpack.c.l.b16 %v529
        %v2166 = vunpack.c.h.b16 %v529
        %v2167 = vunpack.c.l.b16 %v530
        %v2168 = vunpack.c.h.b16 %v530
        %v2169 = vunpack.c.l.b16 %v531
        %v2170 = vunpack.c.h.b16 %v531
        %v2171 = vunpack.c.l.b16 %v532
        %v2172 = vunpack.c.h.b16 %v532
        %v2173 = vunpack.c.l.b16 %v533
        %v2174 = vunpack.c.h.b16 %v533
        %v2175 = vunpack.c.l.b16 %v534
        %v2176 = vunpack.c.h.b16 %v534
        %v2177 = vunpack.c.l.b16 %v535
        %v2178 = vunpack.c.h.b16 %v535
        %v2179 = vunpack.c.l.b16 %v536
        %v2180 = vunpack.c.h.b16 %v536
        %v2181 = vunpack.c.l.b16 %v537
        %v2182 = vunpack.c.h.b16 %v537
        %v2183 = vunpack.c.l.b16 %v538
        %v2184 = vunpack.c.h.b16 %v538
        %v2185 = vunpack.c.l.b16 %v539
        %v2186 = vunpack.c.h.b16 %v539
        %v2187 = vunpack.c.l.b16 %v540
        %v2188 = vunpack.c.h.b16 %v540
        %v2189 = vunpack.c.l.b16 %v541
        %v2190 = vunpack.c.h.b16 %v541
        %v2191 = vunpack.c.l.b16 %v542
        %v2192 = vunpack.c.h.b16 %v542
        %v2193 = vunpack.c.l.b16 %v543
        %v2194 = vunpack.c.h.b16 %v543
        %v2195 = vunpack.c.l.b16 %v544
        %v2196 = vunpack.c.h.b16 %v544
        %v2197 = vunpack.c.l.b16 %v545
        %v2198 = vunpack.c.h.b16 %v545
        %v2199 = vunpack.c.l.b16 %v546
        %v2200 = vunpack.c.h.b16 %v546
        %v2201 = vunpack.c.l.b16 %v547
        %v2202 = vunpack.c.h.b16 %v547
        %v2203 = vunpack.c.l.b16 %v548
        %v2204 = vunpack.c.h.b16 %v548
        %v2205 = vunpack.c.l.b16 %v549
        %v2206 = vunpack.c.h.b16 %v549
        %v2207 = vunpack.c.l.b16 %v550
        %v2208 = vunpack.c.h.b16 %v550
        %v2209 = vunpack.c.l.b16 %v551
        %v2210 = vunpack.c.h.b16 %v551
        %v2211 = vunpack.c.l.b16 %v552
        %v2212 = vunpack.c.h.b16 %v552
        %v2213 = vunpack.c.l.b16 %v553
        %v2214 = vunpack.c.h.b16 %v553
        %v2215 = vunpack.c.l.b16 %v554
        %v2216 = vunpack.c.h.b16 %v554
        %v2217 = vunpack.c.l.b16 %v555
        %v2218 = vunpack.c.h.b16 %v555
        %v2219 = vunpack.c.l.b16 %v556
        %v2220 = vunpack.c.h.b16 %v556
        %v2221 = vunpack.c.l.b16 %v557
        %v2222 = vunpack.c.h.b16 %v557
        %v2223 = vunpack.c.l.b16 %v558
        %v2224 = vunpack.c.h.b16 %v558
        %v2225 = vunpack.c.l.b16 %v559
        %v2226 = vunpack.c.h.b16 %v559
        %v2227 = vunpack.c.l.b16 %v560
        %v2228 = vunpack.c.h.b16 %v560
        %v2229 = vunpack.c.l.b16 %v561
        %v2230 = vunpack.c.h.b16 %v561
        %v2231 = vunpack.c.l.b16 %v562
        %v2232 = vunpack.c.h.b16 %v562
        %v2233 = vunpack.c.l.b16 %v563
        %v2234 = vunpack.c.h.b16 %v563
        %v2235 = vunpack.c.l.b16 %v564
        %v2236 = vunpack.c.h.b16 %v564
        %v2237 = vunpack.c.l.b16 %v565
        %v2238 = vunpack.c.h.b16 %v565
        %v2239 = vunpack.c.l.b16 %v566
        %v2240 = vunpack.c.h.b16 %v566
        %v2241 = vunpack.c.l.b16 %v567
        %v2242 = vunpack.c.h.b16 %v567
        %v2243 = vunpack.c.l.b16 %v568
        %v2244 = vunpack.c.h.b16 %v568
        %v2245 = vunpack.c.l.b16 %v569
        %v2246 = vunpack.c.h.b16 %v569
        %v2247 = vunpack.c.l.b16 %v570
        %v2248 = vunpack.c.h.b16 %v570
        %v2249 = vunpack.c.l.b16 %v571
        %v2250 = vunpack.c.h.b16 %v571
        %v2251 = vunpack.c.l.b16 %v572
        %v2252 = vunpack.c.h.b16 %v572
        %v2253 = vunpack.c.l.b16 %v573
        %v2254 = vunpack.c.h.b16 %v573
        %v2255 = vunpack.c.l.b16 %v574
        %v2256 = vunpack.c.h.b16 %v574
        %v2257 = vunpack.c.l.b16 %v575
        %v2258 = vunpack.c.h.b16 %v575
        %v2259 = vunpack.c.l.b16 %v576
        %v2260 = vunpack.c.h.b16 %v576
        %v2261 = vunpack.c.l.b16 %v577
        %v2262 = vunpack.c.h.b16 %v577
        %v2263 = vunpack.c.l.b16 %v578
        %v2264 = vunpack.c.h.b16 %v578
        %v2265 = vunpack.c.l.b16 %v579
        %v2266 = vunpack.c.h.b16 %v579
        %v2267 = vunpack.c.l.b16 %v580
        %v2268 = vunpack.c.h.b16 %v580
        %v2269 = vunpack.c.l.b16 %v581
        %v2270 = vunpack.c.h.b16 %v581
        %v2271 = vunpack.c.l.b16 %v582
        %v2272 = vunpack.c.h.b16 %v582
        %v2273 = vunpack.c.l.b16 %v583
        %v2274 = vunpack.c.h.b16 %v583
        %v2275 = vunpack.c.l.b16 %v584
        %v2276 = vunpack.c.h.b16 %v584
        %v2277 = vunpack.c.l.b16 %v585
        %v2278 = vunpack.c.h.b16 %v585
        %v2279 = vunpack.c.l.b16 %v586
        %v2280 = vunpack.c.h.b16 %v586
        %v2281 = vunpack.c.l.b16 %v587
        %v2282 = vunpack.c.h.b16 %v587
        %v2283 = vunpack.c.l.b16 %v588
        %v2284 = vunpack.c.h.b16 %v588
        %v2285 = vunpack.c.l.b16 %v589
        %v2286 = vunpack.c.h.b16 %v589
        %v2287 = vunpack.c.l.b16 %v590
        %v2288 = vunpack.c.h.b16 %v590
        %v2289 = vunpack.c.l.b16 %v591
        %v2290 = vunpack.c.h.b16 %v591
        %v2291 = vunpack.c.l.b16 %v592
        %v2292 = vunpack.c.h.b16 %v592
        %v2293 = vunpack.c.l.b16 %v593
        %v2294 = vunpack.c.h.b16 %v593
        %v2295 = vunpack.c.l.b16 %v594
        %v2296 = vunpack.c.h.b16 %v594
        %v2297 = vunpack.c.l.b16 %v595
        %v2298 = vunpack.c.h.b16 %v595
        %v2299 = vunpack.c.l.b16 %v596
        %v2300 = vunpack.c.h.b16 %v596
        %v2301 = vunpack.c.l.b16 %v597
        %v2302 = vunpack.c.h.b16 %v597
        %v2303 = vunpack.c.l.b16 %v598
        %v2304 = vunpack.c.h.b16 %v598
        %v2305 = vunpack.c.l.b16 %v599
        %v2306 = vunpack.c.h.b16 %v599
        %v2307 = vunpack.c.l.b16 %v600
        %v2308 = vunpack.c.h.b16 %v600
        %v2309 = vunpack.c.l.b16 %v601
        %v2310 = vunpack.c.h.b16 %v601
        %v2311 = vunpack.c.l.b16 %v602
        %v2312 = vunpack.c.h.b16 %v602
        %v2313 = vunpack.c.l.b16 %v603
        %v2314 = vunpack.c.h.b16 %v603
        %v2315 = vunpack.c.l.b16 %v604
        %v2316 = vunpack.c.h.b16 %v604
        %v2317 = vunpack.c.l.b16 %v605
        %v2318 = vunpack.c.h.b16 %v605
        %v2319 = vunpack.c.l.b16 %v606
        %v2320 = vunpack.c.h.b16 %v606
        %v2321 = vunpack.c.l.b16 %v607
        %v2322 = vunpack.c.h.b16 %v607
        %v2323 = vunpack.c.l.b16 %v608
        %v2324 = vunpack.c.h.b16 %v608
        %v2325 = vunpack.c.l.b16 %v609
        %v2326 = vunpack.c.h.b16 %v609
        %v2327 = vunpack.c.l.b16 %v610
        %v2328 = vunpack.c.h.b16 %v610
        %v2329 = vunpack.c.l.b16 %v611
        %v2330 = vunpack.c.h.b16 %v611
        %v2331 = vunpack.c.l.b16 %v612
        %v2332 = vunpack.c.h.b16 %v612
        %v2333 = vunpack.c.l.b16 %v613
        %v2334 = vunpack.c.h.b16 %v613
        %v2335 = vunpack.c.l.b16 %v614
        %v2336 = vunpack.c.h.b16 %v614
        %v2337 = vunpack.c.l.b16 %v615
        %v2338 = vunpack.c.h.b16 %v615
        %v2339 = vunpack.c.l.b16 %v616
        %v2340 = vunpack.c.h.b16 %v616
        %v2341 = vunpack.c.l.b16 %v617
        %v2342 = vunpack.c.h.b16 %v617
        %v2343 = vunpack.c.l.b16 %v618
        %v2344 = vunpack.c.h.b16 %v618
        %v2345 = vunpack.c.l.b16 %v619
        %v2346 = vunpack.c.h.b16 %v619
        %v2347 = vunpack.c.l.b16 %v620
        %v2348 = vunpack.c.h.b16 %v620
        %v2349 = vunpack.c.l.b16 %v621
        %v2350 = vunpack.c.h.b16 %v621
        %v2351 = vunpack.c.l.b16 %v622
        %v2352 = vunpack.c.h.b16 %v622
        %v2353 = vunpack.c.l.b16 %v623
        %v2354 = vunpack.c.h.b16 %v623
        %v2355 = vunpack.c.l.b16 %v624
        %v2356 = vunpack.c.h.b16 %v624
        %v2357 = vunpack.c.l.b16 %v625
        %v2358 = vunpack.c.h.b16 %v625
        %v2359 = vunpack.c.l.b16 %v626
        %v2360 = vunpack.c.h.b16 %v626
        %v2361 = vunpack.c.l.b16 %v627
        %v2362 = vunpack.c.h.b16 %v627
        %v2363 = vunpack.c.l.b16 %v628
        %v2364 = vunpack.c.h.b16 %v628
        %v2365 = vunpack.c.l.b16 %v629
        %v2366 = vunpack.c.h.b16 %v629
        %v2367 = vunpack.c.l.b16 %v630
        %v2368 = vunpack.c.h.b16 %v630
        %v2369 = vunpack.c.l.b16 %v631
        %v2370 = vunpack.c.h.b16 %v631
        %v2371 = vunpack.c.l.b16 %v632
        %v2372 = vunpack.c.h.b16 %v632
        %v2373 = vunpack.c.l.b16 %v633
        %v2374 = vunpack.c.h.b16 %v633
        %v2375 = vunpack.c.l.b16 %v634
        %v2376 = vunpack.c.h.b16 %v634
        %v2377 = vunpack.c.l.b16 %v635
        %v2378 = vunpack.c.h.b16 %v635
        %v2379 = vunpack.c.l.b16 %v636
        %v2380 = vunpack.c.h.b16 %v636
        %v2381 = vunpack.c.l.b16 %v637
        %v2382 = vunpack.c.h.b16 %v637
        %v2383 = vunpack.c.l.b16 %v638
        %v2384 = vunpack.c.h.b16 %v638
        %v2385 = vunpack.c.l.b16 %v639
        %v2386 = vunpack.c.h.b16 %v639
        %v2387 = vunpack.c.l.b16 %v640
        %v2388 = vunpack.c.h.b16 %v640
        %v2389 = vunpack.c.l.b16 %v641
        %v2390 = vunpack.c.h.b16 %v641
        %v2391 = vunpack.c.l.b16 %v642
        %v2392 = vunpack.c.h.b16 %v642
        %v2393 = vunpack.c.l.b16 %v643
        %v2394 = vunpack.c.h.b16 %v643
        %v2395 = vunpack.c.l.b16 %v644
        %v2396 = vunpack.c.h.b16 %v644
        %v2397 = vunpack.c.l.b16 %v645
        %v2398 = vunpack.c.h.b16 %v645
        %v2399 = vunpack.c.l.b16 %v646
        %v2400 = vunpack.c.h.b16 %v646
        %v2401 = vunpack.c.l.b16 %v647
        %v2402 = vunpack.c.h.b16 %v647
        %v2403 = vunpack.c.l.b16 %v648
        %v2404 = vunpack.c.h.b16 %v648
        %v2405 = vunpack.c.l.b16 %v649
        %v2406 = vunpack.c.h.b16 %v649
        %v2407 = vunpack.c.l.b16 %v650
        %v2408 = vunpack.c.h.b16 %v650
        %v2409 = vunpack.c.l.b16 %v651
        %v2410 = vunpack.c.h.b16 %v651
        %v2411 = vunpack.c.l.b16 %v652
        %v2412 = vunpack.c.h.b16 %v652
        %v2413 = vunpack.c.l.b16 %v653
        %v2414 = vunpack.c.h.b16 %v653
        %v2415 = vunpack.c.l.b16 %v654
        %v2416 = vunpack.c.h.b16 %v654
        %v2417 = vunpack.c.l.b16 %v655
        %v2418 = vunpack.c.h.b16 %v655
        %v2419 = vunpack.c.l.b16 %v656
        %v2420 = vunpack.c.h.b16 %v656
        %v2421 = vunpack.c.l.b16 %v657
        %v2422 = vunpack.c.h.b16 %v657
        %v2423 = vunpack.c.l.b16 %v658
        %v2424 = vunpack.c.h.b16 %v658
        %v2425 = vunpack.c.l.b16 %v659
        %v2426 = vunpack.c.h.b16 %v659
        %v2427 = vunpack.c.l.b16 %v660
        %v2428 = vunpack.c.h.b16 %v660
        %v2429 = vunpack.c.l.b16 %v661
        %v2430 = vunpack.c.h.b16 %v661
        %v2431 = vunpack.c.l.b16 %v662
        %v2432 = vunpack.c.h.b16 %v662
        %v2433 = vunpack.c.l.b16 %v663
        %v2434 = vunpack.c.h.b16 %v663
        %v2435 = vunpack.c.l.b16 %v664
        %v2436 = vunpack.c.h.b16 %v664
        %v2437 = vunpack.c.l.b16 %v665
        %v2438 = vunpack.c.h.b16 %v665
        %v2439 = vunpack.c.l.b16 %v666
        %v2440 = vunpack.c.h.b16 %v666
        %v2441 = vunpack.c.l.b16 %v667
        %v2442 = vunpack.c.h.b16 %v667
        %v2443 = vunpack.c.l.b16 %v668
        %v2444 = vunpack.c.h.b16 %v668
        %v2445 = vunpack.c.l.b16 %v669
        %v2446 = vunpack.c.h.b16 %v669
        %v2447 = vunpack.c.l.b16 %v670
        %v2448 = vunpack.c.h.b16 %v670
        %v2449 = vunpack.c.l.b16 %v671
        %v2450 = vunpack.c.h.b16 %v671
        %v2451 = vunpack.c.l.b16 %v672
        %v2452 = vunpack.c.h.b16 %v672
        %v2453 = vunpack.c.l.b16 %v673
        %v2454 = vunpack.c.h.b16 %v673
        %v2455 = vunpack.c.l.b16 %v674
        %v2456 = vunpack.c.h.b16 %v674
        %v2457 = vunpack.c.l.b16 %v675
        %v2458 = vunpack.c.h.b16 %v675
        %v2459 = vunpack.c.l.b16 %v676
        %v2460 = vunpack.c.h.b16 %v676
        %v2461 = vunpack.c.l.b16 %v677
        %v2462 = vunpack.c.h.b16 %v677
        %v2463 = vunpack.c.l.b16 %v678
        %v2464 = vunpack.c.h.b16 %v678
        %v2465 = vunpack.c.l.b16 %v679
        %v2466 = vunpack.c.h.b16 %v679
        %v2467 = vunpack.c.l.b16 %v680
        %v2468 = vunpack.c.h.b16 %v680
        %v2469 = vunpack.c.l.b16 %v681
        %v2470 = vunpack.c.h.b16 %v681
        %v2471 = vunpack.c.l.b16 %v682
        %v2472 = vunpack.c.h.b16 %v682
        %v2473 = vunpack.c.l.b16 %v683
        %v2474 = vunpack.c.h.b16 %v683
        %v2475 = vunpack.c.l.b16 %v684
        %v2476 = vunpack.c.h.b16 %v684
        %v2477 = vunpack.c.l.b16 %v685
        %v2478 = vunpack.c.h.b16 %v685
        %v2479 = vunpack.c.l.b16 %v686
        %v2480 = vunpack.c.h.b16 %v686
        %v2481 = vunpack.c.l.b16 %v687
        %v2482 = vunpack.c.h.b16 %v687
        %v2483 = vunpack.c.l.b16 %v688
        %v2484 = vunpack.c.h.b16 %v688
        %v2485 = vunpack.c.l.b16 %v689
        %v2486 = vunpack.c.h.b16 %v689
        %v2487 = vunpack.c.l.b16 %v690
        %v2488 = vunpack.c.h.b16 %v690
        %v2489 = vunpack.c.l.b16 %v691
        %v2490 = vunpack.c.h.b16 %v691
        %v2491 = vunpack.c.l.b16 %v692
        %v2492 = vunpack.c.h.b16 %v692
        %v2493 = vunpack.c.l.b16 %v693
        %v2494 = vunpack.c.h.b16 %v693
        %v2495 = vunpack.c.l.b16 %v694
        %v2496 = vunpack.c.h.b16 %v694
        %v2497 = vunpack.c.l.b16 %v695
        %v2498 = vunpack.c.h.b16 %v695
        %v2499 = vunpack.c.l.b16 %v696
        %v2500 = vunpack.c.h.b16 %v696
        %v2501 = vunpack.c.l.b16 %v697
        %v2502 = vunpack.c.h.b16 %v697
        %v2503 = vunpack.c.l.b16 %v698
        %v2504 = vunpack.c.h.b16 %v698
        %v2505 = vunpack.c.l.b16 %v699
        %v2506 = vunpack.c.h.b16 %v699
        %v2507 = vunpack.c.l.b16 %v700
        %v2508 = vunpack.c.h.b16 %v700
        %v2509 = vunpack.c.l.b16 %v701
        %v2510 = vunpack.c.h.b16 %v701
        %v2511 = vunpack.c.l.b16 %v702
        %v2512 = vunpack.c.h.b16 %v702
        %v2513 = vunpack.c.l.b16 %v703
        %v2514 = vunpack.c.h.b16 %v703
        %v2515 = vunpack.c.l.b16 %v704
        %v2516 = vunpack.c.h.b16 %v704
        %v2517 = vunpack.c.l.b16 %v705
        %v2518 = vunpack.c.h.b16 %v705
        %v2519 = vunpack.c.l.b16 %v706
        %v2520 = vunpack.c.h.b16 %v706
        %v2521 = vunpack.c.l.b16 %v707
        %v2522 = vunpack.c.h.b16 %v707
        %v2523 = vunpack.c.l.b16 %v708
        %v2524 = vunpack.c.h.b16 %v708
        %v2525 = vunpack.c.l.b16 %v709
        %v2526 = vunpack.c.h.b16 %v709
        %v2527 = vunpack.c.l.b16 %v710
        %v2528 = vunpack.c.h.b16 %v710
        %v2529 = vunpack.c.l.b16 %v711
        %v2530 = vunpack.c.h.b16 %v711
        %v2531 = vunpack.c.l.b16 %v712
        %v2532 = vunpack.c.h.b16 %v712
        %v2533 = vunpack.c.l.b16 %v713
        %v2534 = vunpack.c.h.b16 %v713
        %v2535 = vunpack.c.l.b16 %v714
        %v2536 = vunpack.c.h.b16 %v714
        %v2537 = vunpack.c.l.b16 %v715
        %v2538 = vunpack.c.h.b16 %v715
        %v2539 = vunpack.c.l.b16 %v716
        %v2540 = vunpack.c.h.b16 %v716
        %v2541 = vunpack.c.l.b16 %v717
        %v2542 = vunpack.c.h.b16 %v717
        %v2543 = vunpack.c.l.b16 %v718
        %v2544 = vunpack.c.h.b16 %v718
        %v2545 = vunpack.c.l.b16 %v719
        %v2546 = vunpack.c.h.b16 %v719
        %v2547 = vunpack.c.l.b16 %v720
        %v2548 = vunpack.c.h.b16 %v720
        %v2549 = vunpack.c.l.b16 %v721
        %v2550 = vunpack.c.h.b16 %v721
        %v2551 = vunpack.c.l.b16 %v722
        %v2552 = vunpack.c.h.b16 %v722
        %v2553 = vunpack.c.l.b16 %v723
        %v2554 = vunpack.c.h.b16 %v723
        %v2555 = vunpack.c.l.b16 %v724
        %v2556 = vunpack.c.h.b16 %v724
        %v2557 = vunpack.c.l.b16 %v725
        %v2558 = vunpack.c.h.b16 %v725
        %v2559 = vunpack.c.l.b16 %v726
        %v2560 = vunpack.c.h.b16 %v726
        %v2561 = vunpack.c.l.b16 %v727
        %v2562 = vunpack.c.h.b16 %v727
        %v2563 = vunpack.c.l.b16 %v728
        %v2564 = vunpack.c.h.b16 %v728
        %v2565 = vunpack.c.l.b16 %v729
        %v2566 = vunpack.c.h.b16 %v729
        %v2567 = vunpack.c.l.b16 %v730
        %v2568 = vunpack.c.h.b16 %v730
        %v2569 = vunpack.c.l.b16 %v731
        %v2570 = vunpack.c.h.b16 %v731
        %v2571 = vunpack.c.l.b16 %v732
        %v2572 = vunpack.c.h.b16 %v732
        %v2573 = vunpack.c.l.b16 %v733
        %v2574 = vunpack.c.h.b16 %v733
        %v2575 = vunpack.c.l.b16 %v734
        %v2576 = vunpack.c.h.b16 %v734
        %v2577 = vunpack.c.l.b16 %v735
        %v2578 = vunpack.c.h.b16 %v735
        %v2579 = vunpack.c.l.b16 %v736
        %v2580 = vunpack.c.h.b16 %v736
        %v2581 = vunpack.c.l.b16 %v737
        %v2582 = vunpack.c.h.b16 %v737
        %v2583 = vunpack.c.l.b16 %v738
        %v2584 = vunpack.c.h.b16 %v738
        %v2585 = vunpack.c.l.b16 %v739
        %v2586 = vunpack.c.h.b16 %v739
        %v2587 = vunpack.c.l.b16 %v740
        %v2588 = vunpack.c.h.b16 %v740
        %v2589 = vunpack.c.l.b16 %v741
        %v2590 = vunpack.c.h.b16 %v741
        %v2591 = vunpack.c.l.b16 %v742
        %v2592 = vunpack.c.h.b16 %v742
        %v2593 = vunpack.c.l.b16 %v743
        %v2594 = vunpack.c.h.b16 %v743
        %v2595 = vunpack.c.l.b16 %v744
        %v2596 = vunpack.c.h.b16 %v744
        %v2597 = vunpack.c.l.b16 %v745
        %v2598 = vunpack.c.h.b16 %v745
        %v2599 = vunpack.c.l.b16 %v746
        %v2600 = vunpack.c.h.b16 %v746
        %v2601 = vunpack.c.l.b16 %v747
        %v2602 = vunpack.c.h.b16 %v747
        %v2603 = vunpack.c.l.b16 %v748
        %v2604 = vunpack.c.h.b16 %v748
        %v2605 = vunpack.c.l.b16 %v749
        %v2606 = vunpack.c.h.b16 %v749
        %v2607 = vunpack.c.l.b16 %v750
        %v2608 = vunpack.c.h.b16 %v750
        %v2609 = vunpack.c.l.b16 %v751
        %v2610 = vunpack.c.h.b16 %v751
        %v2611 = vunpack.c.l.b16 %v752
        %v2612 = vunpack.c.h.b16 %v752
        %v2613 = vunpack.c.l.b16 %v753
        %v2614 = vunpack.c.h.b16 %v753
        %v2615 = vunpack.c.l.b16 %v754
        %v2616 = vunpack.c.h.b16 %v754
        %v2617 = vunpack.c.l.b16 %v755
        %v2618 = vunpack.c.h.b16 %v755
        %v2619 = vunpack.c.l.b16 %v756
        %v2620 = vunpack.c.h.b16 %v756
        %v2621 = vunpack.c.l.b16 %v757
        %v2622 = vunpack.c.h.b16 %v757
        %v2623 = vunpack.c.l.b16 %v758
        %v2624 = vunpack.c.h.b16 %v758
        %v2625 = vunpack.c.l.b16 %v759
        %v2626 = vunpack.c.h.b16 %v759
        %v2627 = vunpack.c.l.b16 %v760
        %v2628 = vunpack.c.h.b16 %v760
        %v2629 = vunpack.c.l.b16 %v761
        %v2630 = vunpack.c.h.b16 %v761
        %v2631 = vunpack.c.l.b16 %v762
        %v2632 = vunpack.c.h.b16 %v762
        %v2633 = vunpack.c.l.b16 %v763
        %v2634 = vunpack.c.h.b16 %v763
        %v2635 = vunpack.c.l.b16 %v764
        %v2636 = vunpack.c.h.b16 %v764
        %v2637 = vunpack.c.l.b16 %v765
        %v2638 = vunpack.c.h.b16 %v765
        %v2639 = vunpack.c.l.b16 %v766
        %v2640 = vunpack.c.h.b16 %v766
        %v2641 = vunpack.c.l.b16 %v767
        %v2642 = vunpack.c.h.b16 %v767
        %v2643 = vunpack.c.l.b16 %v768
        %v2644 = vunpack.c.h.b16 %v768
        %v2645 = vunpack.c.l.b16 %v769
        %v2646 = vunpack.c.h.b16 %v769
        %v2647 = vunpack.c.l.b16 %v770
        %v2648 = vunpack.c.h.b16 %v770
        %v2649 = vunpack.c.l.b16 %v771
        %v2650 = vunpack.c.h.b16 %v771
        %v2651 = vunpack.c.l.b16 %v772
        %v2652 = vunpack.c.h.b16 %v772
        %v2653 = vunpack.c.l.b16 %v773
        %v2654 = vunpack.c.h.b16 %v773
        %v2655 = vunpack.c.l.b16 %v774
        %v2656 = vunpack.c.h.b16 %v774
        %v2657 = vunpack.c.l.b16 %v775
        %v2658 = vunpack.c.h.b16 %v775
        %v2659 = vunpack.c.l.b16 %v776
        %v2660 = vunpack.c.h.b16 %v776
        %v2661 = vunpack.c.l.b16 %v777
        %v2662 = vunpack.c.h.b16 %v777
        %v2663 = vunpack.c.l.b16 %v778
        %v2664 = vunpack.c.h.b16 %v778
        %v2665 = vunpack.c.l.b16 %v779
        %v2666 = vunpack.c.h.b16 %v779
        %v2667 = vunpack.c.l.b16 %v780
        %v2668 = vunpack.c.h.b16 %v780
        %v2669 = vunpack.c.l.b16 %v781
        %v2670 = vunpack.c.h.b16 %v781
        %v2671 = vunpack.c.l.b16 %v782
        %v2672 = vunpack.c.h.b16 %v782
        %v2673 = vunpack.c.l.b16 %v783
        %v2674 = vunpack.c.h.b16 %v783
        %v2675 = vunpack.c.l.b16 %v784
        %v2676 = vunpack.c.h.b16 %v784
        %v2677 = vunpack.c.l.b16 %v785
        %v2678 = vunpack.c.h.b16 %v785
        %v2679 = vunpack.c.l.b16 %v786
        %v2680 = vunpack.c.h.b16 %v786
        %v2681 = vunpack.c.l.b16 %v787
        %v2682 = vunpack.c.h.b16 %v787
        %v2683 = vunpack.c.l.b16 %v788
        %v2684 = vunpack.c.h.b16 %v788
        %v2685 = vunpack.c.l.b16 %v789
        %v2686 = vunpack.c.h.b16 %v789
        %v2687 = vunpack.c.l.b16 %v790
        %v2688 = vunpack.c.h.b16 %v790
        %v2689 = vunpack.c.l.b16 %v791
        %v2690 = vunpack.c.h.b16 %v791
        %v2691 = vunpack.c.l.b16 %v792
        %v2692 = vunpack.c.h.b16 %v792
        %v2693 = vunpack.c.l.b16 %v793
        %v2694 = vunpack.c.h.b16 %v793
        %v2695 = vunpack.c.l.b16 %v794
        %v2696 = vunpack.c.h.b16 %v794
        %v2697 = vunpack.c.l.b16 %v795
        %v2698 = vunpack.c.h.b16 %v795
        %v2699 = vunpack.c.l.b16 %v796
        %v2700 = vunpack.c.h.b16 %v796
        %v2701 = vunpack.c.l.b16 %v797
        %v2702 = vunpack.c.h.b16 %v797
        %v2703 = vunpack.c.l.b16 %v798
        %v2704 = vunpack.c.h.b16 %v798
        %v2705 = vunpack.c.l.b16 %v799
        %v2706 = vunpack.c.h.b16 %v799
        %v2707 = vunpack.c.l.b16 %v800
        %v2708 = vunpack.c.h.b16 %v800
        %v2709 = vunpack.c.l.b16 %v801
        %v2710 = vunpack.c.h.b16 %v801
        %v2711 = vunpack.c.l.b16 %v802
        %v2712 = vunpack.c.h.b16 %v802
        %v2713 = vunpack.c.l.b16 %v803
        %v2714 = vunpack.c.h.b16 %v803
        %v2715 = vunpack.c.l.b16 %v804
        %v2716 = vunpack.c.h.b16 %v804
        %v2717 = vunpack.c.l.b16 %v805
        %v2718 = vunpack.c.h.b16 %v805
        %v2719 = vunpack.c.l.b16 %v806
        %v2720 = vunpack.c.h.b16 %v806
        %v2721 = vunpack.c.l.b16 %v807
        %v2722 = vunpack.c.h.b16 %v807
        %v2723 = vunpack.c.l.b16 %v808
        %v2724 = vunpack.c.h.b16 %v808
        %v2725 = vunpack.c.l.b16 %v809
        %v2726 = vunpack.c.h.b16 %v809
        %v2727 = vunpack.c.l.b16 %v810
        %v2728 = vunpack.c.h.b16 %v810
        %v2729 = vunpack.c.l.b16 %v811
        %v2730 = vunpack.c.h.b16 %v811
        %v2731 = vunpack.c.l.b16 %v812
        %v2732 = vunpack.c.h.b16 %v812
        %v2733 = vunpack.c.l.b16 %v813
        %v2734 = vunpack.c.h.b16 %v813
        %v2735 = vunpack.c.l.b16 %v814
        %v2736 = vunpack.c.h.b16 %v814
        %v2737 = vunpack.c.l.b16 %v815
        %v2738 = vunpack.c.h.b16 %v815
        %v2739 = vunpack.c.l.b16 %v816
        %v2740 = vunpack.c.h.b16 %v816
        %v2741 = vunpack.c.l.b16 %v817
        %v2742 = vunpack.c.h.b16 %v817
        %v2743 = vunpack.c.l.b16 %v818
        %v2744 = vunpack.c.h.b16 %v818
        %v2745 = vunpack.c.l.b16 %v819
        %v2746 = vunpack.c.h.b16 %v819
        %v2747 = vunpack.c.l.b16 %v820
        %v2748 = vunpack.c.h.b16 %v820
        %v2749 = vunpack.c.l.b16 %v821
        %v2750 = vunpack.c.h.b16 %v821
        %v2751 = vunpack.c.l.b16 %v822
        %v2752 = vunpack.c.h.b16 %v822
        %v2753 = vunpack.c.l.b16 %v823
        %v2754 = vunpack.c.h.b16 %v823
        %v2755 = vunpack.c.l.b16 %v824
        %v2756 = vunpack.c.h.b16 %v824
        %v2757 = vunpack.c.l.b16 %v825
        %v2758 = vunpack.c.h.b16 %v825
        %v2759 = vunpack.c.l.b16 %v826
        %v2760 = vunpack.c.h.b16 %v826
        %v2761 = vunpack.c.l.b16 %v827
        %v2762 = vunpack.c.h.b16 %v827
        %v2763 = vunpack.c.l.b16 %v828
        %v2764 = vunpack.c.h.b16 %v828
        %v2765 = vunpack.c.l.b16 %v829
        %v2766 = vunpack.c.h.b16 %v829
        %v2767 = vunpack.c.l.b16 %v830
        %v2768 = vunpack.c.h.b16 %v830
        %v2769 = vunpack.c.l.b16 %v831
        %v2770 = vunpack.c.h.b16 %v831
        %v2771 = vunpack.c.l.b16 %v832
        %v2772 = vunpack.c.h.b16 %v832
        %v2773 = vunpack.c.l.b16 %v833
        %v2774 = vunpack.c.h.b16 %v833
        %v2775 = vunpack.c.l.b16 %v834
        %v2776 = vunpack.c.h.b16 %v834
        %v2777 = vunpack.c.l.b16 %v835
        %v2778 = vunpack.c.h.b16 %v835
        %v2779 = vunpack.c.l.b16 %v836
        %v2780 = vunpack.c.h.b16 %v836
        %v2781 = vunpack.c.l.b16 %v837
        %v2782 = vunpack.c.h.b16 %v837
        %v2783 = vunpack.c.l.b16 %v838
        %v2784 = vunpack.c.h.b16 %v838
        %v2785 = vunpack.c.l.b16 %v839
        %v2786 = vunpack.c.h.b16 %v839
        %v2787 = vunpack.c.l.b16 %v840
        %v2788 = vunpack.c.h.b16 %v840
        %v2789 = vunpack.c.l.b16 %v841
        %v2790 = vunpack.c.h.b16 %v841
        %v2791 = vunpack.c.l.b16 %v842
        %v2792 = vunpack.c.h.b16 %v842
        %v2793 = vunpack.c.l.b16 %v843
        %v2794 = vunpack.c.h.b16 %v843
        %v2795 = vunpack.c.l.b16 %v844
        %v2796 = vunpack.c.h.b16 %v844
        %v2797 = vunpack.c.l.b16 %v845
        %v2798 = vunpack.c.h.b16 %v845
        %v2799 = vunpack.c.l.b16 %v846
        %v2800 = vunpack.c.h.b16 %v846
        %v2801 = vunpack.c.l.b16 %v847
        %v2802 = vunpack.c.h.b16 %v847
        %v2803 = vunpack.c.l.b16 %v848
        %v2804 = vunpack.c.h.b16 %v848
        %v2805 = vunpack.c.l.b16 %v849
        %v2806 = vunpack.c.h.b16 %v849
        %v2807 = vunpack.c.l.b16 %v850
        %v2808 = vunpack.c.h.b16 %v850
        %v2809 = vunpack.c.l.b16 %v851
        %v2810 = vunpack.c.h.b16 %v851
        %v2811 = vunpack.c.l.b16 %v852
        %v2812 = vunpack.c.h.b16 %v852
        %v2813 = vunpack.c.l.b16 %v853
        %v2814 = vunpack.c.h.b16 %v853
        %v2815 = vunpack.c.l.b16 %v854
        %v2816 = vunpack.c.h.b16 %v854
        %v2817 = vunpack.c.l.b16 %v855
        %v2818 = vunpack.c.h.b16 %v855
        %v2819 = vunpack.c.l.b16 %v856
        %v2820 = vunpack.c.h.b16 %v856
        %v2821 = vunpack.c.l.b16 %v857
        %v2822 = vunpack.c.h.b16 %v857
        %v2823 = vunpack.c.l.b16 %v858
        %v2824 = vunpack.c.h.b16 %v858
        %v2825 = vunpack.c.l.b16 %v859
        %v2826 = vunpack.c.h.b16 %v859
        %v2827 = vunpack.c.l.b16 %v860
        %v2828 = vunpack.c.h.b16 %v860
        %v2829 = vunpack.c.l.b16 %v861
        %v2830 = vunpack.c.h.b16 %v861
        %v2831 = vunpack.c.l.b16 %v862
        %v2832 = vunpack.c.h.b16 %v862
        %v2833 = vunpack.c.l.b16 %v863
        %v2834 = vunpack.c.h.b16 %v863
        %v2835 = vunpack.c.l.b16 %v864
        %v2836 = vunpack.c.h.b16 %v864
        %v2837 = vunpack.c.l.b16 %v865
        %v2838 = vunpack.c.h.b16 %v865
        %v2839 = vunpack.c.l.b16 %v866
        %v2840 = vunpack.c.h.b16 %v866
        %v2841 = vunpack.c.l.b16 %v867
        %v2842 = vunpack.c.h.b16 %v867
        %v2843 = vunpack.c.l.b16 %v868
        %v2844 = vunpack.c.h.b16 %v868
        %v2845 = vunpack.c.l.b16 %v869
        %v2846 = vunpack.c.h.b16 %v869
        %v2847 = vunpack.c.l.b16 %v870
        %v2848 = vunpack.c.h.b16 %v870
        %v2849 = vunpack.c.l.b16 %v871
        %v2850 = vunpack.c.h.b16 %v871
        %v2851 = vunpack.c.l.b16 %v872
        %v2852 = vunpack.c.h.b16 %v872
        %v2853 = vunpack.c.l.b16 %v873
        %v2854 = vunpack.c.h.b16 %v873
        %v2855 = vunpack.c.l.b16 %v874
        %v2856 = vunpack.c.h.b16 %v874
        %v2857 = vunpack.c.l.b16 %v875
        %v2858 = vunpack.c.h.b16 %v875
        %v2859 = vunpack.c.l.b16 %v876
        %v2860 = vunpack.c.h.b16 %v876
        %v2861 = vunpack.c.l.b16 %v877
        %v2862 = vunpack.c.h.b16 %v877
        %v2863 = vunpack.c.l.b16 %v878
        %v2864 = vunpack.c.h.b16 %v878
        %v2865 = vunpack.c.l.b16 %v879
        %v2866 = vunpack.c.h.b16 %v879
        %v2867 = vunpack.c.l.b16 %v880
        %v2868 = vunpack.c.h.b16 %v880
        %v2869 = vunpack.c.l.b16 %v881
        %v2870 = vunpack.c.h.b16 %v881
        %v2871 = vunpack.c.l.b16 %v882
        %v2872 = vunpack.c.h.b16 %v882
        %v2873 = vunpack.c.l.b16 %v883
        %v2874 = vunpack.c.h.b16 %v883
        %v2875 = vunpack.c.l.b16 %v884
        %v2876 = vunpack.c.h.b16 %v884
        %v2877 = vunpack.c.l.b16 %v885
        %v2878 = vunpack.c.h.b16 %v885
        %v2879 = vunpack.c.l.b16 %v886
        %v2880 = vunpack.c.h.b16 %v886
        %v2881 = vunpack.c.l.b16 %v887
        %v2882 = vunpack.c.h.b16 %v887
        %v2883 = vunpack.c.l.b16 %v888
        %v2884 = vunpack.c.h.b16 %v888
        %v2885 = vunpack.c.l.b16 %v889
        %v2886 = vunpack.c.h.b16 %v889
        %v2887 = vunpack.c.l.b16 %v890
        %v2888 = vunpack.c.h.b16 %v890
        %v2889 = vunpack.c.l.b16 %v891
        %v2890 = vunpack.c.h.b16 %v891
        %v2891 = vunpack.c.l.b16 %v892
        %v2892 = vunpack.c.h.b16 %v892
        %v2893 = vunpack.c.l.b16 %v893
        %v2894 = vunpack.c.h.b16 %v893
        %v2895 = vunpack.c.l.b16 %v894
        %v2896 = vunpack.c.h.b16 %v894
        %v2897 = vunpack.c.l.b16 %v895
        %v2898 = vunpack.c.h.b16 %v895
        %v2899 = vunpack.c.l.b16 %v896
        %v2900 = vunpack.c.h.b16 %v896
        %v2901 = vunpack.c.l.b16 %v897
        %v2902 = vunpack.c.h.b16 %v897
        %v2903 = vunpack.c.l.b16 %v898
        %v2904 = vunpack.c.h.b16 %v898
        %v2905 = vunpack.c.l.b16 %v899
        %v2906 = vunpack.c.h.b16 %v899
        %v2907 = vunpack.c.l.b16 %v900
        %v2908 = vunpack.c.h.b16 %v900
        %v2909 = vunpack.c.l.b16 %v901
        %v2910 = vunpack.c.h.b16 %v901
        %v2911 = vunpack.c.l.b16 %v902
        %v2912 = vunpack.c.h.b16 %v902
        %v2913 = vunpack.c.l.b16 %v903
        %v2914 = vunpack.c.h.b16 %v903
        %v2915 = vunpack.c.l.b16 %v904
        %v2916 = vunpack.c.h.b16 %v904
        %v2917 = vunpack.c.l.b16 %v905
        %v2918 = vunpack.c.h.b16 %v905
        %v2919 = vunpack.c.l.b16 %v906
        %v2920 = vunpack.c.h.b16 %v906
        %v2921 = vunpack.c.l.b16 %v907
        %v2922 = vunpack.c.h.b16 %v907
        %v2923 = vunpack.c.l.b16 %v908
        %v2924 = vunpack.c.h.b16 %v908
        %v2925 = vunpack.c.l.b16 %v909
        %v2926 = vunpack.c.h.b16 %v909
        %v2927 = vunpack.c.l.b16 %v910
        %v2928 = vunpack.c.h.b16 %v910
        %v2929 = vunpack.c.l.b16 %v911
        %v2930 = vunpack.c.h.b16 %v911
        %v2931 = vunpack.c.l.b16 %v912
        %v2932 = vunpack.c.h.b16 %v912
        %v2933 = vunpack.c.l.b16 %v913
        %v2934 = vunpack.c.h.b16 %v913
        %v2935 = vunpack.c.l.b16 %v914
        %v2936 = vunpack.c.h.b16 %v914
        %v2937 = vunpack.c.l.b16 %v915
        %v2938 = vunpack.c.h.b16 %v915
        %v2939 = vunpack.c.l.b16 %v916
        %v2940 = vunpack.c.h.b16 %v916
        %v2941 = vunpack.c.l.b16 %v917
        %v2942 = vunpack.c.h.b16 %v917
        %v2943 = vunpack.c.l.b16 %v918
        %v2944 = vunpack.c.h.b16 %v918
        %v2945 = vunpack.c.l.b16 %v919
        %v2946 = vunpack.c.h.b16 %v919
        %v2947 = vunpack.c.l.b16 %v920
        %v2948 = vunpack.c.h.b16 %v920
        %v2949 = vunpack.c.l.b16 %v921
        %v2950 = vunpack.c.h.b16 %v921
        %v2951 = vunpack.c.l.b16 %v922
        %v2952 = vunpack.c.h.b16 %v922
        %v2953 = vunpack.c.l.b16 %v923
        %v2954 = vunpack.c.h.b16 %v923
        %v2955 = vunpack.c.l.b16 %v924
        %v2956 = vunpack.c.h.b16 %v924
        %v2957 = vunpack.c.l.b16 %v925
        %v2958 = vunpack.c.h.b16 %v925
        %v2959 = vunpack.c.l.b16 %v926
        %v2960 = vunpack.c.h.b16 %v926
        %v2961 = vunpack.c.l.b16 %v927
        %v2962 = vunpack.c.h.b16 %v927
        %v2963 = vunpack.c.l.b16 %v928
        %v2964 = vunpack.c.h.b16 %v928
        %v2965 = vunpack.c.l.b16 %v929
        %v2966 = vunpack.c.h.b16 %v929
        %v2967 = vunpack.c.l.b16 %v930
        %v2968 = vunpack.c.h.b16 %v930
        %v2969 = vunpack.c.l.b16 %v931
        %v2970 = vunpack.c.h.b16 %v931
        %v2971 = vunpack.c.l.b16 %v932
        %v2972 = vunpack.c.h.b16 %v932
        %v2973 = vunpack.c.l.b16 %v933
        %v2974 = vunpack.c.h.b16 %v933
        %v2975 = vunpack.c.l.b16 %v934
        %v2976 = vunpack.c.h.b16 %v934
        %v2977 = vunpack.c.l.b16 %v935
        %v2978 = vunpack.c.h.b16 %v935
        %v2979 = vunpack.c.l.b16 %v936
        %v2980 = vunpack.c.h.b16 %v936
        %v2981 = vunpack.c.l.b16 %v937
        %v2982 = vunpack.c.h.b16 %v937
        %v2983 = vunpack.c.l.b16 %v938
        %v2984 = vunpack.c.h.b16 %v938
        %v2985 = vunpack.c.l.b16 %v939
        %v2986 = vunpack.c.h.b16 %v939
        %v2987 = vunpack.c.l.b16 %v940
        %v2988 = vunpack.c.h.b16 %v940
        %v2989 = vunpack.c.l.b16 %v941
        %v2990 = vunpack.c.h.b16 %v941
        %v2991 = vunpack.c.l.b16 %v942
        %v2992 = vunpack.c.h.b16 %v942
        %v2993 = vunpack.c.l.b16 %v943
        %v2994 = vunpack.c.h.b16 %v943
        %v2995 = vunpack.c.l.b16 %v944
        %v2996 = vunpack.c.h.b16 %v944
        %v2997 = vunpack.c.l.b16 %v945
        %v2998 = vunpack.c.h.b16 %v945
        %v2999 = vunpack.c.l.b16 %v946
        %v3000 = vunpack.c.h.b16 %v946
        %v3001 = vunpack.c.l.b16 %v947
        %v3002 = vunpack.c.h.b16 %v947
        %v3003 = vunpack.c.l.b16 %v948
        %v3004 = vunpack.c.h.b16 %v948
        %v3005 = vunpack.c.l.b16 %v949
        %v3006 = vunpack.c.h.b16 %v949
        %v3007 = vunpack.c.l.b16 %v950
        %v3008 = vunpack.c.h.b16 %v950
        %v3009 = vunpack.c.l.b16 %v951
        %v3010 = vunpack.c.h.b16 %v951
        %v3011 = vunpack.c.l.b16 %v952
        %v3012 = vunpack.c.h.b16 %v952
        %v3013 = vunpack.c.l.b16 %v953
        %v3014 = vunpack.c.h.b16 %v953
        %v3015 = vunpack.c.l.b16 %v954
        %v3016 = vunpack.c.h.b16 %v954
        %v3017 = vunpack.c.l.b16 %v955
        %v3018 = vunpack.c.h.b16 %v955
        %v3019 = vunpack.c.l.b16 %v956
        %v3020 = vunpack.c.h.b16 %v956
        %v3021 = vunpack.c.l.b16 %v957
        %v3022 = vunpack.c.h.b16 %v957
        %v3023 = vunpack.c.l.b16 %v958
        %v3024 = vunpack.c.h.b16 %v958
        %v3025 = vunpack.c.l.b16 %v959
        %v3026 = vunpack.c.h.b16 %v959
        %v3027 = vunpack.c.l.b16 %v960
        %v3028 = vunpack.c.h.b16 %v960
        %v3029 = vunpack.c.l.b16 %v961
        %v3030 = vunpack.c.h.b16 %v961
        %v3031 = vunpack.c.l.b16 %v962
        %v3032 = vunpack.c.h.b16 %v962
        %v3033 = vunpack.c.l.b16 %v963
        %v3034 = vunpack.c.h.b16 %v963
        %v3035 = vunpack.c.l.b16 %v964
        %v3036 = vunpack.c.h.b16 %v964
        %v3037 = vunpack.c.l.b16 %v965
        %v3038 = vunpack.c.h.b16 %v965
        %v3039 = vunpack.c.l.b16 %v966
        %v3040 = vunpack.c.h.b16 %v966
        %v3041 = vunpack.c.l.b16 %v967
        %v3042 = vunpack.c.h.b16 %v967
        %v3043 = vunpack.c.l.b16 %v968
        %v3044 = vunpack.c.h.b16 %v968
        %v3045 = vunpack.c.l.b16 %v969
        %v3046 = vunpack.c.h.b16 %v969
        %v3047 = vunpack.c.l.b16 %v970
        %v3048 = vunpack.c.h.b16 %v970
        %v3049 = vunpack.c.l.b16 %v971
        %v3050 = vunpack.c.h.b16 %v971
        %v3051 = vunpack.c.l.b16 %v972
        %v3052 = vunpack.c.h.b16 %v972
        %v3053 = vunpack.c.l.b16 %v973
        %v3054 = vunpack.c.h.b16 %v973
        %v3055 = vunpack.c.l.b16 %v974
        %v3056 = vunpack.c.h.b16 %v974
        %v3057 = vunpack.c.l.b16 %v975
        %v3058 = vunpack.c.h.b16 %v975
        %v3059 = vunpack.c.l.b16 %v976
        %v3060 = vunpack.c.h.b16 %v976
        %v3061 = vunpack.c.l.b16 %v977
        %v3062 = vunpack.c.h.b16 %v977
        %v3063 = vunpack.c.l.b16 %v978
        %v3064 = vunpack.c.h.b16 %v978
        %v3065 = vunpack.c.l.b16 %v979
        %v3066 = vunpack.c.h.b16 %v979
        %v3067 = vunpack.c.l.b16 %v980
        %v3068 = vunpack.c.h.b16 %v980
        %v3069 = vunpack.c.l.b16 %v981
        %v3070 = vunpack.c.h.b16 %v981
        %v3071 = vunpack.c.l.b16 %v982
        %v3072 = vunpack.c.h.b16 %v982
        %v3073 = vunpack.c.l.b16 %v983
        %v3074 = vunpack.c.h.b16 %v983
        %v3075 = vunpack.c.l.b16 %v984
        %v3076 = vunpack.c.h.b16 %v984
        %v3077 = vunpack.c.l.b16 %v985
        %v3078 = vunpack.c.h.b16 %v985
        %v3079 = vunpack.c.l.b16 %v986
        %v3080 = vunpack.c.h.b16 %v986
        %v3081 = vunpack.c.l.b16 %v987
        %v3082 = vunpack.c.h.b16 %v987
        %v3083 = vunpack.c.l.b16 %v988
        %v3084 = vunpack.c.h.b16 %v988
        %v3085 = vunpack.c.l.b16 %v989
        %v3086 = vunpack.c.h.b16 %v989
        %v3087 = vunpack.c.l.b16 %v990
        %v3088 = vunpack.c.h.b16 %v990
        %v3089 = vunpack.c.l.b16 %v991
        %v3090 = vunpack.c.h.b16 %v991
        %v3091 = vunpack.c.l.b16 %v992
        %v3092 = vunpack.c.h.b16 %v992
        %v3093 = vunpack.c.l.b16 %v993
        %v3094 = vunpack.c.h.b16 %v993
        %v3095 = vunpack.c.l.b16 %v994
        %v3096 = vunpack.c.h.b16 %v994
        %v3097 = vunpack.c.l.b16 %v995
        %v3098 = vunpack.c.h.b16 %v995
        %v3099 = vunpack.c.l.b16 %v996
        %v3100 = vunpack.c.h.b16 %v996
        %v3101 = vunpack.c.l.b16 %v997
        %v3102 = vunpack.c.h.b16 %v997
        %v3103 = vunpack.c.l.b16 %v998
        %v3104 = vunpack.c.h.b16 %v998
        %v3105 = vunpack.c.l.b16 %v999
        %v3106 = vunpack.c.h.b16 %v999
        %v3107 = vunpack.c.l.b16 %v1000
        %v3108 = vunpack.c.h.b16 %v1000
        %v3109 = vunpack.c.l.b16 %v1001
        %v3110 = vunpack.c.h.b16 %v1001
        %v3111 = vunpack.c.l.b16 %v1002
        %v3112 = vunpack.c.h.b16 %v1002
        %v3113 = vunpack.c.l.b16 %v1003
        %v3114 = vunpack.c.h.b16 %v1003
        %v3115 = vunpack.c.l.b16 %v1004
        %v3116 = vunpack.c.h.b16 %v1004
        %v3117 = vpack.c.b16 %v1967, %v1965
        %v3118 = vpack.c.b16 %v1968, %v1966
        %v3119 = vpack.c.b16 %v1971, %v1969
        %v3120 = vpack.c.b16 %v1972, %v1970
        %v3121 = vpack.c.b16 %v1975, %v1973
        %v3122 = vpack.c.b16 %v1976, %v1974
        %v3123 = vpack.c.b16 %v1979, %v1977
        %v3124 = vpack.c.b16 %v1980, %v1978
        %v3125 = vpack.c.b16 %v1983, %v1981
        %v3126 = vpack.c.b16 %v1984, %v1982
        %v3127 = vpack.c.b16 %v1987, %v1985
        %v3128 = vpack.c.b16 %v1988, %v1986
        %v3129 = vpack.c.b16 %v1991, %v1989
        %v3130 = vpack.c.b16 %v1992, %v1990
        %v3131 = vpack.c.b16 %v1995, %v1993
        %v3132 = vpack.c.b16 %v1996, %v1994
        %v3133 = vpack.c.b16 %v1999, %v1997
        %v3134 = vpack.c.b16 %v2000, %v1998
        %v3135 = vpack.c.b16 %v2003, %v2001
        %v3136 = vpack.c.b16 %v2004, %v2002
        %v3137 = vpack.c.b16 %v2007, %v2005
        %v3138 = vpack.c.b16 %v2008, %v2006
        %v3139 = vpack.c.b16 %v2011, %v2009
        %v3140 = vpack.c.b16 %v2012, %v2010
        %v3141 = vpack.c.b16 %v2015, %v2013
        %v3142 = vpack.c.b16 %v2016, %v2014
        %v3143 = vpack.c.b16 %v2019, %v2017
        %v3144 = vpack.c.b16 %v2020, %v2018
        %v3145 = vpack.c.b16 %v2023, %v2021
        %v3146 = vpack.c.b16 %v2024, %v2022
        %v3147 = vpack.c.b16 %v2027, %v2025
        %v3148 = vpack.c.b16 %v2028, %v2026
        %v3149 = vpack.c.b16 %v2031, %v2029
        %v3150 = vpack.c.b16 %v2032, %v2030
        %v3151 = vpack.c.b16 %v2035, %v2033
        %v3152 = vpack.c.b16 %v2036, %v2034
        %v3153 = vpack.c.b16 %v2039, %v2037
        %v3154 = vpack.c.b16 %v2040, %v2038
        %v3155 = vpack.c.b16 %v2043, %v2041
        %v3156 = vpack.c.b16 %v2044, %v2042
        %v3157 = vpack.c.b16 %v2047, %v2045
        %v3158 = vpack.c.b16 %v2048, %v2046
        %v3159 = vpack.c.b16 %v2051, %v2049
        %v3160 = vpack.c.b16 %v2052, %v2050
        %v3161 = vpack.c.b16 %v2055, %v2053
        %v3162 = vpack.c.b16 %v2056, %v2054
        %v3163 = vpack.c.b16 %v2059, %v2057
        %v3164 = vpack.c.b16 %v2060, %v2058
        %v3165 = vpack.c.b16 %v2063, %v2061
        %v3166 = vpack.c.b16 %v2064, %v2062
        %v3167 = vpack.c.b16 %v2067, %v2065
        %v3168 = vpack.c.b16 %v2068, %v2066
        %v3169 = vpack.c.b16 %v2071, %v2069
        %v3170 = vpack.c.b16 %v2072, %v2070
        %v3171 = vpack.c.b16 %v2075, %v2073
        %v3172 = vpack.c.b16 %v2076, %v2074
        %v3173 = vpack.c.b16 %v2079, %v2077
        %v3174 = vpack.c.b16 %v2080, %v2078
        %v3175 = vpack.c.b16 %v2083, %v2081
        %v3176 = vpack.c.b16 %v2084, %v2082
        %v3177 = vpack.c.b16 %v2087, %v2085
        %v3178 = vpack.c.b16 %v2088, %v2086
        %v3179 = vpack.c.b16 %v2091, %v2089
        %v3180 = vpack.c.b16 %v2092, %v2090
        %v3181 = vpack.c.b16 %v2095, %v2093
        %v3182 = vpack.c.b16 %v2096, %v2094
        %v3183 = vpack.c.b16 %v2099, %v2097
        %v3184 = vpack.c.b16 %v2100, %v2098
        %v3185 = vpack.c.b16 %v2103, %v2101
        %v3186 = vpack.c.b16 %v2104, %v2102
        %v3187 = vpack.c.b16 %v2107, %v2105
        %v3188 = vpack.c.b16 %v2108, %v2106
        %v3189 = vpack.c.b16 %v2111, %v2109
        %v3190 = vpack.c.b16 %v2112, %v2110
        %v3191 = vpack.c.b16 %v2115, %v2113
        %v3192 = vpack.c.b16 %v2116, %v2114
        %v3193 = vpack.c.b16 %v2119, %v2117
        %v3194 = vpack.c.b16 %v2120, %v2118
        %v3195 = vpack.c.b16 %v2123, %v2121
        %v3196 = vpack.c.b16 %v2124, %v2122
        %v3197 = vpack.c.b16 %v2127, %v2125
        %v3198 = vpack.c.b16 %v2128, %v2126
        %v3199 = vpack.c.b16 %v2131, %v2129
        %v3200 = vpack.c.b16 %v2132, %v2130
        %v3201 = vpack.c.b16 %v2135, %v2133
        %v3202 = vpack.c.b16 %v2136, %v2134
        %v3203 = vpack.c.b16 %v2139, %v2137
        %v3204 = vpack.c.b16 %v2140, %v2138
        %v3205 = vpack.c.b16 %v2143, %v2141
        %v3206 = vpack.c.b16 %v2144, %v2142
        %v3207 = vpack.c.b16 %v2147, %v2145
        %v3208 = vpack.c.b16 %v2148, %v2146
        %v3209 = vpack.c.b16 %v2151, %v2149
        %v3210 = vpack.c.b16 %v2152, %v2150
        %v3211 = vpack.c.b16 %v2155, %v2153
        %v3212 = vpack.c.b16 %v2156, %v2154
        %v3213 = vpack.c.b16 %v2159, %v2157
        %v3214 = vpack.c.b16 %v2160, %v2158
        %v3215 = vpack.c.b16 %v2163, %v2161
        %v3216 = vpack.c.b16 %v2164, %v2162
        %v3217 = vpack.c.b16 %v2167, %v2165
        %v3218 = vpack.c.b16 %v2168, %v2166
        %v3219 = vpack.c.b16 %v2171, %v2169
        %v3220 = vpack.c.b16 %v2172, %v2170
        %v3221 = vpack.c.b16 %v2175, %v2173
        %v3222 = vpack.c.b16 %v2176, %v2174
        %v3223 = vpack.c.b16 %v2179, %v2177
        %v3224 = vpack.c.b16 %v2180, %v2178
        %v3225 = vpack.c.b16 %v2183, %v2181
        %v3226 = vpack.c.b16 %v2184, %v2182
        %v3227 = vpack.c.b16 %v2187, %v2185
        %v3228 = vpack.c.b16 %v2188, %v2186
        %v3229 = vpack.c.b16 %v2191, %v2189
        %v3230 = vpack.c.b16 %v2192, %v2190
        %v3231 = vpack.c.b16 %v2195, %v2193
        %v3232 = vpack.c.b16 %v2196, %v2194
        %v3233 = vpack.c.b16 %v2199, %v2197
        %v3234 = vpack.c.b16 %v2200, %v2198
        %v3235 = vpack.c.b16 %v2203, %v2201
        %v3236 = vpack.c.b16 %v2204, %v2202
        %v3237 = vpack.c.b16 %v2207, %v2205
        %v3238 = vpack.c.b16 %v2208, %v2206
        %v3239 = vpack.c.b16 %v2211, %v2209
        %v3240 = vpack.c.b16 %v2212, %v2210
        %v3241 = vpack.c.b16 %v2215, %v2213
        %v3242 = vpack.c.b16 %v2216, %v2214
        %v3243 = vpack.c.b16 %v2219, %v2217
        %v3244 = vpack.c.b16 %v2220, %v2218
        %v3245 = vpack.c.b16 %v2223, %v2221
        %v3246 = vpack.c.b16 %v2224, %v2222
        %v3247 = vpack.c.b16 %v2227, %v2225
        %v3248 = vpack.c.b16 %v2228, %v2226
        %v3249 = vpack.c.b16 %v2231, %v2229
        %v3250 = vpack.c.b16 %v2232, %v2230
        %v3251 = vpack.c.b16 %v2235, %v2233
        %v3252 = vpack.c.b16 %v2236, %v2234
        %v3253 = vpack.c.b16 %v2239, %v2237
        %v3254 = vpack.c.b16 %v2240, %v2238
        %v3255 = vpack.c.b16 %v2243, %v2241
        %v3256 = vpack.c.b16 %v2244, %v2242
        %v3257 = vpack.c.b16 %v2247, %v2245
        %v3258 = vpack.c.b16 %v2248, %v2246
        %v3259 = vpack.c.b16 %v2251, %v2249
        %v3260 = vpack.c.b16 %v2252, %v2250
        %v3261 = vpack.c.b16 %v2255, %v2253
        %v3262 = vpack.c.b16 %v2256, %v2254
        %v3263 = vpack.c.b16 %v2259, %v2257
        %v3264 = vpack.c.b16 %v2260, %v2258
        %v3265 = vpack.c.b16 %v2263, %v2261
        %v3266 = vpack.c.b16 %v2264, %v2262
        %v3267 = vpack.c.b16 %v2267, %v2265
        %v3268 = vpack.c.b16 %v2268, %v2266
        %v3269 = vpack.c.b16 %v2271, %v2269
        %v3270 = vpack.c.b16 %v2272, %v2270
        %v3271 = vpack.c.b16 %v2275, %v2273
        %v3272 = vpack.c.b16 %v2276, %v2274
        %v3273 = vpack.c.b16 %v2279, %v2277
        %v3274 = vpack.c.b16 %v2280, %v2278
        %v3275 = vpack.c.b16 %v2283, %v2281
        %v3276 = vpack.c.b16 %v2284, %v2282
        %v3277 = vpack.c.b16 %v2287, %v2285
        %v3278 = vpack.c.b16 %v2288, %v2286
        %v3279 = vpack.c.b16 %v2291, %v2289
        %v3280 = vpack.c.b16 %v2292, %v2290
        %v3281 = vpack.c.b16 %v2295, %v2293
        %v3282 = vpack.c.b16 %v2296, %v2294
        %v3283 = vpack.c.b16 %v2299, %v2297
        %v3284 = vpack.c.b16 %v2300, %v2298
        %v3285 = vpack.c.b16 %v2303, %v2301
        %v3286 = vpack.c.b16 %v2304, %v2302
        %v3287 = vpack.c.b16 %v2307, %v2305
        %v3288 = vpack.c.b16 %v2308, %v2306
        %v3289 = vpack.c.b16 %v2311, %v2309
        %v3290 = vpack.c.b16 %v2312, %v2310
        %v3291 = vpack.c.b16 %v2315, %v2313
        %v3292 = vpack.c.b16 %v2316, %v2314
        %v3293 = vpack.c.b16 %v2319, %v2317
        %v3294 = vpack.c.b16 %v2320, %v2318
        %v3295 = vpack.c.b16 %v2323, %v2321
        %v3296 = vpack.c.b16 %v2324, %v2322
        %v3297 = vpack.c.b16 %v2327, %v2325
        %v3298 = vpack.c.b16 %v2328, %v2326
        %v3299 = vpack.c.b16 %v2331, %v2329
        %v3300 = vpack.c.b16 %v2332, %v2330
        %v3301 = vpack.c.b16 %v2335, %v2333
        %v3302 = vpack.c.b16 %v2336, %v2334
        %v3303 = vpack.c.b16 %v2339, %v2337
        %v3304 = vpack.c.b16 %v2340, %v2338
        %v3305 = vpack.c.b16 %v2343, %v2341
        %v3306 = vpack.c.b16 %v2344, %v2342
        %v3307 = vpack.c.b16 %v2347, %v2345
        %v3308 = vpack.c.b16 %v2348, %v2346
        %v3309 = vpack.c.b16 %v2351, %v2349
        %v3310 = vpack.c.b16 %v2352, %v2350
        %v3311 = vpack.c.b16 %v2355, %v2353
        %v3312 = vpack.c.b16 %v2356, %v2354
        %v3313 = vpack.c.b16 %v2359, %v2357
        %v3314 = vpack.c.b16 %v2360, %v2358
        %v3315 = vpack.c.b16 %v2363, %v2361
        %v3316 = vpack.c.b16 %v2364, %v2362
        %v3317 = vpack.c.b16 %v2367, %v2365
        %v3318 = vpack.c.b16 %v2368, %v2366
        %v3319 = vpack.c.b16 %v2371, %v2369
        %v3320 = vpack.c.b16 %v2372, %v2370
        %v3321 = vpack.c.b16 %v2375, %v2373
        %v3322 = vpack.c.b16 %v2376, %v2374
        %v3323 = vpack.c.b16 %v2379, %v2377
        %v3324 = vpack.c.b16 %v2380, %v2378
        %v3325 = vpack.c.b16 %v2383, %v2381
        %v3326 = vpack.c.b16 %v2384, %v2382
        %v3327 = vpack.c.b16 %v2387, %v2385
        %v3328 = vpack.c.b16 %v2388, %v2386
        %v3329 = vpack.c.b16 %v2391, %v2389
        %v3330 = vpack.c.b16 %v2392, %v2390
        %v3331 = vpack.c.b16 %v2395, %v2393
        %v3332 = vpack.c.b16 %v2396, %v2394
        %v3333 = vpack.c.b16 %v2399, %v2397
        %v3334 = vpack.c.b16 %v2400, %v2398
        %v3335 = vpack.c.b16 %v2403, %v2401
        %v3336 = vpack.c.b16 %v2404, %v2402
        %v3337 = vpack.c.b16 %v2407, %v2405
        %v3338 = vpack.c.b16 %v2408, %v2406
        %v3339 = vpack.c.b16 %v2411, %v2409
        %v3340 = vpack.c.b16 %v2412, %v2410
        %v3341 = vpack.c.b16 %v2415, %v2413
        %v3342 = vpack.c.b16 %v2416, %v2414
        %v3343 = vpack.c.b16 %v2419, %v2417
        %v3344 = vpack.c.b16 %v2420, %v2418
        %v3345 = vpack.c.b16 %v2423, %v2421
        %v3346 = vpack.c.b16 %v2424, %v2422
        %v3347 = vpack.c.b16 %v2427, %v2425
        %v3348 = vpack.c.b16 %v2428, %v2426
        %v3349 = vpack.c.b16 %v2431, %v2429
        %v3350 = vpack.c.b16 %v2432, %v2430
        %v3351 = vpack.c.b16 %v2435, %v2433
        %v3352 = vpack.c.b16 %v2436, %v2434
        %v3353 = vpack.c.b16 %v2439, %v2437
        %v3354 = vpack.c.b16 %v2440, %v2438
        %v3355 = vpack.c.b16 %v2443, %v2441
        %v3356 = vpack.c.b16 %v2444, %v2442
        %v3357 = vpack.c.b16 %v2447, %v2445
        %v3358 = vpack.c.b16 %v2448, %v2446
        %v3359 = vpack.c.b16 %v2451, %v2449
        %v3360 = vpack.c.b16 %v2452, %v2450
        %v3361 = vpack.c.b16 %v2455, %v2453
        %v3362 = vpack.c.b16 %v2456, %v2454
        %v3363 = vpack.c.b16 %v2459, %v2457
        %v3364 = vpack.c.b16 %v2460, %v2458
        %v3365 = vpack.c.b16 %v2463, %v2461
        %v3366 = vpack.c.b16 %v2464, %v2462
        %v3367 = vpack.c.b16 %v2467, %v2465
        %v3368 = vpack.c.b16 %v2468, %v2466
        %v3369 = vpack.c.b16 %v2471, %v2469
        %v3370 = vpack.c.b16 %v2472, %v2470
        %v3371 = vpack.c.b16 %v2475, %v2473
        %v3372 = vpack.c.b16 %v2476, %v2474
        %v3373 = vpack.c.b16 %v2479, %v2477
        %v3374 = vpack.c.b16 %v2480, %v2478
        %v3375 = vpack.c.b16 %v2483, %v2481
        %v3376 = vpack.c.b16 %v2484, %v2482
        %v3377 = vpack.c.b16 %v2487, %v2485
        %v3378 = vpack.c.b16 %v2488, %v2486
        %v3379 = vpack.c.b16 %v2491, %v2489
        %v3380 = vpack.c.b16 %v2492, %v2490
        %v3381 = vpack.c.b16 %v2495, %v2493
        %v3382 = vpack.c.b16 %v2496, %v2494
        %v3383 = vpack.c.b16 %v2499, %v2497
        %v3384 = vpack.c.b16 %v2500, %v2498
        %v3385 = vpack.c.b16 %v2503, %v2501
        %v3386 = vpack.c.b16 %v2504, %v2502
        %v3387 = vpack.c.b16 %v2507, %v2505
        %v3388 = vpack.c.b16 %v2508, %v2506
        %v3389 = vpack.c.b16 %v2511, %v2509
        %v3390 = vpack.c.b16 %v2512, %v2510
        %v3391 = vpack.c.b16 %v2515, %v2513
        %v3392 = vpack.c.b16 %v2516, %v2514
        %v3393 = vpack.c.b16 %v2519, %v2517
        %v3394 = vpack.c.b16 %v2520, %v2518
        %v3395 = vpack.c.b16 %v2523, %v2521
        %v3396 = vpack.c.b16 %v2524, %v2522
        %v3397 = vpack.c.b16 %v2527, %v2525
        %v3398 = vpack.c.b16 %v2528, %v2526
        %v3399 = vpack.c.b16 %v2531, %v2529
        %v3400 = vpack.c.b16 %v2532, %v2530
        %v3401 = vpack.c.b16 %v2535, %v2533
        %v3402 = vpack.c.b16 %v2536, %v2534
        %v3403 = vpack.c.b16 %v2539, %v2537
        %v3404 = vpack.c.b16 %v2540, %v2538
        %v3405 = vpack.c.b16 %v2543, %v2541
        %v3406 = vpack.c.b16 %v2544, %v2542
        %v3407 = vpack.c.b16 %v2547, %v2545
        %v3408 = vpack.c.b16 %v2548, %v2546
        %v3409 = vpack.c.b16 %v2551, %v2549
        %v3410 = vpack.c.b16 %v2552, %v2550
        %v3411 = vpack.c.b16 %v2555, %v2553
        %v3412 = vpack.c.b16 %v2556, %v2554
        %v3413 = vpack.c.b16 %v2559, %v2557
        %v3414 = vpack.c.b16 %v2560, %v2558
        %v3415 = vpack.c.b16 %v2563, %v2561
        %v3416 = vpack.c.b16 %v2564, %v2562
        %v3417 = vpack.c.b16 %v2567, %v2565
        %v3418 = vpack.c.b16 %v2568, %v2566
        %v3419 = vpack.c.b16 %v2571, %v2569
        %v3420 = vpack.c.b16 %v2572, %v2570
        %v3421 = vpack.c.b16 %v2575, %v2573
        %v3422 = vpack.c.b16 %v2576, %v2574
        %v3423 = vpack.c.b16 %v2579, %v2577
        %v3424 = vpack.c.b16 %v2580, %v2578
        %v3425 = vpack.c.b16 %v2583, %v2581
        %v3426 = vpack.c.b16 %v2584, %v2582
        %v3427 = vpack.c.b16 %v2587, %v2585
        %v3428 = vpack.c.b16 %v2588, %v2586
        %v3429 = vpack.c.b16 %v2591, %v2589
        %v3430 = vpack.c.b16 %v2592, %v2590
        %v3431 = vpack.c.b16 %v2595, %v2593
        %v3432 = vpack.c.b16 %v2596, %v2594
        %v3433 = vpack.c.b16 %v2599, %v2597
        %v3434 = vpack.c.b16 %v2600, %v2598
        %v3435 = vpack.c.b16 %v2603, %v2601
        %v3436 = vpack.c.b16 %v2604, %v2602
        %v3437 = vpack.c.b16 %v2607, %v2605
        %v3438 = vpack.c.b16 %v2608, %v2606
        %v3439 = vpack.c.b16 %v2611, %v2609
        %v3440 = vpack.c.b16 %v2612, %v2610
        %v3441 = vpack.c.b16 %v2615, %v2613
        %v3442 = vpack.c.b16 %v2616, %v2614
        %v3443 = vpack.c.b16 %v2619, %v2617
        %v3444 = vpack.c.b16 %v2620, %v2618
        %v3445 = vpack.c.b16 %v2623, %v2621
        %v3446 = vpack.c.b16 %v2624, %v2622
        %v3447 = vpack.c.b16 %v2627, %v2625
        %v3448 = vpack.c.b16 %v2628, %v2626
        %v3449 = vpack.c.b16 %v2631, %v2629
        %v3450 = vpack.c.b16 %v2632, %v2630
        %v3451 = vpack.c.b16 %v2635, %v2633
        %v3452 = vpack.c.b16 %v2636, %v2634
        %v3453 = vpack.c.b16 %v2639, %v2637
        %v3454 = vpack.c.b16 %v2640, %v2638
        %v3455 = vpack.c.b16 %v2643, %v2641
        %v3456 = vpack.c.b16 %v2644, %v2642
        %v3457 = vpack.c.b16 %v2647, %v2645
        %v3458 = vpack.c.b16 %v2648, %v2646
        %v3459 = vpack.c.b16 %v2651, %v2649
        %v3460 = vpack.c.b16 %v2652, %v2650
        %v3461 = vpack.c.b16 %v2655, %v2653
        %v3462 = vpack.c.b16 %v2656, %v2654
        %v3463 = vpack.c.b16 %v2659, %v2657
        %v3464 = vpack.c.b16 %v2660, %v2658
        %v3465 = vpack.c.b16 %v2663, %v2661
        %v3466 = vpack.c.b16 %v2664, %v2662
        %v3467 = vpack.c.b16 %v2667, %v2665
        %v3468 = vpack.c.b16 %v2668, %v2666
        %v3469 = vpack.c.b16 %v2671, %v2669
        %v3470 = vpack.c.b16 %v2672, %v2670
        %v3471 = vpack.c.b16 %v2675, %v2673
        %v3472 = vpack.c.b16 %v2676, %v2674
        %v3473 = vpack.c.b16 %v2679, %v2677
        %v3474 = vpack.c.b16 %v2680, %v2678
        %v3475 = vpack.c.b16 %v2683, %v2681
        %v3476 = vpack.c.b16 %v2684, %v2682
        %v3477 = vpack.c.b16 %v2687, %v2685
        %v3478 = vpack.c.b16 %v2688, %v2686
        %v3479 = vpack.c.b16 %v2691, %v2689
        %v3480 = vpack.c.b16 %v2692, %v2690
        %v3481 = vpack.c.b16 %v2695, %v2693
        %v3482 = vpack.c.b16 %v2696, %v2694
        %v3483 = vpack.c.b16 %v2699, %v2697
        %v3484 = vpack.c.b16 %v2700, %v2698
        %v3485 = vpack.c.b16 %v2703, %v2701
        %v3486 = vpack.c.b16 %v2704, %v2702
        %v3487 = vpack.c.b16 %v2707, %v2705
        %v3488 = vpack.c.b16 %v2708, %v2706
        %v3489 = vpack.c.b16 %v2711, %v2709
        %v3490 = vpack.c.b16 %v2712, %v2710
        %v3491 = vpack.c.b16 %v2715, %v2713
        %v3492 = vpack.c.b16 %v2716, %v2714
        %v3493 = vpack.c.b16 %v2719, %v2717
        %v3494 = vpack.c.b16 %v2720, %v2718
        %v3495 = vpack.c.b16 %v2723, %v2721
        %v3496 = vpack.c.b16 %v2724, %v2722
        %v3497 = vpack.c.b16 %v2727, %v2725
        %v3498 = vpack.c.b16 %v2728, %v2726
        %v3499 = vpack.c.b16 %v2731, %v2729
        %v3500 = vpack.c.b16 %v2732, %v2730
        %v3501 = vpack.c.b16 %v2735, %v2733
        %v3502 = vpack.c.b16 %v2736, %v2734
        %v3503 = vpack.c.b16 %v2739, %v2737
        %v3504 = vpack.c.b16 %v2740, %v2738
        %v3505 = vpack.c.b16 %v2743, %v2741
        %v3506 = vpack.c.b16 %v2744, %v2742
        %v3507 = vpack.c.b16 %v2747, %v2745
        %v3508 = vpack.c.b16 %v2748, %v2746
        %v3509 = vpack.c.b16 %v2751, %v2749
        %v3510 = vpack.c.b16 %v2752, %v2750
        %v3511 = vpack.c.b16 %v2755, %v2753
        %v3512 = vpack.c.b16 %v2756, %v2754
        %v3513 = vpack.c.b16 %v2759, %v2757
        %v3514 = vpack.c.b16 %v2760, %v2758
        %v3515 = vpack.c.b16 %v2763, %v2761
        %v3516 = vpack.c.b16 %v2764, %v2762
        %v3517 = vpack.c.b16 %v2767, %v2765
        %v3518 = vpack.c.b16 %v2768, %v2766
        %v3519 = vpack.c.b16 %v2771, %v2769
        %v3520 = vpack.c.b16 %v2772, %v2770
        %v3521 = vpack.c.b16 %v2775, %v2773
        %v3522 = vpack.c.b16 %v2776, %v2774
        %v3523 = vpack.c.b16 %v2779, %v2777
        %v3524 = vpack.c.b16 %v2780, %v2778
        %v3525 = vpack.c.b16 %v2783, %v2781
        %v3526 = vpack.c.b16 %v2784, %v2782
        %v3527 = vpack.c.b16 %v2787, %v2785
        %v3528 = vpack.c.b16 %v2788, %v2786
        %v3529 = vpack.c.b16 %v2791, %v2789
        %v3530 = vpack.c.b16 %v2792, %v2790
        %v3531 = vpack.c.b16 %v2795, %v2793
        %v3532 = vpack.c.b16 %v2796, %v2794
        %v3533 = vpack.c.b16 %v2799, %v2797
        %v3534 = vpack.c.b16 %v2800, %v2798
        %v3535 = vpack.c.b16 %v2803, %v2801
        %v3536 = vpack.c.b16 %v2804, %v2802
        %v3537 = vpack.c.b16 %v2807, %v2805
        %v3538 = vpack.c.b16 %v2808, %v2806
        %v3539 = vpack.c.b16 %v2811, %v2809
        %v3540 = vpack.c.b16 %v2812, %v2810
        %v3541 = vpack.c.b16 %v2815, %v2813
        %v3542 = vpack.c.b16 %v2816, %v2814
        %v3543 = vpack.c.b16 %v2819, %v2817
        %v3544 = vpack.c.b16 %v2820, %v2818
        %v3545 = vpack.c.b16 %v2823, %v2821
        %v3546 = vpack.c.b16 %v2824, %v2822
        %v3547 = vpack.c.b16 %v2827, %v2825
        %v3548 = vpack.c.b16 %v2828, %v2826
        %v3549 = vpack.c.b16 %v2831, %v2829
        %v3550 = vpack.c.b16 %v2832, %v2830
        %v3551 = vpack.c.b16 %v2835, %v2833
        %v3552 = vpack.c.b16 %v2836, %v2834
        %v3553 = vpack.c.b16 %v2839, %v2837
        %v3554 = vpack.c.b16 %v2840, %v2838
        %v3555 = vpack.c.b16 %v2843, %v2841
        %v3556 = vpack.c.b16 %v2844, %v2842
        %v3557 = vpack.c.b16 %v2847, %v2845
        %v3558 = vpack.c.b16 %v2848, %v2846
        %v3559 = vpack.c.b16 %v2851, %v2849
        %v3560 = vpack.c.b16 %v2852, %v2850
        %v3561 = vpack.c.b16 %v2855, %v2853
        %v3562 = vpack.c.b16 %v2856, %v2854
        %v3563 = vpack.c.b16 %v2859, %v2857
        %v3564 = vpack.c.b16 %v2860, %v2858
        %v3565 = vpack.c.b16 %v2863, %v2861
        %v3566 = vpack.c.b16 %v2864, %v2862
        %v3567 = vpack.c.b16 %v2867, %v2865
        %v3568 = vpack.c.b16 %v2868, %v2866
        %v3569 = vpack.c.b16 %v2871, %v2869
        %v3570 = vpack.c.b16 %v2872, %v2870
        %v3571 = vpack.c.b16 %v2875, %v2873
        %v3572 = vpack.c.b16 %v2876, %v2874
        %v3573 = vpack.c.b16 %v2879, %v2877
        %v3574 = vpack.c.b16 %v2880, %v2878
        %v3575 = vpack.c.b16 %v2883, %v2881
        %v3576 = vpack.c.b16 %v2884, %v2882
        %v3577 = vpack.c.b16 %v2887, %v2885
        %v3578 = vpack.c.b16 %v2888, %v2886
        %v3579 = vpack.c.b16 %v2891, %v2889
        %v3580 = vpack.c.b16 %v2892, %v2890
        %v3581 = vpack.c.b16 %v2895, %v2893
        %v3582 = vpack.c.b16 %v2896, %v2894
        %v3583 = vpack.c.b16 %v2899, %v2897
        %v3584 = vpack.c.b16 %v2900, %v2898
        %v3585 = vpack.c.b16 %v2903, %v2901
        %v3586 = vpack.c.b16 %v2904, %v2902
        %v3587 = vpack.c.b16 %v2907, %v2905
        %v3588 = vpack.c.b16 %v2908, %v2906
        %v3589 = vpack.c.b16 %v2911, %v2909
        %v3590 = vpack.c.b16 %v2912, %v2910
        %v3591 = vpack.c.b16 %v2915, %v2913
        %v3592 = vpack.c.b16 %v2916, %v2914
        %v3593 = vpack.c.b16 %v2919, %v2917
        %v3594 = vpack.c.b16 %v2920, %v2918
        %v3595 = vpack.c.b16 %v2923, %v2921
        %v3596 = vpack.c.b16 %v2924, %v2922
        %v3597 = vpack.c.b16 %v2927, %v2925
        %v3598 = vpack.c.b16 %v2928, %v2926
        %v3599 = vpack.c.b16 %v2931, %v2929
        %v3600 = vpack.c.b16 %v2932, %v2930
        %v3601 = vpack.c.b16 %v2935, %v2933
        %v3602 = vpack.c.b16 %v2936, %v2934
        %v3603 = vpack.c.b16 %v2939, %v2937
        %v3604 = vpack.c.b16 %v2940, %v2938
        %v3605 = vpack.c.b16 %v2943, %v2941
        %v3606 = vpack.c.b16 %v2944, %v2942
        %v3607 = vpack.c.b16 %v2947, %v2945
        %v3608 = vpack.c.b16 %v2948, %v2946
        %v3609 = vpack.c.b16 %v2951, %v2949
        %v3610 = vpack.c.b16 %v2952, %v2950
        %v3611 = vpack.c.b16 %v2955, %v2953
        %v3612 = vpack.c.b16 %v2956, %v2954
        %v3613 = vpack.c.b16 %v2959, %v2957
        %v3614 = vpack.c.b16 %v2960, %v2958
        %v3615 = vpack.c.b16 %v2963, %v2961
        %v3616 = vpack.c.b16 %v2964, %v2962
        %v3617 = vpack.c.b16 %v2967, %v2965
        %v3618 = vpack.c.b16 %v2968, %v2966
        %v3619 = vpack.c.b16 %v2971, %v2969
        %v3620 = vpack.c.b16 %v2972, %v2970
        %v3621 = vpack.c.b16 %v2975, %v2973
        %v3622 = vpack.c.b16 %v2976, %v2974
        %v3623 = vpack.c.b16 %v2979, %v2977
        %v3624 = vpack.c.b16 %v2980, %v2978
        %v3625 = vpack.c.b16 %v2983, %v2981
        %v3626 = vpack.c.b16 %v2984, %v2982
        %v3627 = vpack.c.b16 %v2987, %v2985
        %v3628 = vpack.c.b16 %v2988, %v2986
        %v3629 = vpack.c.b16 %v2991, %v2989
        %v3630 = vpack.c.b16 %v2992, %v2990
        %v3631 = vpack.c.b16 %v2995, %v2993
        %v3632 = vpack.c.b16 %v2996, %v2994
        %v3633 = vpack.c.b16 %v2999, %v2997
        %v3634 = vpack.c.b16 %v3000, %v2998
        %v3635 = vpack.c.b16 %v3003, %v3001
        %v3636 = vpack.c.b16 %v3004, %v3002
        %v3637 = vpack.c.b16 %v3007, %v3005
        %v3638 = vpack.c.b16 %v3008, %v3006
        %v3639 = vpack.c.b16 %v3011, %v3009
        %v3640 = vpack.c.b16 %v3012, %v3010
        %v3641 = vpack.c.b16 %v3015, %v3013
        %v3642 = vpack.c.b16 %v3016, %v3014
        %v3643 = vpack.c.b16 %v3019, %v3017
        %v3644 = vpack.c.b16 %v3020, %v3018
        %v3645 = vpack.c.b16 %v3023, %v3021
        %v3646 = vpack.c.b16 %v3024, %v3022
        %v3647 = vpack.c.b16 %v3027, %v3025
        %v3648 = vpack.c.b16 %v3028, %v3026
        %v3649 = vpack.c.b16 %v3031, %v3029
        %v3650 = vpack.c.b16 %v3032, %v3030
        %v3651 = vpack.c.b16 %v3035, %v3033
        %v3652 = vpack.c.b16 %v3036, %v3034
        %v3653 = vpack.c.b16 %v3039, %v3037
        %v3654 = vpack.c.b16 %v3040, %v3038
        %v3655 = vpack.c.b16 %v3043, %v3041
        %v3656 = vpack.c.b16 %v3044, %v3042
        %v3657 = vpack.c.b16 %v3047, %v3045
        %v3658 = vpack.c.b16 %v3048, %v3046
        %v3659 = vpack.c.b16 %v3051, %v3049
        %v3660 = vpack.c.b16 %v3052, %v3050
        %v3661 = vpack.c.b16 %v3055, %v3053
        %v3662 = vpack.c.b16 %v3056, %v3054
        %v3663 = vpack.c.b16 %v3059, %v3057
        %v3664 = vpack.c.b16 %v3060, %v3058
        %v3665 = vpack.c.b16 %v3063, %v3061
        %v3666 = vpack.c.b16 %v3064, %v3062
        %v3667 = vpack.c.b16 %v3067, %v3065
        %v3668 = vpack.c.b16 %v3068, %v3066
        %v3669 = vpack.c.b16 %v3071, %v3069
        %v3670 = vpack.c.b16 %v3072, %v3070
        %v3671 = vpack.c.b16 %v3075, %v3073
        %v3672 = vpack.c.b16 %v3076, %v3074
        %v3673 = vpack.c.b16 %v3079, %v3077
        %v3674 = vpack.c.b16 %v3080, %v3078
        %v3675 = vpack.c.b16 %v3083, %v3081
        %v3676 = vpack.c.b16 %v3084, %v3082
        %v3677 = vpack.c.b16 %v3087, %v3085
        %v3678 = vpack.c.b16 %v3088, %v3086
        %v3679 = vpack.c.b16 %v3091, %v3089
        %v3680 = vpack.c.b16 %v3092, %v3090
        %v3681 = vpack.c.b16 %v3095, %v3093
        %v3682 = vpack.c.b16 %v3096, %v3094
        %v3683 = vpack.c.b16 %v3099, %v3097
        %v3684 = vpack.c.b16 %v3100, %v3098
        %v3685 = vpack.c.b16 %v3103, %v3101
        %v3686 = vpack.c.b16 %v3104, %v3102
        %v3687 = vpack.c.b16 %v3107, %v3105
        %v3688 = vpack.c.b16 %v3108, %v3106
        %v3689 = vpack.c.b16 %v3111, %v3109
        %v3690 = vpack.c.b16 %v3112, %v3110
        %v3691 = vpack.c.b16 %v3115, %v3113
        %v3692 = vpack.c.b16 %v3116, %v3114
        %4269 = vmatprep.subr.bf16.mxu0 %v3118
        %4270 = vmatpush1.bf16.msra.mxu0 %v3117
        %4271 = vmatprep.subr.bf16.mxu0 %v3120
        %4272 = vmatpush1.bf16.msra.mxu0 %v3119
        %4273 = vmatprep.subr.bf16.mxu0 %v3122
        %4274 = vmatpush1.bf16.msra.mxu0 %v3121
        %4275 = vmatprep.subr.bf16.mxu0 %v3124
        %4276 = vmatpush1.bf16.msra.mxu0 %v3123
        %4277 = vmatprep.subr.bf16.mxu0 %v3126
        %4278 = vmatpush1.bf16.msra.mxu0 %v3125
        %4279 = vmatprep.subr.bf16.mxu0 %v3128
        %4280 = vmatpush1.bf16.msra.mxu0 %v3127
        %4281 = vmatprep.subr.bf16.mxu0 %v3130
        %4282 = vmatpush1.bf16.msra.mxu0 %v3129
        %4283 = vmatprep.subr.bf16.mxu0 %v3132
        %4284 = vmatpush1.bf16.msra.mxu0 %v3131
        %4285 = vmatprep.subr.bf16.mxu0 %v3134
        %4286 = vmatpush1.bf16.msra.mxu0 %v3133
        %4287 = vmatprep.subr.bf16.mxu0 %v3136
        %4288 = vmatpush1.bf16.msra.mxu0 %v3135
        %4289 = vmatprep.subr.bf16.mxu0 %v3138
        %4290 = vmatpush1.bf16.msra.mxu0 %v3137
        %4291 = vmatprep.subr.bf16.mxu0 %v3140
        %4292 = vmatpush1.bf16.msra.mxu0 %v3139
        %4293 = vmatprep.subr.bf16.mxu0 %v3142
        %4294 = vmatpush1.bf16.msra.mxu0 %v3141
        %4295 = vmatprep.subr.bf16.mxu0 %v3144
        %4296 = vmatpush1.bf16.msra.mxu0 %v3143
        %4297 = vmatprep.subr.bf16.mxu0 %v3146
        %4298 = vmatpush1.bf16.msra.mxu0 %v3145
        %4299 = vmatprep.subr.bf16.mxu0 %v3148
        %4300 = vmatpush1.bf16.msra.mxu0 %v3147
        %4301 = vmatprep.mubr.bf16.mxu0 %v1246
        %4302 = vmatmul.mubr.bf16.gmra.mrb[0].mxu0 %v1245
        %v4303 = vpop.f32.mrb[0].mxu0
        %v4304 = vadd.f32 %v1012, %v4303
        %v4305 = vpop.f32.mrb[0].mxu0
        %v4306 = vadd.f32 %v1012, %v4305
        %v4307 = vpop.f32.mrb[0].mxu0
        %v4308 = vadd.f32 %v1017, %v4307
        %v4309 = vpop.f32.mrb[0].mxu0
        %v4310 = vadd.f32 %v1017, %v4309
        %4311 = vmatprep.mubr.bf16.mxu0 %v1282
        %4312 = vmatmul.mubr.bf16.gmra.mrb[0].mxu0 %v1281
        %v4313 = vpop.f32.mrb[0].mxu0
        %v4314 = vadd.f32 %v1022, %v4313
        %v4315 = vpop.f32.mrb[0].mxu0
        %v4316 = vadd.f32 %v1022, %v4315
        %v4317 = vpop.f32.mrb[0].mxu0
        %v4318 = vadd.f32 %v1027, %v4317
        %v4319 = vpop.f32.mrb[0].mxu0
        %v4320 = vadd.f32 %v1027, %v4319
        %4321 = vdwg.mxu0
        %4322 = vmatprep.subr.bf16.mxu0 %v3150
        %4323 = vmatpush1.bf16.msra.mxu0 %v3149
        %4324 = vmatprep.subr.bf16.mxu0 %v3152
        %4325 = vmatpush1.bf16.msra.mxu0 %v3151
        %4326 = vmatprep.subr.bf16.mxu0 %v3154
        %4327 = vmatpush1.bf16.msra.mxu0 %v3153
        %4328 = vmatprep.subr.bf16.mxu0 %v3156
        %4329 = vmatpush1.bf16.msra.mxu0 %v3155
        %4330 = vmatprep.subr.bf16.mxu0 %v3158
        %4331 = vmatpush1.bf16.msra.mxu0 %v3157
        %4332 = vmatprep.subr.bf16.mxu0 %v3160
        %4333 = vmatpush1.bf16.msra.mxu0 %v3159
        %4334 = vmatprep.subr.bf16.mxu0 %v3162
        %4335 = vmatpush1.bf16.msra.mxu0 %v3161
        %4336 = vmatprep.subr.bf16.mxu0 %v3164
        %4337 = vmatpush1.bf16.msra.mxu0 %v3163
        %4338 = vmatprep.subr.bf16.mxu0 %v3166
        %4339 = vmatpush1.bf16.msra.mxu0 %v3165
        %4340 = vmatprep.subr.bf16.mxu0 %v3168
        %4341 = vmatpush1.bf16.msra.mxu0 %v3167
        %4342 = vmatprep.subr.bf16.mxu0 %v3170
        %4343 = vmatpush1.bf16.msra.mxu0 %v3169
        %4344 = vmatprep.subr.bf16.mxu0 %v3172
        %4345 = vmatpush1.bf16.msra.mxu0 %v3171
        %4346 = vmatprep.subr.bf16.mxu0 %v3174
        %4347 = vmatpush1.bf16.msra.mxu0 %v3173
        %4348 = vmatprep.subr.bf16.mxu0 %v3176
        %4349 = vmatpush1.bf16.msra.mxu0 %v3175
        %4350 = vmatprep.subr.bf16.mxu0 %v3178
        %4351 = vmatpush1.bf16.msra.mxu0 %v3177
        %4352 = vmatprep.subr.bf16.mxu0 %v3180
        %4353 = vmatpush1.bf16.msra.mxu0 %v3179
        %4354 = vmatprep.mubr.bf16.mxu0 %v1248
        %4355 = vmatmul.mubr.bf16.gmra.mrb[0].mxu0 %v1247
        %v4356 = vpop.f32.mrb[0].mxu0
        %v4357 = vadd.f32 %v4304, %v4356
        %v4358 = vpop.f32.mrb[0].mxu0
        %v4359 = vadd.f32 %v4306, %v4358
        %v4360 = vpop.f32.mrb[0].mxu0
        %v4361 = vadd.f32 %v4308, %v4360
        %v4362 = vpop.f32.mrb[0].mxu0
        %v4363 = vadd.f32 %v4310, %v4362
        %4364 = vmatprep.mubr.bf16.mxu0 %v1284
        %4365 = vmatmul.mubr.bf16.gmra.mrb[0].mxu0 %v1283
        %v4366 = vpop.f32.mrb[0].mxu0
        %v4367 = vadd.f32 %v4314, %v4366
        %v4368 = vpop.f32.mrb[0].mxu0
        %v4369 = vadd.f32 %v4316, %v4368
        %v4370 = vpop.f32.mrb[0].mxu0
        %v4371 = vadd.f32 %v4318, %v4370
        %v4372 = vpop.f32.mrb[0].mxu0
        %v4373 = vadd.f32 %v4320, %v4372
        %4374 = vdwg.mxu0
        %4375 = vmatprep.subr.bf16.mxu0 %v3182
        %4376 = vmatpush1.bf16.msra.mxu0 %v3181
        %4377 = vmatprep.subr.bf16.mxu0 %v3184
        %4378 = vmatpush1.bf16.msra.mxu0 %v3183
        %4379 = vmatprep.subr.bf16.mxu0 %v3186
        %4380 = vmatpush1.bf16.msra.mxu0 %v3185
        %4381 = vmatprep.subr.bf16.mxu0 %v3188
        %4382 = vmatpush1.bf16.msra.mxu0 %v3187
        %4383 = vmatprep.subr.bf16.mxu0 %v3190
        %4384 = vmatpush1.bf16.msra.mxu0 %v3189
        %4385 = vmatprep.subr.bf16.mxu0 %v3192
        %4386 = vmatpush1.bf16.msra.mxu0 %v3191
        %4387 = vmatprep.subr.bf16.mxu0 %v3194
        %4388 = vmatpush1.bf16.msra.mxu0 %v3193
        %4389 = vmatprep.subr.bf16.mxu0 %v3196
        %4390 = vmatpush1.bf16.msra.mxu0 %v3195
        %4391 = vmatprep.subr.bf16.mxu0 %v3198
        %4392 = vmatpush1.bf16.msra.mxu0 %v3197
        %4393 = vmatprep.subr.bf16.mxu0 %v3200
        %4394 = vmatpush1.bf16.msra.mxu0 %v3199
        %4395 = vmatprep.subr.bf16.mxu0 %v3202
        %4396 = vmatpush1.bf16.msra.mxu0 %v3201
        %4397 = vmatprep.subr.bf16.mxu0 %v3204
        %4398 = vmatpush1.bf16.msra.mxu0 %v3203
        %4399 = vmatprep.subr.bf16.mxu0 %v3206
        %4400 = vmatpush1.bf16.msra.mxu0 %v3205
        %4401 = vmatprep.subr.bf16.mxu0 %v3208
        %4402 = vmatpush1.bf16.msra.mxu0 %v3207
        %4403 = vmatprep.subr.bf16.mxu0 %v3210
        %4404 = vmatpush1.bf16.msra.mxu0 %v3209
        %4405 = vmatprep.subr.bf16.mxu0 %v3212
        %4406 = vmatpush1.bf16.msra.mxu0 %v3211
        %4407 = vmatprep.mubr.bf16.mxu0 %v1250
        %4408 = vmatmul.mubr.bf16.gmra.mrb[0].mxu0 %v1249
        %v4409 = vpop.f32.mrb[0].mxu0
        %v4410 = vadd.f32 %v4357, %v4409
        %v4411 = vpop.f32.mrb[0].mxu0
        %v4412 = vadd.f32 %v4359, %v4411
        %v4413 = vpop.f32.mrb[0].mxu0
        %v4414 = vadd.f32 %v4361, %v4413
        %v4415 = vpop.f32.mrb[0].mxu0
        %v4416 = vadd.f32 %v4363, %v4415
        %4417 = vmatprep.mubr.bf16.mxu0 %v1286
        %4418 = vmatmul.mubr.bf16.gmra.mrb[0].mxu0 %v1285
        %v4419 = vpop.f32.mrb[0].mxu0
        %v4420 = vadd.f32 %v4367, %v4419
        %v4421 = vpop.f32.mrb[0].mxu0
        %v4422 = vadd.f32 %v4369, %v4421
        %v4423 = vpop.f32.mrb[0].mxu0
        %v4424 = vadd.f32 %v4371, %v4423
        %v4425 = vpop.f32.mrb[0].mxu0
        %v4426 = vadd.f32 %v4373, %v4425
        %4427 = vdwg.mxu0
        %4428 = vmatprep.subr.bf16.mxu0 %v3214
        %4429 = vmatpush1.bf16.msra.mxu0 %v3213
        %4430 = vmatprep.subr.bf16.mxu0 %v3216
        %4431 = vmatpush1.bf16.msra.mxu0 %v3215
        %4432 = vmatprep.subr.bf16.mxu0 %v3218
        %4433 = vmatpush1.bf16.msra.mxu0 %v3217
        %4434 = vmatprep.subr.bf16.mxu0 %v3220
        %4435 = vmatpush1.bf16.msra.mxu0 %v3219
        %4436 = vmatprep.subr.bf16.mxu0 %v3222
        %4437 = vmatpush1.bf16.msra.mxu0 %v3221
        %4438 = vmatprep.subr.bf16.mxu0 %v3224
        %4439 = vmatpush1.bf16.msra.mxu0 %v3223
        %4440 = vmatprep.subr.bf16.mxu0 %v3226
        %4441 = vmatpush1.bf16.msra.mxu0 %v3225
        %4442 = vmatprep.subr.bf16.mxu0 %v3228
        %4443 = vmatpush1.bf16.msra.mxu0 %v3227
        %4444 = vmatprep.subr.bf16.mxu0 %v3230
        %4445 = vmatpush1.bf16.msra.mxu0 %v3229
        %4446 = vmatprep.subr.bf16.mxu0 %v3232
        %4447 = vmatpush1.bf16.msra.mxu0 %v3231
        %4448 = vmatprep.subr.bf16.mxu0 %v3234
        %4449 = vmatpush1.bf16.msra.mxu0 %v3233
        %4450 = vmatprep.subr.bf16.mxu0 %v3236
        %4451 = vmatpush1.bf16.msra.mxu0 %v3235
        %4452 = vmatprep.subr.bf16.mxu0 %v3238
        %4453 = vmatpush1.bf16.msra.mxu0 %v3237
        %4454 = vmatprep.subr.bf16.mxu0 %v3240
        %4455 = vmatpush1.bf16.msra.mxu0 %v3239
        %4456 = vmatprep.subr.bf16.mxu0 %v3242
        %4457 = vmatpush1.bf16.msra.mxu0 %v3241
        %4458 = vmatprep.subr.bf16.mxu0 %v3244
        %4459 = vmatpush1.bf16.msra.mxu0 %v3243
        %4460 = vmatprep.mubr.bf16.mxu0 %v1252
        %4461 = vmatmul.mubr.bf16.gmra.mrb[0].mxu0 %v1251
        %v4462 = vpop.f32.mrb[0].mxu0
        %v4463 = vadd.f32 %v4410, %v4462
        %v4464 = vpop.f32.mrb[0].mxu0
        %v4465 = vadd.f32 %v4412, %v4464
        %v4466 = vpop.f32.mrb[0].mxu0
        %v4467 = vadd.f32 %v4414, %v4466
        %v4468 = vpop.f32.mrb[0].mxu0
        %v4469 = vadd.f32 %v4416, %v4468
        %4470 = vmatprep.mubr.bf16.mxu0 %v1288
        %4471 = vmatmul.mubr.bf16.gmra.mrb[0].mxu0 %v1287
        %v4472 = vpop.f32.mrb[0].mxu0
        %v4473 = vadd.f32 %v4420, %v4472
        %v4474 = vpop.f32.mrb[0].mxu0
        %v4475 = vadd.f32 %v4422, %v4474
        %v4476 = vpop.f32.mrb[0].mxu0
        %v4477 = vadd.f32 %v4424, %v4476
        %v4478 = vpop.f32.mrb[0].mxu0
        %v4479 = vadd.f32 %v4426, %v4478
        %4480 = vdwg.mxu0
        %4481 = vmatprep.subr.bf16.mxu0 %v3246
        %4482 = vmatpush1.bf16.msra.mxu0 %v3245
        %4483 = vmatprep.subr.bf16.mxu0 %v3248
        %4484 = vmatpush1.bf16.msra.mxu0 %v3247
        %4485 = vmatprep.subr.bf16.mxu0 %v3250
        %4486 = vmatpush1.bf16.msra.mxu0 %v3249
        %4487 = vmatprep.subr.bf16.mxu0 %v3252
        %4488 = vmatpush1.bf16.msra.mxu0 %v3251
        %4489 = vmatprep.subr.bf16.mxu0 %v3254
        %4490 = vmatpush1.bf16.msra.mxu0 %v3253
        %4491 = vmatprep.subr.bf16.mxu0 %v3256
        %4492 = vmatpush1.bf16.msra.mxu0 %v3255
        %4493 = vmatprep.subr.bf16.mxu0 %v3258
        %4494 = vmatpush1.bf16.msra.mxu0 %v3257
        %4495 = vmatprep.subr.bf16.mxu0 %v3260
        %4496 = vmatpush1.bf16.msra.mxu0 %v3259
        %4497 = vmatprep.subr.bf16.mxu0 %v3262
        %4498 = vmatpush1.bf16.msra.mxu0 %v3261
        %4499 = vmatprep.subr.bf16.mxu0 %v3264
        %4500 = vmatpush1.bf16.msra.mxu0 %v3263
        %4501 = vmatprep.subr.bf16.mxu0 %v3266
        %4502 = vmatpush1.bf16.msra.mxu0 %v3265
        %4503 = vmatprep.subr.bf16.mxu0 %v3268
        %4504 = vmatpush1.bf16.msra.mxu0 %v3267
        %4505 = vmatprep.subr.bf16.mxu0 %v3270
        %4506 = vmatpush1.bf16.msra.mxu0 %v3269
        %4507 = vmatprep.subr.bf16.mxu0 %v3272
        %4508 = vmatpush1.bf16.msra.mxu0 %v3271
        %4509 = vmatprep.subr.bf16.mxu0 %v3274
        %4510 = vmatpush1.bf16.msra.mxu0 %v3273
        %4511 = vmatprep.subr.bf16.mxu0 %v3276
        %4512 = vmatpush1.bf16.msra.mxu0 %v3275
        %4513 = vmatprep.mubr.bf16.mxu0 %v1254
        %4514 = vmatmul.mubr.bf16.gmra.mrb[0].mxu0 %v1253
        %v4515 = vpop.f32.mrb[0].mxu0
        %v4516 = vadd.f32 %v4463, %v4515
        %v4517 = vpop.f32.mrb[0].mxu0
        %v4518 = vadd.f32 %v4465, %v4517
        %v4519 = vpop.f32.mrb[0].mxu0
        %v4520 = vadd.f32 %v4467, %v4519
        %v4521 = vpop.f32.mrb[0].mxu0
        %v4522 = vadd.f32 %v4469, %v4521
        %4523 = vmatprep.mubr.bf16.mxu0 %v1290
        %4524 = vmatmul.mubr.bf16.gmra.mrb[0].mxu0 %v1289
        %v4525 = vpop.f32.mrb[0].mxu0
        %v4526 = vadd.f32 %v4473, %v4525
        %v4527 = vpop.f32.mrb[0].mxu0
        %v4528 = vadd.f32 %v4475, %v4527
        %v4529 = vpop.f32.mrb[0].mxu0
        %v4530 = vadd.f32 %v4477, %v4529
        %v4531 = vpop.f32.mrb[0].mxu0
        %v4532 = vadd.f32 %v4479, %v4531
        %4533 = vdwg.mxu0
        %4534 = vmatprep.subr.bf16.mxu0 %v3278
        %4535 = vmatpush1.bf16.msra.mxu0 %v3277
        %4536 = vmatprep.subr.bf16.mxu0 %v3280
        %4537 = vmatpush1.bf16.msra.mxu0 %v3279
        %4538 = vmatprep.subr.bf16.mxu0 %v3282
        %4539 = vmatpush1.bf16.msra.mxu0 %v3281
        %4540 = vmatprep.subr.bf16.mxu0 %v3284
        %4541 = vmatpush1.bf16.msra.mxu0 %v3283
        %4542 = vmatprep.subr.bf16.mxu0 %v3286
        %4543 = vmatpush1.bf16.msra.mxu0 %v3285
        %4544 = vmatprep.subr.bf16.mxu0 %v3288
        %4545 = vmatpush1.bf16.msra.mxu0 %v3287
        %4546 = vmatprep.subr.bf16.mxu0 %v3290
        %4547 = vmatpush1.bf16.msra.mxu0 %v3289
        %4548 = vmatprep.subr.bf16.mxu0 %v3292
        %4549 = vmatpush1.bf16.msra.mxu0 %v3291
        %4550 = vmatprep.subr.bf16.mxu0 %v3294
        %4551 = vmatpush1.bf16.msra.mxu0 %v3293
        %4552 = vmatprep.subr.bf16.mxu0 %v3296
        %4553 = vmatpush1.bf16.msra.mxu0 %v3295
        %4554 = vmatprep.subr.bf16.mxu0 %v3298
        %4555 = vmatpush1.bf16.msra.mxu0 %v3297
        %4556 = vmatprep.subr.bf16.mxu0 %v3300
        %4557 = vmatpush1.bf16.msra.mxu0 %v3299
        %4558 = vmatprep.subr.bf16.mxu0 %v3302
        %4559 = vmatpush1.bf16.msra.mxu0 %v3301
        %4560 = vmatprep.subr.bf16.mxu0 %v3304
        %4561 = vmatpush1.bf16.msra.mxu0 %v3303
        %4562 = vmatprep.subr.bf16.mxu0 %v3306
        %4563 = vmatpush1.bf16.msra.mxu0 %v3305
        %4564 = vmatprep.subr.bf16.mxu0 %v3308
        %4565 = vmatpush1.bf16.msra.mxu0 %v3307
        %4566 = vmatprep.mubr.bf16.mxu0 %v1256
        %4567 = vmatmul.mubr.bf16.gmra.mrb[0].mxu0 %v1255
        %v4568 = vpop.f32.mrb[0].mxu0
        %v4569 = vadd.f32 %v4516, %v4568
        %v4570 = vpop.f32.mrb[0].mxu0
        %v4571 = vadd.f32 %v4518, %v4570
        %v4572 = vpop.f32.mrb[0].mxu0
        %v4573 = vadd.f32 %v4520, %v4572
        %v4574 = vpop.f32.mrb[0].mxu0
        %v4575 = vadd.f32 %v4522, %v4574
        %4576 = vmatprep.mubr.bf16.mxu0 %v1292
        %4577 = vmatmul.mubr.bf16.gmra.mrb[0].mxu0 %v1291
        %v4578 = vpop.f32.mrb[0].mxu0
        %v4579 = vadd.f32 %v4526, %v4578
        %v4580 = vpop.f32.mrb[0].mxu0
        %v4581 = vadd.f32 %v4528, %v4580
        %v4582 = vpop.f32.mrb[0].mxu0
        %v4583 = vadd.f32 %v4530, %v4582
        %v4584 = vpop.f32.mrb[0].mxu0
        %v4585 = vadd.f32 %v4532, %v4584
        %4586 = vdwg.mxu0
        %4587 = vmatprep.subr.bf16.mxu0 %v3310
        %4588 = vmatpush1.bf16.msra.mxu0 %v3309
        %4589 = vmatprep.subr.bf16.mxu0 %v3312
        %4590 = vmatpush1.bf16.msra.mxu0 %v3311
        %4591 = vmatprep.subr.bf16.mxu0 %v3314
        %4592 = vmatpush1.bf16.msra.mxu0 %v3313
        %4593 = vmatprep.subr.bf16.mxu0 %v3316
        %4594 = vmatpush1.bf16.msra.mxu0 %v3315
        %4595 = vmatprep.subr.bf16.mxu0 %v3318
        %4596 = vmatpush1.bf16.msra.mxu0 %v3317
        %4597 = vmatprep.subr.bf16.mxu0 %v3320
        %4598 = vmatpush1.bf16.msra.mxu0 %v3319
        %4599 = vmatprep.subr.bf16.mxu0 %v3322
        %4600 = vmatpush1.bf16.msra.mxu0 %v3321
        %4601 = vmatprep.subr.bf16.mxu0 %v3324
        %4602 = vmatpush1.bf16.msra.mxu0 %v3323
        %4603 = vmatprep.subr.bf16.mxu0 %v3326
        %4604 = vmatpush1.bf16.msra.mxu0 %v3325
        %4605 = vmatprep.subr.bf16.mxu0 %v3328
        %4606 = vmatpush1.bf16.msra.mxu0 %v3327
        %4607 = vmatprep.subr.bf16.mxu0 %v3330
        %4608 = vmatpush1.bf16.msra.mxu0 %v3329
        %4609 = vmatprep.subr.bf16.mxu0 %v3332
        %4610 = vmatpush1.bf16.msra.mxu0 %v3331
        %4611 = vmatprep.subr.bf16.mxu0 %v3334
        %4612 = vmatpush1.bf16.msra.mxu0 %v3333
        %4613 = vmatprep.subr.bf16.mxu0 %v3336
        %4614 = vmatpush1.bf16.msra.mxu0 %v3335
        %4615 = vmatprep.subr.bf16.mxu0 %v3338
        %4616 = vmatpush1.bf16.msra.mxu0 %v3337
        %4617 = vmatprep.subr.bf16.mxu0 %v3340
        %4618 = vmatpush1.bf16.msra.mxu0 %v3339
        %4619 = vmatprep.mubr.bf16.mxu0 %v1258
        %4620 = vmatmul.mubr.bf16.gmra.mrb[0].mxu0 %v1257
        %v4621 = vpop.f32.mrb[0].mxu0
        %v4622 = vadd.f32 %v4569, %v4621
        %v4623 = vpop.f32.mrb[0].mxu0
        %v4624 = vadd.f32 %v4571, %v4623
        %v4625 = vpop.f32.mrb[0].mxu0
        %v4626 = vadd.f32 %v4573, %v4625
        %v4627 = vpop.f32.mrb[0].mxu0
        %v4628 = vadd.f32 %v4575, %v4627
        %4629 = vmatprep.mubr.bf16.mxu0 %v1294
        %4630 = vmatmul.mubr.bf16.gmra.mrb[0].mxu0 %v1293
        %v4631 = vpop.f32.mrb[0].mxu0
        %v4632 = vadd.f32 %v4579, %v4631
        %v4633 = vpop.f32.mrb[0].mxu0
        %v4634 = vadd.f32 %v4581, %v4633
        %v4635 = vpop.f32.mrb[0].mxu0
        %v4636 = vadd.f32 %v4583, %v4635
        %v4637 = vpop.f32.mrb[0].mxu0
        %v4638 = vadd.f32 %v4585, %v4637
        %4639 = vdwg.mxu0
        %4640 = vmatprep.subr.bf16.mxu0 %v3342
        %4641 = vmatpush1.bf16.msra.mxu0 %v3341
        %4642 = vmatprep.subr.bf16.mxu0 %v3344
        %4643 = vmatpush1.bf16.msra.mxu0 %v3343
        %4644 = vmatprep.subr.bf16.mxu0 %v3346
        %4645 = vmatpush1.bf16.msra.mxu0 %v3345
        %4646 = vmatprep.subr.bf16.mxu0 %v3348
        %4647 = vmatpush1.bf16.msra.mxu0 %v3347
        %4648 = vmatprep.subr.bf16.mxu0 %v3350
        %4649 = vmatpush1.bf16.msra.mxu0 %v3349
        %4650 = vmatprep.subr.bf16.mxu0 %v3352
        %4651 = vmatpush1.bf16.msra.mxu0 %v3351
        %4652 = vmatprep.subr.bf16.mxu0 %v3354
        %4653 = vmatpush1.bf16.msra.mxu0 %v3353
        %4654 = vmatprep.subr.bf16.mxu0 %v3356
        %4655 = vmatpush1.bf16.msra.mxu0 %v3355
        %4656 = vmatprep.subr.bf16.mxu0 %v3358
        %4657 = vmatpush1.bf16.msra.mxu0 %v3357
        %4658 = vmatprep.subr.bf16.mxu0 %v3360
        %4659 = vmatpush1.bf16.msra.mxu0 %v3359
        %4660 = vmatprep.subr.bf16.mxu0 %v3362
        %4661 = vmatpush1.bf16.msra.mxu0 %v3361
        %4662 = vmatprep.subr.bf16.mxu0 %v3364
        %4663 = vmatpush1.bf16.msra.mxu0 %v3363
        %4664 = vmatprep.subr.bf16.mxu0 %v3366
        %4665 = vmatpush1.bf16.msra.mxu0 %v3365
        %4666 = vmatprep.subr.bf16.mxu0 %v3368
        %4667 = vmatpush1.bf16.msra.mxu0 %v3367
        %4668 = vmatprep.subr.bf16.mxu0 %v3370
        %4669 = vmatpush1.bf16.msra.mxu0 %v3369
        %4670 = vmatprep.subr.bf16.mxu0 %v3372
        %4671 = vmatpush1.bf16.msra.mxu0 %v3371
        %4672 = vmatprep.mubr.bf16.mxu0 %v1260
        %4673 = vmatmul.mubr.bf16.gmra.mrb[0].mxu0 %v1259
        %v4674 = vpop.f32.mrb[0].mxu0
        %v4675 = vadd.f32 %v4622, %v4674
        %v4676 = vpop.f32.mrb[0].mxu0
        %v4677 = vadd.f32 %v4624, %v4676
        %v4678 = vpop.f32.mrb[0].mxu0
        %v4679 = vadd.f32 %v4626, %v4678
        %v4680 = vpop.f32.mrb[0].mxu0
        %v4681 = vadd.f32 %v4628, %v4680
        %4682 = vmatprep.mubr.bf16.mxu0 %v1296
        %4683 = vmatmul.mubr.bf16.gmra.mrb[0].mxu0 %v1295
        %v4684 = vpop.f32.mrb[0].mxu0
        %v4685 = vadd.f32 %v4632, %v4684
        %v4686 = vpop.f32.mrb[0].mxu0
        %v4687 = vadd.f32 %v4634, %v4686
        %v4688 = vpop.f32.mrb[0].mxu0
        %v4689 = vadd.f32 %v4636, %v4688
        %v4690 = vpop.f32.mrb[0].mxu0
        %v4691 = vadd.f32 %v4638, %v4690
        %4692 = vdwg.mxu0
        %4693 = vmatprep.subr.bf16.mxu0 %v3374
        %4694 = vmatpush1.bf16.msra.mxu0 %v3373
        %4695 = vmatprep.subr.bf16.mxu0 %v3376
        %4696 = vmatpush1.bf16.msra.mxu0 %v3375
        %4697 = vmatprep.subr.bf16.mxu0 %v3378
        %4698 = vmatpush1.bf16.msra.mxu0 %v3377
        %4699 = vmatprep.subr.bf16.mxu0 %v3380
        %4700 = vmatpush1.bf16.msra.mxu0 %v3379
        %4701 = vmatprep.subr.bf16.mxu0 %v3382
        %4702 = vmatpush1.bf16.msra.mxu0 %v3381
        %4703 = vmatprep.subr.bf16.mxu0 %v3384
        %4704 = vmatpush1.bf16.msra.mxu0 %v3383
        %4705 = vmatprep.subr.bf16.mxu0 %v3386
        %4706 = vmatpush1.bf16.msra.mxu0 %v3385
        %4707 = vmatprep.subr.bf16.mxu0 %v3388
        %4708 = vmatpush1.bf16.msra.mxu0 %v3387
        %4709 = vmatprep.subr.bf16.mxu0 %v3390
        %4710 = vmatpush1.bf16.msra.mxu0 %v3389
        %4711 = vmatprep.subr.bf16.mxu0 %v3392
        %4712 = vmatpush1.bf16.msra.mxu0 %v3391
        %4713 = vmatprep.subr.bf16.mxu0 %v3394
        %4714 = vmatpush1.bf16.msra.mxu0 %v3393
        %4715 = vmatprep.subr.bf16.mxu0 %v3396
        %4716 = vmatpush1.bf16.msra.mxu0 %v3395
        %4717 = vmatprep.subr.bf16.mxu0 %v3398
        %4718 = vmatpush1.bf16.msra.mxu0 %v3397
        %4719 = vmatprep.subr.bf16.mxu0 %v3400
        %4720 = vmatpush1.bf16.msra.mxu0 %v3399
        %4721 = vmatprep.subr.bf16.mxu0 %v3402
        %4722 = vmatpush1.bf16.msra.mxu0 %v3401
        %4723 = vmatprep.subr.bf16.mxu0 %v3404
        %4724 = vmatpush1.bf16.msra.mxu0 %v3403
        %4725 = vmatprep.mubr.bf16.mxu0 %v1262
        %4726 = vmatmul.mubr.bf16.gmra.mrb[0].mxu0 %v1261
        %v4727 = vpop.f32.mrb[0].mxu0
        %v4728 = vadd.f32 %v4675, %v4727
        %v4729 = vpop.f32.mrb[0].mxu0
        %v4730 = vadd.f32 %v4677, %v4729
        %v4731 = vpop.f32.mrb[0].mxu0
        %v4732 = vadd.f32 %v4679, %v4731
        %v4733 = vpop.f32.mrb[0].mxu0
        %v4734 = vadd.f32 %v4681, %v4733
        %4735 = vmatprep.mubr.bf16.mxu0 %v1298
        %4736 = vmatmul.mubr.bf16.gmra.mrb[0].mxu0 %v1297
        %v4737 = vpop.f32.mrb[0].mxu0
        %v4738 = vadd.f32 %v4685, %v4737
        %v4739 = vpop.f32.mrb[0].mxu0
        %v4740 = vadd.f32 %v4687, %v4739
        %v4741 = vpop.f32.mrb[0].mxu0
        %v4742 = vadd.f32 %v4689, %v4741
        %v4743 = vpop.f32.mrb[0].mxu0
        %v4744 = vadd.f32 %v4691, %v4743
        %4745 = vdwg.mxu0
        %4746 = vmatprep.subr.bf16.mxu0 %v3406
        %4747 = vmatpush1.bf16.msra.mxu0 %v3405
        %4748 = vmatprep.subr.bf16.mxu0 %v3408
        %4749 = vmatpush1.bf16.msra.mxu0 %v3407
        %4750 = vmatprep.subr.bf16.mxu0 %v3410
        %4751 = vmatpush1.bf16.msra.mxu0 %v3409
        %4752 = vmatprep.subr.bf16.mxu0 %v3412
        %4753 = vmatpush1.bf16.msra.mxu0 %v3411
        %4754 = vmatprep.subr.bf16.mxu0 %v3414
        %4755 = vmatpush1.bf16.msra.mxu0 %v3413
        %4756 = vmatprep.subr.bf16.mxu0 %v3416
        %4757 = vmatpush1.bf16.msra.mxu0 %v3415
        %4758 = vmatprep.subr.bf16.mxu0 %v3418
        %4759 = vmatpush1.bf16.msra.mxu0 %v3417
        %4760 = vmatprep.subr.bf16.mxu0 %v3420
        %4761 = vmatpush1.bf16.msra.mxu0 %v3419
        %4762 = vmatprep.subr.bf16.mxu0 %v3422
        %4763 = vmatpush1.bf16.msra.mxu0 %v3421
        %4764 = vmatprep.subr.bf16.mxu0 %v3424
        %4765 = vmatpush1.bf16.msra.mxu0 %v3423
        %4766 = vmatprep.subr.bf16.mxu0 %v3426
        %4767 = vmatpush1.bf16.msra.mxu0 %v3425
        %4768 = vmatprep.subr.bf16.mxu0 %v3428
        %4769 = vmatpush1.bf16.msra.mxu0 %v3427
        %4770 = vmatprep.subr.bf16.mxu0 %v3430
        %4771 = vmatpush1.bf16.msra.mxu0 %v3429
        %4772 = vmatprep.subr.bf16.mxu0 %v3432
        %4773 = vmatpush1.bf16.msra.mxu0 %v3431
        %4774 = vmatprep.subr.bf16.mxu0 %v3434
        %4775 = vmatpush1.bf16.msra.mxu0 %v3433
        %4776 = vmatprep.subr.bf16.mxu0 %v3436
        %4777 = vmatpush1.bf16.msra.mxu0 %v3435
        %4778 = vmatprep.mubr.bf16.mxu0 %v1264
        %4779 = vmatmul.mubr.bf16.gmra.mrb[0].mxu0 %v1263
        %v4780 = vpop.f32.mrb[0].mxu0
        %v4781 = vadd.f32 %v4728, %v4780
        %v4782 = vpop.f32.mrb[0].mxu0
        %v4783 = vadd.f32 %v4730, %v4782
        %v4784 = vpop.f32.mrb[0].mxu0
        %v4785 = vadd.f32 %v4732, %v4784
        %v4786 = vpop.f32.mrb[0].mxu0
        %v4787 = vadd.f32 %v4734, %v4786
        %4788 = vmatprep.mubr.bf16.mxu0 %v1300
        %4789 = vmatmul.mubr.bf16.gmra.mrb[0].mxu0 %v1299
        %v4790 = vpop.f32.mrb[0].mxu0
        %v4791 = vadd.f32 %v4738, %v4790
        %v4792 = vpop.f32.mrb[0].mxu0
        %v4793 = vadd.f32 %v4740, %v4792
        %v4794 = vpop.f32.mrb[0].mxu0
        %v4795 = vadd.f32 %v4742, %v4794
        %v4796 = vpop.f32.mrb[0].mxu0
        %v4797 = vadd.f32 %v4744, %v4796
        %4798 = vdwg.mxu0
        %4799 = vmatprep.subr.bf16.mxu0 %v3438
        %4800 = vmatpush1.bf16.msra.mxu0 %v3437
        %4801 = vmatprep.subr.bf16.mxu0 %v3440
        %4802 = vmatpush1.bf16.msra.mxu0 %v3439
        %4803 = vmatprep.subr.bf16.mxu0 %v3442
        %4804 = vmatpush1.bf16.msra.mxu0 %v3441
        %4805 = vmatprep.subr.bf16.mxu0 %v3444
        %4806 = vmatpush1.bf16.msra.mxu0 %v3443
        %4807 = vmatprep.subr.bf16.mxu0 %v3446
        %4808 = vmatpush1.bf16.msra.mxu0 %v3445
        %4809 = vmatprep.subr.bf16.mxu0 %v3448
        %4810 = vmatpush1.bf16.msra.mxu0 %v3447
        %4811 = vmatprep.subr.bf16.mxu0 %v3450
        %4812 = vmatpush1.bf16.msra.mxu0 %v3449
        %4813 = vmatprep.subr.bf16.mxu0 %v3452
        %4814 = vmatpush1.bf16.msra.mxu0 %v3451
        %4815 = vmatprep.subr.bf16.mxu0 %v3454
        %4816 = vmatpush1.bf16.msra.mxu0 %v3453
        %4817 = vmatprep.subr.bf16.mxu0 %v3456
        %4818 = vmatpush1.bf16.msra.mxu0 %v3455
        %4819 = vmatprep.subr.bf16.mxu0 %v3458
        %4820 = vmatpush1.bf16.msra.mxu0 %v3457
        %4821 = vmatprep.subr.bf16.mxu0 %v3460
        %4822 = vmatpush1.bf16.msra.mxu0 %v3459
        %4823 = vmatprep.subr.bf16.mxu0 %v3462
        %4824 = vmatpush1.bf16.msra.mxu0 %v3461
        %4825 = vmatprep.subr.bf16.mxu0 %v3464
        %4826 = vmatpush1.bf16.msra.mxu0 %v3463
        %4827 = vmatprep.subr.bf16.mxu0 %v3466
        %4828 = vmatpush1.bf16.msra.mxu0 %v3465
        %4829 = vmatprep.subr.bf16.mxu0 %v3468
        %4830 = vmatpush1.bf16.msra.mxu0 %v3467
        %4831 = vmatprep.mubr.bf16.mxu0 %v1266
        %4832 = vmatmul.mubr.bf16.gmra.mrb[0].mxu0 %v1265
        %v4833 = vpop.f32.mrb[0].mxu0
        %v4834 = vadd.f32 %v4781, %v4833
        %v4835 = vpop.f32.mrb[0].mxu0
        %v4836 = vadd.f32 %v4783, %v4835
        %v4837 = vpop.f32.mrb[0].mxu0
        %v4838 = vadd.f32 %v4785, %v4837
        %v4839 = vpop.f32.mrb[0].mxu0
        %v4840 = vadd.f32 %v4787, %v4839
        %4841 = vmatprep.mubr.bf16.mxu0 %v1302
        %4842 = vmatmul.mubr.bf16.gmra.mrb[0].mxu0 %v1301
        %v4843 = vpop.f32.mrb[0].mxu0
        %v4844 = vadd.f32 %v4791, %v4843
        %v4845 = vpop.f32.mrb[0].mxu0
        %v4846 = vadd.f32 %v4793, %v4845
        %v4847 = vpop.f32.mrb[0].mxu0
        %v4848 = vadd.f32 %v4795, %v4847
        %v4849 = vpop.f32.mrb[0].mxu0
        %v4850 = vadd.f32 %v4797, %v4849
        %4851 = vdwg.mxu0
        %4852 = vmatprep.subr.bf16.mxu0 %v3470
        %4853 = vmatpush1.bf16.msra.mxu0 %v3469
        %4854 = vmatprep.subr.bf16.mxu0 %v3472
        %4855 = vmatpush1.bf16.msra.mxu0 %v3471
        %4856 = vmatprep.subr.bf16.mxu0 %v3474
        %4857 = vmatpush1.bf16.msra.mxu0 %v3473
        %4858 = vmatprep.subr.bf16.mxu0 %v3476
        %4859 = vmatpush1.bf16.msra.mxu0 %v3475
        %4860 = vmatprep.subr.bf16.mxu0 %v3478
        %4861 = vmatpush1.bf16.msra.mxu0 %v3477
        %4862 = vmatprep.subr.bf16.mxu0 %v3480
        %4863 = vmatpush1.bf16.msra.mxu0 %v3479
        %4864 = vmatprep.subr.bf16.mxu0 %v3482
        %4865 = vmatpush1.bf16.msra.mxu0 %v3481
        %4866 = vmatprep.subr.bf16.mxu0 %v3484
        %4867 = vmatpush1.bf16.msra.mxu0 %v3483
        %4868 = vmatprep.subr.bf16.mxu0 %v3486
        %4869 = vmatpush1.bf16.msra.mxu0 %v3485
        %4870 = vmatprep.subr.bf16.mxu0 %v3488
        %4871 = vmatpush1.bf16.msra.mxu0 %v3487
        %4872 = vmatprep.subr.bf16.mxu0 %v3490
        %4873 = vmatpush1.bf16.msra.mxu0 %v3489
        %4874 = vmatprep.subr.bf16.mxu0 %v3492
        %4875 = vmatpush1.bf16.msra.mxu0 %v3491
        %4876 = vmatprep.subr.bf16.mxu0 %v3494
        %4877 = vmatpush1.bf16.msra.mxu0 %v3493
        %4878 = vmatprep.subr.bf16.mxu0 %v3496
        %4879 = vmatpush1.bf16.msra.mxu0 %v3495
        %4880 = vmatprep.subr.bf16.mxu0 %v3498
        %4881 = vmatpush1.bf16.msra.mxu0 %v3497
        %4882 = vmatprep.subr.bf16.mxu0 %v3500
        %4883 = vmatpush1.bf16.msra.mxu0 %v3499
        %4884 = vmatprep.mubr.bf16.mxu0 %v1268
        %4885 = vmatmul.mubr.bf16.gmra.mrb[0].mxu0 %v1267
        %v4886 = vpop.f32.mrb[0].mxu0
        %v4887 = vadd.f32 %v4834, %v4886
        %v4888 = vpop.f32.mrb[0].mxu0
        %v4889 = vadd.f32 %v4836, %v4888
        %v4890 = vpop.f32.mrb[0].mxu0
        %v4891 = vadd.f32 %v4838, %v4890
        %v4892 = vpop.f32.mrb[0].mxu0
        %v4893 = vadd.f32 %v4840, %v4892
        %4894 = vmatprep.mubr.bf16.mxu0 %v1304
        %4895 = vmatmul.mubr.bf16.gmra.mrb[0].mxu0 %v1303
        %v4896 = vpop.f32.mrb[0].mxu0
        %v4897 = vadd.f32 %v4844, %v4896
        %v4898 = vpop.f32.mrb[0].mxu0
        %v4899 = vadd.f32 %v4846, %v4898
        %v4900 = vpop.f32.mrb[0].mxu0
        %v4901 = vadd.f32 %v4848, %v4900
        %v4902 = vpop.f32.mrb[0].mxu0
        %v4903 = vadd.f32 %v4850, %v4902
        %4904 = vdwg.mxu0
        %4905 = vmatprep.subr.bf16.mxu0 %v3502
        %4906 = vmatpush1.bf16.msra.mxu0 %v3501
        %4907 = vmatprep.subr.bf16.mxu0 %v3504
        %4908 = vmatpush1.bf16.msra.mxu0 %v3503
        %4909 = vmatprep.subr.bf16.mxu0 %v3506
        %4910 = vmatpush1.bf16.msra.mxu0 %v3505
        %4911 = vmatprep.subr.bf16.mxu0 %v3508
        %4912 = vmatpush1.bf16.msra.mxu0 %v3507
        %4913 = vmatprep.subr.bf16.mxu0 %v3510
        %4914 = vmatpush1.bf16.msra.mxu0 %v3509
        %4915 = vmatprep.subr.bf16.mxu0 %v3512
        %4916 = vmatpush1.bf16.msra.mxu0 %v3511
        %4917 = vmatprep.subr.bf16.mxu0 %v3514
        %4918 = vmatpush1.bf16.msra.mxu0 %v3513
        %4919 = vmatprep.subr.bf16.mxu0 %v3516
        %4920 = vmatpush1.bf16.msra.mxu0 %v3515
        %4921 = vmatprep.subr.bf16.mxu0 %v3518
        %4922 = vmatpush1.bf16.msra.mxu0 %v3517
        %4923 = vmatprep.subr.bf16.mxu0 %v3520
        %4924 = vmatpush1.bf16.msra.mxu0 %v3519
        %4925 = vmatprep.subr.bf16.mxu0 %v3522
        %4926 = vmatpush1.bf16.msra.mxu0 %v3521
        %4927 = vmatprep.subr.bf16.mxu0 %v3524
        %4928 = vmatpush1.bf16.msra.mxu0 %v3523
        %4929 = vmatprep.subr.bf16.mxu0 %v3526
        %4930 = vmatpush1.bf16.msra.mxu0 %v3525
        %4931 = vmatprep.subr.bf16.mxu0 %v3528
        %4932 = vmatpush1.bf16.msra.mxu0 %v3527
        %4933 = vmatprep.subr.bf16.mxu0 %v3530
        %4934 = vmatpush1.bf16.msra.mxu0 %v3529
        %4935 = vmatprep.subr.bf16.mxu0 %v3532
        %4936 = vmatpush1.bf16.msra.mxu0 %v3531
        %4937 = vmatprep.mubr.bf16.mxu0 %v1270
        %4938 = vmatmul.mubr.bf16.gmra.mrb[0].mxu0 %v1269
        %v4939 = vpop.f32.mrb[0].mxu0
        %v4940 = vadd.f32 %v4887, %v4939
        %v4941 = vpop.f32.mrb[0].mxu0
        %v4942 = vadd.f32 %v4889, %v4941
        %v4943 = vpop.f32.mrb[0].mxu0
        %v4944 = vadd.f32 %v4891, %v4943
        %v4945 = vpop.f32.mrb[0].mxu0
        %v4946 = vadd.f32 %v4893, %v4945
        %4947 = vmatprep.mubr.bf16.mxu0 %v1306
        %4948 = vmatmul.mubr.bf16.gmra.mrb[0].mxu0 %v1305
        %v4949 = vpop.f32.mrb[0].mxu0
        %v4950 = vadd.f32 %v4897, %v4949
        %v4951 = vpop.f32.mrb[0].mxu0
        %v4952 = vadd.f32 %v4899, %v4951
        %v4953 = vpop.f32.mrb[0].mxu0
        %v4954 = vadd.f32 %v4901, %v4953
        %v4955 = vpop.f32.mrb[0].mxu0
        %v4956 = vadd.f32 %v4903, %v4955
        %4957 = vdwg.mxu0
        %4958 = vmatprep.subr.bf16.mxu0 %v3534
        %4959 = vmatpush1.bf16.msra.mxu0 %v3533
        %4960 = vmatprep.subr.bf16.mxu0 %v3536
        %4961 = vmatpush1.bf16.msra.mxu0 %v3535
        %4962 = vmatprep.subr.bf16.mxu0 %v3538
        %4963 = vmatpush1.bf16.msra.mxu0 %v3537
        %4964 = vmatprep.subr.bf16.mxu0 %v3540
        %4965 = vmatpush1.bf16.msra.mxu0 %v3539
        %4966 = vmatprep.subr.bf16.mxu0 %v3542
        %4967 = vmatpush1.bf16.msra.mxu0 %v3541
        %4968 = vmatprep.subr.bf16.mxu0 %v3544
        %4969 = vmatpush1.bf16.msra.mxu0 %v3543
        %4970 = vmatprep.subr.bf16.mxu0 %v3546
        %4971 = vmatpush1.bf16.msra.mxu0 %v3545
        %4972 = vmatprep.subr.bf16.mxu0 %v3548
        %4973 = vmatpush1.bf16.msra.mxu0 %v3547
        %4974 = vmatprep.subr.bf16.mxu0 %v3550
        %4975 = vmatpush1.bf16.msra.mxu0 %v3549
        %4976 = vmatprep.subr.bf16.mxu0 %v3552
        %4977 = vmatpush1.bf16.msra.mxu0 %v3551
        %4978 = vmatprep.subr.bf16.mxu0 %v3554
        %4979 = vmatpush1.bf16.msra.mxu0 %v3553
        %4980 = vmatprep.subr.bf16.mxu0 %v3556
        %4981 = vmatpush1.bf16.msra.mxu0 %v3555
        %4982 = vmatprep.subr.bf16.mxu0 %v3558
        %4983 = vmatpush1.bf16.msra.mxu0 %v3557
        %4984 = vmatprep.subr.bf16.mxu0 %v3560
        %4985 = vmatpush1.bf16.msra.mxu0 %v3559
        %4986 = vmatprep.subr.bf16.mxu0 %v3562
        %4987 = vmatpush1.bf16.msra.mxu0 %v3561
        %4988 = vmatprep.subr.bf16.mxu0 %v3564
        %4989 = vmatpush1.bf16.msra.mxu0 %v3563
        %4990 = vmatprep.mubr.bf16.mxu0 %v1272
        %4991 = vmatmul.mubr.bf16.gmra.mrb[0].mxu0 %v1271
        %v4992 = vpop.f32.mrb[0].mxu0
        %v4993 = vadd.f32 %v4940, %v4992
        %v4994 = vpop.f32.mrb[0].mxu0
        %v4995 = vadd.f32 %v4942, %v4994
        %v4996 = vpop.f32.mrb[0].mxu0
        %v4997 = vadd.f32 %v4944, %v4996
        %v4998 = vpop.f32.mrb[0].mxu0
        %v4999 = vadd.f32 %v4946, %v4998
        %5000 = vmatprep.mubr.bf16.mxu0 %v1308
        %5001 = vmatmul.mubr.bf16.gmra.mrb[0].mxu0 %v1307
        %v5002 = vpop.f32.mrb[0].mxu0
        %v5003 = vadd.f32 %v4950, %v5002
        %v5004 = vpop.f32.mrb[0].mxu0
        %v5005 = vadd.f32 %v4952, %v5004
        %v5006 = vpop.f32.mrb[0].mxu0
        %v5007 = vadd.f32 %v4954, %v5006
        %v5008 = vpop.f32.mrb[0].mxu0
        %v5009 = vadd.f32 %v4956, %v5008
        %5010 = vdwg.mxu0
        %5011 = vmatprep.subr.bf16.mxu0 %v3566
        %5012 = vmatpush1.bf16.msra.mxu0 %v3565
        %5013 = vmatprep.subr.bf16.mxu0 %v3568
        %5014 = vmatpush1.bf16.msra.mxu0 %v3567
        %5015 = vmatprep.subr.bf16.mxu0 %v3570
        %5016 = vmatpush1.bf16.msra.mxu0 %v3569
        %5017 = vmatprep.subr.bf16.mxu0 %v3572
        %5018 = vmatpush1.bf16.msra.mxu0 %v3571
        %5019 = vmatprep.subr.bf16.mxu0 %v3574
        %5020 = vmatpush1.bf16.msra.mxu0 %v3573
        %5021 = vmatprep.subr.bf16.mxu0 %v3576
        %5022 = vmatpush1.bf16.msra.mxu0 %v3575
        %5023 = vmatprep.subr.bf16.mxu0 %v3578
        %5024 = vmatpush1.bf16.msra.mxu0 %v3577
        %5025 = vmatprep.subr.bf16.mxu0 %v3580
        %5026 = vmatpush1.bf16.msra.mxu0 %v3579
        %5027 = vmatprep.subr.bf16.mxu0 %v3582
        %5028 = vmatpush1.bf16.msra.mxu0 %v3581
        %5029 = vmatprep.subr.bf16.mxu0 %v3584
        %5030 = vmatpush1.bf16.msra.mxu0 %v3583
        %5031 = vmatprep.subr.bf16.mxu0 %v3586
        %5032 = vmatpush1.bf16.msra.mxu0 %v3585
        %5033 = vmatprep.subr.bf16.mxu0 %v3588
        %5034 = vmatpush1.bf16.msra.mxu0 %v3587
        %5035 = vmatprep.subr.bf16.mxu0 %v3590
        %5036 = vmatpush1.bf16.msra.mxu0 %v3589
        %5037 = vmatprep.subr.bf16.mxu0 %v3592
        %5038 = vmatpush1.bf16.msra.mxu0 %v3591
        %5039 = vmatprep.subr.bf16.mxu0 %v3594
        %5040 = vmatpush1.bf16.msra.mxu0 %v3593
        %5041 = vmatprep.subr.bf16.mxu0 %v3596
        %5042 = vmatpush1.bf16.msra.mxu0 %v3595
        %5043 = vmatprep.mubr.bf16.mxu0 %v1274
        %5044 = vmatmul.mubr.bf16.gmra.mrb[0].mxu0 %v1273
        %v5045 = vpop.f32.mrb[0].mxu0
        %v5046 = vadd.f32 %v4993, %v5045
        %v5047 = vpop.f32.mrb[0].mxu0
        %v5048 = vadd.f32 %v4995, %v5047
        %v5049 = vpop.f32.mrb[0].mxu0
        %v5050 = vadd.f32 %v4997, %v5049
        %v5051 = vpop.f32.mrb[0].mxu0
        %v5052 = vadd.f32 %v4999, %v5051
        %5053 = vmatprep.mubr.bf16.mxu0 %v1310
        %5054 = vmatmul.mubr.bf16.gmra.mrb[0].mxu0 %v1309
        %v5055 = vpop.f32.mrb[0].mxu0
        %v5056 = vadd.f32 %v5003, %v5055
        %v5057 = vpop.f32.mrb[0].mxu0
        %v5058 = vadd.f32 %v5005, %v5057
        %v5059 = vpop.f32.mrb[0].mxu0
        %v5060 = vadd.f32 %v5007, %v5059
        %v5061 = vpop.f32.mrb[0].mxu0
        %v5062 = vadd.f32 %v5009, %v5061
        %5063 = vdwg.mxu0
        %5064 = vmatprep.subr.bf16.mxu0 %v3598
        %5065 = vmatpush1.bf16.msra.mxu0 %v3597
        %5066 = vmatprep.subr.bf16.mxu0 %v3600
        %5067 = vmatpush1.bf16.msra.mxu0 %v3599
        %5068 = vmatprep.subr.bf16.mxu0 %v3602
        %5069 = vmatpush1.bf16.msra.mxu0 %v3601
        %5070 = vmatprep.subr.bf16.mxu0 %v3604
        %5071 = vmatpush1.bf16.msra.mxu0 %v3603
        %5072 = vmatprep.subr.bf16.mxu0 %v3606
        %5073 = vmatpush1.bf16.msra.mxu0 %v3605
        %5074 = vmatprep.subr.bf16.mxu0 %v3608
        %5075 = vmatpush1.bf16.msra.mxu0 %v3607
        %5076 = vmatprep.subr.bf16.mxu0 %v3610
        %5077 = vmatpush1.bf16.msra.mxu0 %v3609
        %5078 = vmatprep.subr.bf16.mxu0 %v3612
        %5079 = vmatpush1.bf16.msra.mxu0 %v3611
        %5080 = vmatprep.subr.bf16.mxu0 %v3614
        %5081 = vmatpush1.bf16.msra.mxu0 %v3613
        %5082 = vmatprep.subr.bf16.mxu0 %v3616
        %5083 = vmatpush1.bf16.msra.mxu0 %v3615
        %5084 = vmatprep.subr.bf16.mxu0 %v3618
        %5085 = vmatpush1.bf16.msra.mxu0 %v3617
        %5086 = vmatprep.subr.bf16.mxu0 %v3620
        %5087 = vmatpush1.bf16.msra.mxu0 %v3619
        %5088 = vmatprep.subr.bf16.mxu0 %v3622
        %5089 = vmatpush1.bf16.msra.mxu0 %v3621
        %5090 = vmatprep.subr.bf16.mxu0 %v3624
        %5091 = vmatpush1.bf16.msra.mxu0 %v3623
        %5092 = vmatprep.subr.bf16.mxu0 %v3626
        %5093 = vmatpush1.bf16.msra.mxu0 %v3625
        %5094 = vmatprep.subr.bf16.mxu0 %v3628
        %5095 = vmatpush1.bf16.msra.mxu0 %v3627
        %5096 = vmatprep.mubr.bf16.mxu0 %v1276
        %5097 = vmatmul.mubr.bf16.gmra.mrb[0].mxu0 %v1275
        %v5098 = vpop.f32.mrb[0].mxu0
        %v5099 = vadd.f32 %v5046, %v5098
        %v5100 = vpop.f32.mrb[0].mxu0
        %v5101 = vadd.f32 %v5048, %v5100
        %v5102 = vpop.f32.mrb[0].mxu0
        %v5103 = vadd.f32 %v5050, %v5102
        %v5104 = vpop.f32.mrb[0].mxu0
        %v5105 = vadd.f32 %v5052, %v5104
        %5106 = vmatprep.mubr.bf16.mxu0 %v1312
        %5107 = vmatmul.mubr.bf16.gmra.mrb[0].mxu0 %v1311
        %v5108 = vpop.f32.mrb[0].mxu0
        %v5109 = vadd.f32 %v5056, %v5108
        %v5110 = vpop.f32.mrb[0].mxu0
        %v5111 = vadd.f32 %v5058, %v5110
        %v5112 = vpop.f32.mrb[0].mxu0
        %v5113 = vadd.f32 %v5060, %v5112
        %v5114 = vpop.f32.mrb[0].mxu0
        %v5115 = vadd.f32 %v5062, %v5114
        %5116 = vdwg.mxu0
        %5117 = vmatprep.subr.bf16.mxu0 %v3630
        %5118 = vmatpush1.bf16.msra.mxu0 %v3629
        %5119 = vmatprep.subr.bf16.mxu0 %v3632
        %5120 = vmatpush1.bf16.msra.mxu0 %v3631
        %5121 = vmatprep.subr.bf16.mxu0 %v3634
        %5122 = vmatpush1.bf16.msra.mxu0 %v3633
        %5123 = vmatprep.subr.bf16.mxu0 %v3636
        %5124 = vmatpush1.bf16.msra.mxu0 %v3635
        %5125 = vmatprep.subr.bf16.mxu0 %v3638
        %5126 = vmatpush1.bf16.msra.mxu0 %v3637
        %5127 = vmatprep.subr.bf16.mxu0 %v3640
        %5128 = vmatpush1.bf16.msra.mxu0 %v3639
        %5129 = vmatprep.subr.bf16.mxu0 %v3642
        %5130 = vmatpush1.bf16.msra.mxu0 %v3641
        %5131 = vmatprep.subr.bf16.mxu0 %v3644
        %5132 = vmatpush1.bf16.msra.mxu0 %v3643
        %5133 = vmatprep.subr.bf16.mxu0 %v3646
        %5134 = vmatpush1.bf16.msra.mxu0 %v3645
        %5135 = vmatprep.subr.bf16.mxu0 %v3648
        %5136 = vmatpush1.bf16.msra.mxu0 %v3647
        %5137 = vmatprep.subr.bf16.mxu0 %v3650
        %5138 = vmatpush1.bf16.msra.mxu0 %v3649
        %5139 = vmatprep.subr.bf16.mxu0 %v3652
        %5140 = vmatpush1.bf16.msra.mxu0 %v3651
        %5141 = vmatprep.subr.bf16.mxu0 %v3654
        %5142 = vmatpush1.bf16.msra.mxu0 %v3653
        %5143 = vmatprep.subr.bf16.mxu0 %v3656
        %5144 = vmatpush1.bf16.msra.mxu0 %v3655
        %5145 = vmatprep.subr.bf16.mxu0 %v3658
        %5146 = vmatpush1.bf16.msra.mxu0 %v3657
        %5147 = vmatprep.subr.bf16.mxu0 %v3660
        %5148 = vmatpush1.bf16.msra.mxu0 %v3659
        %5149 = vmatprep.mubr.bf16.mxu0 %v1278
        %5150 = vmatmul.mubr.bf16.gmra.mrb[0].mxu0 %v1277
        %v5151 = vpop.f32.mrb[0].mxu0
        %v5152 = vadd.f32 %v5099, %v5151
        %v5153 = vpop.f32.mrb[0].mxu0
        %v5154 = vadd.f32 %v5101, %v5153
        %v5155 = vpop.f32.mrb[0].mxu0
        %v5156 = vadd.f32 %v5103, %v5155
        %v5157 = vpop.f32.mrb[0].mxu0
        %v5158 = vadd.f32 %v5105, %v5157
        %5159 = vmatprep.mubr.bf16.mxu0 %v1314
        %5160 = vmatmul.mubr.bf16.gmra.mrb[0].mxu0 %v1313
        %v5161 = vpop.f32.mrb[0].mxu0
        %v5162 = vadd.f32 %v5109, %v5161
        %v5163 = vpop.f32.mrb[0].mxu0
        %v5164 = vadd.f32 %v5111, %v5163
        %v5165 = vpop.f32.mrb[0].mxu0
        %v5166 = vadd.f32 %v5113, %v5165
        %v5167 = vpop.f32.mrb[0].mxu0
        %v5168 = vadd.f32 %v5115, %v5167
        %5169 = vdwg.mxu0
        %5170 = vmatprep.subr.bf16.mxu0 %v3662
        %5171 = vmatpush1.bf16.msra.mxu0 %v3661
        %5172 = vmatprep.subr.bf16.mxu0 %v3664
        %5173 = vmatpush1.bf16.msra.mxu0 %v3663
        %5174 = vmatprep.subr.bf16.mxu0 %v3666
        %5175 = vmatpush1.bf16.msra.mxu0 %v3665
        %5176 = vmatprep.subr.bf16.mxu0 %v3668
        %5177 = vmatpush1.bf16.msra.mxu0 %v3667
        %5178 = vmatprep.subr.bf16.mxu0 %v3670
        %5179 = vmatpush1.bf16.msra.mxu0 %v3669
        %5180 = vmatprep.subr.bf16.mxu0 %v3672
        %5181 = vmatpush1.bf16.msra.mxu0 %v3671
        %5182 = vmatprep.subr.bf16.mxu0 %v3674
        %5183 = vmatpush1.bf16.msra.mxu0 %v3673
        %5184 = vmatprep.subr.bf16.mxu0 %v3676
        %5185 = vmatpush1.bf16.msra.mxu0 %v3675
        %5186 = vmatprep.subr.bf16.mxu0 %v3678
        %5187 = vmatpush1.bf16.msra.mxu0 %v3677
        %5188 = vmatprep.subr.bf16.mxu0 %v3680
        %5189 = vmatpush1.bf16.msra.mxu0 %v3679
        %5190 = vmatprep.subr.bf16.mxu0 %v3682
        %5191 = vmatpush1.bf16.msra.mxu0 %v3681
        %5192 = vmatprep.subr.bf16.mxu0 %v3684
        %5193 = vmatpush1.bf16.msra.mxu0 %v3683
        %5194 = vmatprep.subr.bf16.mxu0 %v3686
        %5195 = vmatpush1.bf16.msra.mxu0 %v3685
        %5196 = vmatprep.subr.bf16.mxu0 %v3688
        %5197 = vmatpush1.bf16.msra.mxu0 %v3687
        %5198 = vmatprep.subr.bf16.mxu0 %v3690
        %5199 = vmatpush1.bf16.msra.mxu0 %v3689
        %5200 = vmatprep.subr.bf16.mxu0 %v3692
        %5201 = vmatpush1.bf16.msra.mxu0 %v3691
        %5202 = vmatprep.mubr.bf16.mxu0 %v1280
        %5203 = vmatmul.mubr.bf16.gmra.mrb[0].mxu0 %v1279
        %v5204 = vpop.f32.mrb[0].mxu0
        %v5205 = vadd.f32 %v5152, %v5204
        %v5206 = vpop.f32.mrb[0].mxu0
        %v5207 = vadd.f32 %v5154, %v5206
        %v5208 = vpop.f32.mrb[0].mxu0
        %v5209 = vadd.f32 %v5156, %v5208
        %v5210 = vpop.f32.mrb[0].mxu0
        %v5211 = vadd.f32 %v5158, %v5210
        %5212 = vmatprep.mubr.bf16.mxu0 %v1316
        %5213 = vmatmul.mubr.bf16.gmra.mrb[0].mxu0 %v1315
        %v5214 = vpop.f32.mrb[0].mxu0
        %v5215 = vadd.f32 %v5162, %v5214
        %v5216 = vpop.f32.mrb[0].mxu0
        %v5217 = vadd.f32 %v5164, %v5216
        %v5218 = vpop.f32.mrb[0].mxu0
        %v5219 = vadd.f32 %v5166, %v5218
        %v5220 = vpop.f32.mrb[0].mxu0
        %v5221 = vadd.f32 %v5168, %v5220
        %5222 = vdwg.mxu0
        %v5223 = vmax.f32 %v5205, 0.0
        %v5224 = vmax.f32 %v5207, 0.0
        %v5225 = vmax.f32 %v5209, 0.0
        %v5226 = vmax.f32 %v5211, 0.0
        %v5227 = vmax.f32 %v5215, 0.0
        %v5228 = vmax.f32 %v5217, 0.0
        %v5229 = vmax.f32 %v5219, 0.0
        %v5230 = vmax.f32 %v5221, 0.0
        %v5231 = vld [vmem:[%s3] sm:$0x1f]
        %v5232 = vld [vmem:[%s4] sm:$0x1f]
        %5234 = vset.pattern.permute.xlu0 0
        %5235 = vperm.xlu0 %5234, %v5232
        %v5236 = vpop.permute.xlu0 %5235
        %vm5238 = vcmask 261120
        %v5240 = vsel %vm5238, %v5231, 0
        %5242 = vmatprep.subr.mxu0 %v5224
        %5243 = vmatpush1.msra.mxu0 %v5223
        %5244 = vmatprep.subr.mxu0 %v5226
        %5245 = vmatpush1.msra.mxu0 %v5225
        %5246 = vmatprep.subr.mxu0 %v5228
        %5247 = vmatpush1.msra.mxu0 %v5227
        %5248 = vmatprep.subr.mxu0 %v5230
        %5249 = vmatpush1.msra.mxu0 %v5229
        %5250 = vmatprep.subr.mxu0 0.0
        %5251 = vmatpush1.msra.mxu0 0.0
        %5252 = vmatprep.subr.mxu0 0.0
        %5253 = vmatpush1.msra.mxu0 0.0
        %5254 = vmatprep.subr.mxu0 0.0
        %5255 = vmatpush1.msra.mxu0 0.0
        %5256 = vmatprep.subr.mxu0 0.0
        %5257 = vmatpush1.msra.mxu0 0.0
        %5258 = vmatprep.subr.mxu0 0.0
        %5259 = vmatpush1.msra.mxu0 0.0
        %5260 = vmatprep.subr.mxu0 0.0
        %5261 = vmatpush1.msra.mxu0 0.0
        %5262 = vmatprep.subr.mxu0 0.0
        %5263 = vmatpush1.msra.mxu0 0.0
        %5264 = vmatprep.subr.mxu0 0.0
        %5265 = vmatpush1.msra.mxu0 0.0
        %5266 = vmatprep.subr.mxu0 0.0
        %5267 = vmatpush1.msra.mxu0 0.0
        %5268 = vmatprep.subr.mxu0 0.0
        %5269 = vmatpush1.msra.mxu0 0.0
        %5270 = vmatprep.subr.mxu0 0.0
        %5271 = vmatpush1.msra.mxu0 0.0
        %5272 = vmatprep.subr.mxu0 0.0
        %5273 = vmatpush1.msra.mxu0 0.0
        %5274 = vmatprep.subr.mxu0 0.0
        %5275 = vmatpush1.msra.mxu0 0.0
        %5276 = vmatprep.subr.mxu0 0.0
        %5277 = vmatpush1.msra.mxu0 0.0
        %5278 = vmatprep.subr.mxu0 0.0
        %5279 = vmatpush1.msra.mxu0 0.0
        %5280 = vmatprep.subr.mxu0 0.0
        %5281 = vmatpush1.msra.mxu0 0.0
        %5282 = vmatprep.subr.mxu0 0.0
        %5283 = vmatpush1.msra.mxu0 0.0
        %5284 = vmatprep.subr.mxu0 0.0
        %5285 = vmatpush1.msra.mxu0 0.0
        %5286 = vmatprep.subr.mxu0 0.0
        %5287 = vmatpush1.msra.mxu0 0.0
        %5288 = vmatprep.subr.mxu0 0.0
        %5289 = vmatpush1.msra.mxu0 0.0
        %5290 = vmatprep.subr.mxu0 0.0
        %5291 = vmatpush1.msra.mxu0 0.0
        %5292 = vmatprep.subr.mxu0 0.0
        %5293 = vmatpush1.msra.mxu0 0.0
        %5294 = vmatprep.subr.mxu0 0.0
        %5295 = vmatpush1.msra.mxu0 0.0
        %5296 = vmatprep.subr.mxu0 0.0
        %5297 = vmatpush1.msra.mxu0 0.0
        %5298 = vmatprep.subr.mxu0 0.0
        %5299 = vmatpush1.msra.mxu0 0.0
        %5300 = vmatprep.subr.mxu0 0.0
        %5301 = vmatpush1.msra.mxu0 0.0
        %5302 = vmatprep.subr.mxu0 0.0
        %5303 = vmatpush1.msra.mxu0 0.0
        %5304 = vmatprep.subr.mxu0 0.0
        %5305 = vmatpush1.msra.mxu0 0.0
        %5306 = vmatprep.mubr.f32.mxu0 0.0
        %5307 = vmatmul.mubr.f32.gmra.mrb[0].mxu0 %v5240
        %v5308 = vpop.f32.mrb[0].mxu0
        %v5309 = vadd.f32 %v5236, %v5308
        %v5310 = vpop.f32.mrb[0].mxu0
        %v5311 = vadd.f32 %v5236, %v5310
        %5312 = vdwg.mxu0
        %vm5313 = vcmask 1044480
        %v5314 = vsel %vm5313, %v5309, -inf
        %v5315 = vrot.slane %v5314, 4
        %v5316 = vmax.f32 %v5314, %v5315
        %v5317 = vrot.slane %v5316, 2
        %v5318 = vmax.f32 %v5316, %v5317
        %v5319 = vrot.slane %v5318, 1
        %v5320 = vmax.f32 %v5318, %v5319
        %v5321 = vsel %vm5313, %v5311, -inf
        %v5322 = vrot.slane %v5321, 4
        %v5323 = vmax.f32 %v5321, %v5322
        %v5324 = vrot.slane %v5323, 2
        %v5325 = vmax.f32 %v5323, %v5324
        %v5326 = vrot.slane %v5325, 1
        %v5327 = vmax.f32 %v5325, %v5326
        %v5328 = vsub.f32 %v5309, %v5320
        %v5329 = vsub.f32 %v5311, %v5327
        %v5330 = vmul.f32 %v5328, 1.442695
        %v5331 = vpow.pop %v5330
        %v5332 = vmul.f32 %v5329, 1.442695
        %v5333 = vpow.pop %v5332
        %v5334 = vsel %vm5313, %v5331, 0.0
        %v5335 = vrot.slane %v5334, 4
        %v5336 = vadd.f32 %v5334, %v5335
        %v5337 = vrot.slane %v5336, 2
        %v5338 = vadd.f32 %v5336, %v5337
        %v5339 = vrot.slane %v5338, 1
        %v5340 = vadd.f32 %v5338, %v5339
        %v5341 = vsel %vm5313, %v5333, 0.0
        %v5342 = vrot.slane %v5341, 4
        %v5343 = vadd.f32 %v5341, %v5342
        %v5344 = vrot.slane %v5343, 2
        %v5345 = vadd.f32 %v5343, %v5344
        %v5346 = vrot.slane %v5345, 1
        %v5347 = vadd.f32 %v5345, %v5346
        %v5348 = vrcp.pop %v5340
        %v5349 = vmul.f32 %v5331, %v5348
        %v5350 = vrcp.pop %v5347
        %v5351 = vmul.f32 %v5333, %v5350
        %v5352 = vld [vmem:[%s5] sm:$0xff]
        %v5353 = vld [vmem:[%s5 + $0x8] sm:$0xff]
        %v5354 = vld [vmem:[%s5 + $0x10] sm:$0xff]
        %v5355 = vld [vmem:[%s5 + $0x18] sm:$0xff]
        %v5356 = vld [vmem:[%s5 + $0x20] sm:$0xff]
        %v5357 = vld [vmem:[%s5 + $0x28] sm:$0xff]
        %v5358 = vld [vmem:[%s5 + $0x30] sm:$0xff]
        %v5359 = vld [vmem:[%s5 + $0x38] sm:$0xff]
        %v5360 = vld [vmem:[%s5 + $0x40] sm:$0xff]
        %v5361 = vld [vmem:[%s5 + $0x48] sm:$0xff]
        %v5362 = vld [vmem:[%s5 + $0x50] sm:$0xff]
        %v5363 = vld [vmem:[%s5 + $0x58] sm:$0xff]
        %v5364 = vld [vmem:[%s5 + $0x60] sm:$0xff]
        %v5365 = vld [vmem:[%s5 + $0x68] sm:$0xff]
        %v5366 = vld [vmem:[%s5 + $0x70] sm:$0xff]
        %v5367 = vld [vmem:[%s5 + $0x78] sm:$0xff]
        %v5368 = vld [vmem:[%s5 + $0x80] sm:$0xff]
        %v5369 = vld [vmem:[%s5 + $0x88] sm:$0xff]
        %v5370 = vld [vmem:[%s5 + $0x90] sm:$0xff]
        %v5371 = vld [vmem:[%s5 + $0x98] sm:$0xff]
        %v5372 = vld [vmem:[%s5 + $0xa0] sm:$0xff]
        %v5373 = vld [vmem:[%s5 + $0xa8] sm:$0xff]
        %v5374 = vld [vmem:[%s5 + $0xb0] sm:$0xff]
        %v5375 = vld [vmem:[%s5 + $0xb8] sm:$0xff]
        %v5376 = vld [vmem:[%s5 + $0xc0] sm:$0xff]
        %v5377 = vld [vmem:[%s5 + $0xc8] sm:$0xff]
        %v5378 = vld [vmem:[%s5 + $0xd0] sm:$0xff]
        %v5379 = vld [vmem:[%s5 + $0xd8] sm:$0xff]
        %v5380 = vld [vmem:[%s5 + $0xe0] sm:$0xff]
        %v5381 = vld [vmem:[%s5 + $0xe8] sm:$0xff]
        %v5382 = vld [vmem:[%s5 + $0xf0] sm:$0xff]
        %v5383 = vld [vmem:[%s5 + $0xf8] sm:$0xff]
        %5384 = vmatprep.subr.mxu0 0.0
        %5385 = vmatpush1.msra.mxu0 %v5352
        %5386 = vmatprep.subr.mxu0 0.0
        %5387 = vmatpush1.msra.mxu0 %v5353
        %5388 = vmatprep.subr.mxu0 0.0
        %5389 = vmatpush1.msra.mxu0 %v5354
        %5390 = vmatprep.subr.mxu0 0.0
        %5391 = vmatpush1.msra.mxu0 %v5355
        %5392 = vmatprep.subr.mxu0 0.0
        %5393 = vmatpush1.msra.mxu0 %v5356
        %5394 = vmatprep.subr.mxu0 0.0
        %5395 = vmatpush1.msra.mxu0 %v5357
        %5396 = vmatprep.subr.mxu0 0.0
        %5397 = vmatpush1.msra.mxu0 %v5358
        %5398 = vmatprep.subr.mxu0 0.0
        %5399 = vmatpush1.msra.mxu0 %v5359
        %5400 = vmatprep.subr.mxu0 0.0
        %5401 = vmatpush1.msra.mxu0 %v5360
        %5402 = vmatprep.subr.mxu0 0.0
        %5403 = vmatpush1.msra.mxu0 %v5361
        %5404 = vmatprep.subr.mxu0 0.0
        %5405 = vmatpush1.msra.mxu0 %v5362
        %5406 = vmatprep.subr.mxu0 0.0
        %5407 = vmatpush1.msra.mxu0 %v5363
        %5408 = vmatprep.subr.mxu0 0.0
        %5409 = vmatpush1.msra.mxu0 %v5364
        %5410 = vmatprep.subr.mxu0 0.0
        %5411 = vmatpush1.msra.mxu0 %v5365
        %5412 = vmatprep.subr.mxu0 0.0
        %5413 = vmatpush1.msra.mxu0 %v5366
        %5414 = vmatprep.subr.mxu0 0.0
        %5415 = vmatpush1.msra.mxu0 %v5367
        %5416 = vmatprep.subr.mxu0 0.0
        %5417 = vmatpush1.msra.mxu0 %v5368
        %5418 = vmatprep.subr.mxu0 0.0
        %5419 = vmatpush1.msra.mxu0 %v5369
        %5420 = vmatprep.subr.mxu0 0.0
        %5421 = vmatpush1.msra.mxu0 %v5370
        %5422 = vmatprep.subr.mxu0 0.0
        %5423 = vmatpush1.msra.mxu0 %v5371
        %5424 = vmatprep.subr.mxu0 0.0
        %5425 = vmatpush1.msra.mxu0 %v5372
        %5426 = vmatprep.subr.mxu0 0.0
        %5427 = vmatpush1.msra.mxu0 %v5373
        %5428 = vmatprep.subr.mxu0 0.0
        %5429 = vmatpush1.msra.mxu0 %v5374
        %5430 = vmatprep.subr.mxu0 0.0
        %5431 = vmatpush1.msra.mxu0 %v5375
        %5432 = vmatprep.subr.mxu0 0.0
        %5433 = vmatpush1.msra.mxu0 %v5376
        %5434 = vmatprep.subr.mxu0 0.0
        %5435 = vmatpush1.msra.mxu0 %v5377
        %5436 = vmatprep.subr.mxu0 0.0
        %5437 = vmatpush1.msra.mxu0 %v5378
        %5438 = vmatprep.subr.mxu0 0.0
        %5439 = vmatpush1.msra.mxu0 %v5379
        %5440 = vmatprep.subr.mxu0 0.0
        %5441 = vmatpush1.msra.mxu0 %v5380
        %5442 = vmatprep.subr.mxu0 0.0
        %5443 = vmatpush1.msra.mxu0 %v5381
        %5444 = vmatprep.subr.mxu0 0.0
        %5445 = vmatpush1.msra.mxu0 %v5382
        %5446 = vmatprep.subr.mxu0 0.0
        %5447 = vmatpush1.msra.mxu0 %v5383
        %5448 = vmatprep.mubr.f32.mxu0 %v5351
        %5449 = vmatmul.mubr.f32.gmra.mrb[0].mxu0 %v5349
        %v5450 = vpop.f32.mrb[0].mxu0
        %v5451 = vadd.f32 0.0, %v5450
        %v5452 = vpop.f32.mrb[0].mxu0
        %5453 = vdwg.mxu0
        %s5454 = scalar_lea.vmem %s5, 256
        %v5455 = vld [vmem:[%s5454] sm:$0xff]
        %v5456 = vld [vmem:[%s5454 + $0x8] sm:$0xff]
        %v5457 = vld [vmem:[%s5454 + $0x10] sm:$0xff]
        %v5458 = vld [vmem:[%s5454 + $0x18] sm:$0xff]
        %v5459 = vld [vmem:[%s5454 + $0x20] sm:$0xff]
        %v5460 = vld [vmem:[%s5454 + $0x28] sm:$0xff]
        %v5461 = vld [vmem:[%s5454 + $0x30] sm:$0xff]
        %v5462 = vld [vmem:[%s5454 + $0x38] sm:$0xff]
        %v5463 = vld [vmem:[%s5454 + $0x40] sm:$0xff]
        %v5464 = vld [vmem:[%s5454 + $0x48] sm:$0xff]
        %v5465 = vld [vmem:[%s5454 + $0x50] sm:$0xff]
        %v5466 = vld [vmem:[%s5454 + $0x58] sm:$0xff]
        %v5467 = vld [vmem:[%s5454 + $0x60] sm:$0xff]
        %v5468 = vld [vmem:[%s5454 + $0x68] sm:$0xff]
        %v5469 = vld [vmem:[%s5454 + $0x70] sm:$0xff]
        %v5470 = vld [vmem:[%s5454 + $0x78] sm:$0xff]
        %v5471 = vld [vmem:[%s5454 + $0x80] sm:$0xff]
        %v5472 = vld [vmem:[%s5454 + $0x88] sm:$0xff]
        %v5473 = vld [vmem:[%s5454 + $0x90] sm:$0xff]
        %v5474 = vld [vmem:[%s5454 + $0x98] sm:$0xff]
        %v5475 = vld [vmem:[%s5454 + $0xa0] sm:$0xff]
        %v5476 = vld [vmem:[%s5454 + $0xa8] sm:$0xff]
        %v5477 = vld [vmem:[%s5454 + $0xb0] sm:$0xff]
        %v5478 = vld [vmem:[%s5454 + $0xb8] sm:$0xff]
        %v5479 = vld [vmem:[%s5454 + $0xc0] sm:$0xff]
        %v5480 = vld [vmem:[%s5454 + $0xc8] sm:$0xff]
        %v5481 = vld [vmem:[%s5454 + $0xd0] sm:$0xff]
        %v5482 = vld [vmem:[%s5454 + $0xd8] sm:$0xff]
        %v5483 = vld [vmem:[%s5454 + $0xe0] sm:$0xff]
        %v5484 = vld [vmem:[%s5454 + $0xe8] sm:$0xff]
        %v5485 = vld [vmem:[%s5454 + $0xf0] sm:$0xff]
        %v5486 = vld [vmem:[%s5454 + $0xf8] sm:$0xff]
        %5487 = vmatprep.subr.mxu0 0.0
        %5488 = vmatpush1.msra.mxu0 %v5455
        %5489 = vmatprep.subr.mxu0 0.0
        %5490 = vmatpush1.msra.mxu0 %v5456
        %5491 = vmatprep.subr.mxu0 0.0
        %5492 = vmatpush1.msra.mxu0 %v5457
        %5493 = vmatprep.subr.mxu0 0.0
        %5494 = vmatpush1.msra.mxu0 %v5458
        %5495 = vmatprep.subr.mxu0 0.0
        %5496 = vmatpush1.msra.mxu0 %v5459
        %5497 = vmatprep.subr.mxu0 0.0
        %5498 = vmatpush1.msra.mxu0 %v5460
        %5499 = vmatprep.subr.mxu0 0.0
        %5500 = vmatpush1.msra.mxu0 %v5461
        %5501 = vmatprep.subr.mxu0 0.0
        %5502 = vmatpush1.msra.mxu0 %v5462
        %5503 = vmatprep.subr.mxu0 0.0
        %5504 = vmatpush1.msra.mxu0 %v5463
        %5505 = vmatprep.subr.mxu0 0.0
        %5506 = vmatpush1.msra.mxu0 %v5464
        %5507 = vmatprep.subr.mxu0 0.0
        %5508 = vmatpush1.msra.mxu0 %v5465
        %5509 = vmatprep.subr.mxu0 0.0
        %5510 = vmatpush1.msra.mxu0 %v5466
        %5511 = vmatprep.subr.mxu0 0.0
        %5512 = vmatpush1.msra.mxu0 %v5467
        %5513 = vmatprep.subr.mxu0 0.0
        %5514 = vmatpush1.msra.mxu0 %v5468
        %5515 = vmatprep.subr.mxu0 0.0
        %5516 = vmatpush1.msra.mxu0 %v5469
        %5517 = vmatprep.subr.mxu0 0.0
        %5518 = vmatpush1.msra.mxu0 %v5470
        %5519 = vmatprep.subr.mxu0 0.0
        %5520 = vmatpush1.msra.mxu0 %v5471
        %5521 = vmatprep.subr.mxu0 0.0
        %5522 = vmatpush1.msra.mxu0 %v5472
        %5523 = vmatprep.subr.mxu0 0.0
        %5524 = vmatpush1.msra.mxu0 %v5473
        %5525 = vmatprep.subr.mxu0 0.0
        %5526 = vmatpush1.msra.mxu0 %v5474
        %5527 = vmatprep.subr.mxu0 0.0
        %5528 = vmatpush1.msra.mxu0 %v5475
        %5529 = vmatprep.subr.mxu0 0.0
        %5530 = vmatpush1.msra.mxu0 %v5476
        %5531 = vmatprep.subr.mxu0 0.0
        %5532 = vmatpush1.msra.mxu0 %v5477
        %5533 = vmatprep.subr.mxu0 0.0
        %5534 = vmatpush1.msra.mxu0 %v5478
        %5535 = vmatprep.subr.mxu0 0.0
        %5536 = vmatpush1.msra.mxu0 %v5479
        %5537 = vmatprep.subr.mxu0 0.0
        %5538 = vmatpush1.msra.mxu0 %v5480
        %5539 = vmatprep.subr.mxu0 0.0
        %5540 = vmatpush1.msra.mxu0 %v5481
        %5541 = vmatprep.subr.mxu0 0.0
        %5542 = vmatpush1.msra.mxu0 %v5482
        %5543 = vmatprep.subr.mxu0 0.0
        %5544 = vmatpush1.msra.mxu0 %v5483
        %5545 = vmatprep.subr.mxu0 0.0
        %5546 = vmatpush1.msra.mxu0 %v5484
        %5547 = vmatprep.subr.mxu0 0.0
        %5548 = vmatpush1.msra.mxu0 %v5485
        %5549 = vmatprep.subr.mxu0 0.0
        %5550 = vmatpush1.msra.mxu0 %v5486
        %5551 = vmatprep.mubr.f32.mxu0 %v5351
        %5552 = vmatmul.mubr.f32.gmra.mrb[0].mxu0 %v5349
        %v5553 = vpop.f32.mrb[0].mxu0
        %v5554 = vadd.f32 0.0, %v5553
        %v5555 = vpop.f32.mrb[0].mxu0
        %5556 = vdwg.mxu0
        %s5557 = scalar_lea.vmem %s5, 512
        %v5558 = vld [vmem:[%s5557] sm:$0xff]
        %v5559 = vld [vmem:[%s5557 + $0x8] sm:$0xff]
        %v5560 = vld [vmem:[%s5557 + $0x10] sm:$0xff]
        %v5561 = vld [vmem:[%s5557 + $0x18] sm:$0xff]
        %v5562 = vld [vmem:[%s5557 + $0x20] sm:$0xff]
        %v5563 = vld [vmem:[%s5557 + $0x28] sm:$0xff]
        %v5564 = vld [vmem:[%s5557 + $0x30] sm:$0xff]
        %v5565 = vld [vmem:[%s5557 + $0x38] sm:$0xff]
        %v5566 = vld [vmem:[%s5557 + $0x40] sm:$0xff]
        %v5567 = vld [vmem:[%s5557 + $0x48] sm:$0xff]
        %v5568 = vld [vmem:[%s5557 + $0x50] sm:$0xff]
        %v5569 = vld [vmem:[%s5557 + $0x58] sm:$0xff]
        %v5570 = vld [vmem:[%s5557 + $0x60] sm:$0xff]
        %v5571 = vld [vmem:[%s5557 + $0x68] sm:$0xff]
        %v5572 = vld [vmem:[%s5557 + $0x70] sm:$0xff]
        %v5573 = vld [vmem:[%s5557 + $0x78] sm:$0xff]
        %v5574 = vld [vmem:[%s5557 + $0x80] sm:$0xff]
        %v5575 = vld [vmem:[%s5557 + $0x88] sm:$0xff]
        %v5576 = vld [vmem:[%s5557 + $0x90] sm:$0xff]
        %v5577 = vld [vmem:[%s5557 + $0x98] sm:$0xff]
        %v5578 = vld [vmem:[%s5557 + $0xa0] sm:$0xff]
        %v5579 = vld [vmem:[%s5557 + $0xa8] sm:$0xff]
        %v5580 = vld [vmem:[%s5557 + $0xb0] sm:$0xff]
        %v5581 = vld [vmem:[%s5557 + $0xb8] sm:$0xff]
        %v5582 = vld [vmem:[%s5557 + $0xc0] sm:$0xff]
        %v5583 = vld [vmem:[%s5557 + $0xc8] sm:$0xff]
        %v5584 = vld [vmem:[%s5557 + $0xd0] sm:$0xff]
        %v5585 = vld [vmem:[%s5557 + $0xd8] sm:$0xff]
        %v5586 = vld [vmem:[%s5557 + $0xe0] sm:$0xff]
        %v5587 = vld [vmem:[%s5557 + $0xe8] sm:$0xff]
        %v5588 = vld [vmem:[%s5557 + $0xf0] sm:$0xff]
        %v5589 = vld [vmem:[%s5557 + $0xf8] sm:$0xff]
        %5590 = vmatprep.subr.mxu0 0.0
        %5591 = vmatpush1.msra.mxu0 %v5558
        %5592 = vmatprep.subr.mxu0 0.0
        %5593 = vmatpush1.msra.mxu0 %v5559
        %5594 = vmatprep.subr.mxu0 0.0
        %5595 = vmatpush1.msra.mxu0 %v5560
        %5596 = vmatprep.subr.mxu0 0.0
        %5597 = vmatpush1.msra.mxu0 %v5561
        %5598 = vmatprep.subr.mxu0 0.0
        %5599 = vmatpush1.msra.mxu0 %v5562
        %5600 = vmatprep.subr.mxu0 0.0
        %5601 = vmatpush1.msra.mxu0 %v5563
        %5602 = vmatprep.subr.mxu0 0.0
        %5603 = vmatpush1.msra.mxu0 %v5564
        %5604 = vmatprep.subr.mxu0 0.0
        %5605 = vmatpush1.msra.mxu0 %v5565
        %5606 = vmatprep.subr.mxu0 0.0
        %5607 = vmatpush1.msra.mxu0 %v5566
        %5608 = vmatprep.subr.mxu0 0.0
        %5609 = vmatpush1.msra.mxu0 %v5567
        %5610 = vmatprep.subr.mxu0 0.0
        %5611 = vmatpush1.msra.mxu0 %v5568
        %5612 = vmatprep.subr.mxu0 0.0
        %5613 = vmatpush1.msra.mxu0 %v5569
        %5614 = vmatprep.subr.mxu0 0.0
        %5615 = vmatpush1.msra.mxu0 %v5570
        %5616 = vmatprep.subr.mxu0 0.0
        %5617 = vmatpush1.msra.mxu0 %v5571
        %5618 = vmatprep.subr.mxu0 0.0
        %5619 = vmatpush1.msra.mxu0 %v5572
        %5620 = vmatprep.subr.mxu0 0.0
        %5621 = vmatpush1.msra.mxu0 %v5573
        %5622 = vmatprep.subr.mxu0 0.0
        %5623 = vmatpush1.msra.mxu0 %v5574
        %5624 = vmatprep.subr.mxu0 0.0
        %5625 = vmatpush1.msra.mxu0 %v5575
        %5626 = vmatprep.subr.mxu0 0.0
        %5627 = vmatpush1.msra.mxu0 %v5576
        %5628 = vmatprep.subr.mxu0 0.0
        %5629 = vmatpush1.msra.mxu0 %v5577
        %5630 = vmatprep.subr.mxu0 0.0
        %5631 = vmatpush1.msra.mxu0 %v5578
        %5632 = vmatprep.subr.mxu0 0.0
        %5633 = vmatpush1.msra.mxu0 %v5579
        %5634 = vmatprep.subr.mxu0 0.0
        %5635 = vmatpush1.msra.mxu0 %v5580
        %5636 = vmatprep.subr.mxu0 0.0
        %5637 = vmatpush1.msra.mxu0 %v5581
        %5638 = vmatprep.subr.mxu0 0.0
        %5639 = vmatpush1.msra.mxu0 %v5582
        %5640 = vmatprep.subr.mxu0 0.0
        %5641 = vmatpush1.msra.mxu0 %v5583
        %5642 = vmatprep.subr.mxu0 0.0
        %5643 = vmatpush1.msra.mxu0 %v5584
        %5644 = vmatprep.subr.mxu0 0.0
        %5645 = vmatpush1.msra.mxu0 %v5585
        %5646 = vmatprep.subr.mxu0 0.0
        %5647 = vmatpush1.msra.mxu0 %v5586
        %5648 = vmatprep.subr.mxu0 0.0
        %5649 = vmatpush1.msra.mxu0 %v5587
        %5650 = vmatprep.subr.mxu0 0.0
        %5651 = vmatpush1.msra.mxu0 %v5588
        %5652 = vmatprep.subr.mxu0 0.0
        %5653 = vmatpush1.msra.mxu0 %v5589
        %5654 = vmatprep.mubr.f32.mxu0 %v5351
        %5655 = vmatmul.mubr.f32.gmra.mrb[0].mxu0 %v5349
        %v5656 = vpop.f32.mrb[0].mxu0
        %v5657 = vadd.f32 0.0, %v5656
        %v5658 = vpop.f32.mrb[0].mxu0
        %5659 = vdwg.mxu0
        %s5660 = scalar_lea.vmem %s5, 768
        %v5661 = vld [vmem:[%s5660] sm:$0xff]
        %v5662 = vld [vmem:[%s5660 + $0x8] sm:$0xff]
        %v5663 = vld [vmem:[%s5660 + $0x10] sm:$0xff]
        %v5664 = vld [vmem:[%s5660 + $0x18] sm:$0xff]
        %v5665 = vld [vmem:[%s5660 + $0x20] sm:$0xff]
        %v5666 = vld [vmem:[%s5660 + $0x28] sm:$0xff]
        %v5667 = vld [vmem:[%s5660 + $0x30] sm:$0xff]
        %v5668 = vld [vmem:[%s5660 + $0x38] sm:$0xff]
        %v5669 = vld [vmem:[%s5660 + $0x40] sm:$0xff]
        %v5670 = vld [vmem:[%s5660 + $0x48] sm:$0xff]
        %v5671 = vld [vmem:[%s5660 + $0x50] sm:$0xff]
        %v5672 = vld [vmem:[%s5660 + $0x58] sm:$0xff]
        %v5673 = vld [vmem:[%s5660 + $0x60] sm:$0xff]
        %v5674 = vld [vmem:[%s5660 + $0x68] sm:$0xff]
        %v5675 = vld [vmem:[%s5660 + $0x70] sm:$0xff]
        %v5676 = vld [vmem:[%s5660 + $0x78] sm:$0xff]
        %v5677 = vld [vmem:[%s5660 + $0x80] sm:$0xff]
        %v5678 = vld [vmem:[%s5660 + $0x88] sm:$0xff]
        %v5679 = vld [vmem:[%s5660 + $0x90] sm:$0xff]
        %v5680 = vld [vmem:[%s5660 + $0x98] sm:$0xff]
        %v5681 = vld [vmem:[%s5660 + $0xa0] sm:$0xff]
        %v5682 = vld [vmem:[%s5660 + $0xa8] sm:$0xff]
        %v5683 = vld [vmem:[%s5660 + $0xb0] sm:$0xff]
        %v5684 = vld [vmem:[%s5660 + $0xb8] sm:$0xff]
        %v5685 = vld [vmem:[%s5660 + $0xc0] sm:$0xff]
        %v5686 = vld [vmem:[%s5660 + $0xc8] sm:$0xff]
        %v5687 = vld [vmem:[%s5660 + $0xd0] sm:$0xff]
        %v5688 = vld [vmem:[%s5660 + $0xd8] sm:$0xff]
        %v5689 = vld [vmem:[%s5660 + $0xe0] sm:$0xff]
        %v5690 = vld [vmem:[%s5660 + $0xe8] sm:$0xff]
        %v5691 = vld [vmem:[%s5660 + $0xf0] sm:$0xff]
        %v5692 = vld [vmem:[%s5660 + $0xf8] sm:$0xff]
        %5693 = vmatprep.subr.mxu0 0.0
        %5694 = vmatpush1.msra.mxu0 %v5661
        %5695 = vmatprep.subr.mxu0 0.0
        %5696 = vmatpush1.msra.mxu0 %v5662
        %5697 = vmatprep.subr.mxu0 0.0
        %5698 = vmatpush1.msra.mxu0 %v5663
        %5699 = vmatprep.subr.mxu0 0.0
        %5700 = vmatpush1.msra.mxu0 %v5664
        %5701 = vmatprep.subr.mxu0 0.0
        %5702 = vmatpush1.msra.mxu0 %v5665
        %5703 = vmatprep.subr.mxu0 0.0
        %5704 = vmatpush1.msra.mxu0 %v5666
        %5705 = vmatprep.subr.mxu0 0.0
        %5706 = vmatpush1.msra.mxu0 %v5667
        %5707 = vmatprep.subr.mxu0 0.0
        %5708 = vmatpush1.msra.mxu0 %v5668
        %5709 = vmatprep.subr.mxu0 0.0
        %5710 = vmatpush1.msra.mxu0 %v5669
        %5711 = vmatprep.subr.mxu0 0.0
        %5712 = vmatpush1.msra.mxu0 %v5670
        %5713 = vmatprep.subr.mxu0 0.0
        %5714 = vmatpush1.msra.mxu0 %v5671
        %5715 = vmatprep.subr.mxu0 0.0
        %5716 = vmatpush1.msra.mxu0 %v5672
        %5717 = vmatprep.subr.mxu0 0.0
        %5718 = vmatpush1.msra.mxu0 %v5673
        %5719 = vmatprep.subr.mxu0 0.0
        %5720 = vmatpush1.msra.mxu0 %v5674
        %5721 = vmatprep.subr.mxu0 0.0
        %5722 = vmatpush1.msra.mxu0 %v5675
        %5723 = vmatprep.subr.mxu0 0.0
        %5724 = vmatpush1.msra.mxu0 %v5676
        %5725 = vmatprep.subr.mxu0 0.0
        %5726 = vmatpush1.msra.mxu0 %v5677
        %5727 = vmatprep.subr.mxu0 0.0
        %5728 = vmatpush1.msra.mxu0 %v5678
        %5729 = vmatprep.subr.mxu0 0.0
        %5730 = vmatpush1.msra.mxu0 %v5679
        %5731 = vmatprep.subr.mxu0 0.0
        %5732 = vmatpush1.msra.mxu0 %v5680
        %5733 = vmatprep.subr.mxu0 0.0
        %5734 = vmatpush1.msra.mxu0 %v5681
        %5735 = vmatprep.subr.mxu0 0.0
        %5736 = vmatpush1.msra.mxu0 %v5682
        %5737 = vmatprep.subr.mxu0 0.0
        %5738 = vmatpush1.msra.mxu0 %v5683
        %5739 = vmatprep.subr.mxu0 0.0
        %5740 = vmatpush1.msra.mxu0 %v5684
        %5741 = vmatprep.subr.mxu0 0.0
        %5742 = vmatpush1.msra.mxu0 %v5685
        %5743 = vmatprep.subr.mxu0 0.0
        %5744 = vmatpush1.msra.mxu0 %v5686
        %5745 = vmatprep.subr.mxu0 0.0
        %5746 = vmatpush1.msra.mxu0 %v5687
        %5747 = vmatprep.subr.mxu0 0.0
        %5748 = vmatpush1.msra.mxu0 %v5688
        %5749 = vmatprep.subr.mxu0 0.0
        %5750 = vmatpush1.msra.mxu0 %v5689
        %5751 = vmatprep.subr.mxu0 0.0
        %5752 = vmatpush1.msra.mxu0 %v5690
        %5753 = vmatprep.subr.mxu0 0.0
        %5754 = vmatpush1.msra.mxu0 %v5691
        %5755 = vmatprep.subr.mxu0 0.0
        %5756 = vmatpush1.msra.mxu0 %v5692
        %5757 = vmatprep.mubr.f32.mxu0 %v5351
        %5758 = vmatmul.mubr.f32.gmra.mrb[0].mxu0 %v5349
        %v5759 = vpop.f32.mrb[0].mxu0
        %v5760 = vadd.f32 0.0, %v5759
        %v5761 = vpop.f32.mrb[0].mxu0
        %5762 = vdwg.mxu0
        %v5763 = vmax.f32 %v5451, %v5554
        %v5764 = vmax.f32 %v5657, %v5760
        %v5765 = vmax.f32 %v5763, %v5764
        %v5766 = vld [vmem:[%s7] sm:$0x1]
        %v5767 = vld [vmem:[%s6] sm:$0xff]
        %v5768 = vld [vmem:[%s6 + $0x8] sm:$0xff]
        %v5769 = vld [vmem:[%s6 + $0x10] sm:$0xff]
        %v5770 = vld [vmem:[%s6 + $0x18] sm:$0xff]
        %v5771 = vld [vmem:[%s6 + $0x20] sm:$0xff]
        %v5772 = vld [vmem:[%s6 + $0x28] sm:$0xff]
        %v5773 = vld [vmem:[%s6 + $0x30] sm:$0xff]
        %v5774 = vld [vmem:[%s6 + $0x38] sm:$0xff]
        %vm5775 = vcmask 523264
        %v5777 = vsel %vm5775, %v5765, 0
        %5779 = vmatprep.subr.mxu0 0.0
        %5780 = vmatpush1.msra.mxu0 %v5767
        %5781 = vmatprep.subr.mxu0 0.0
        %5782 = vmatpush1.msra.mxu0 %v5768
        %5783 = vmatprep.subr.mxu0 0.0
        %5784 = vmatpush1.msra.mxu0 %v5769
        %5785 = vmatprep.subr.mxu0 0.0
        %5786 = vmatpush1.msra.mxu0 %v5770
        %5787 = vmatprep.subr.mxu0 0.0
        %5788 = vmatpush1.msra.mxu0 %v5771
        %5789 = vmatprep.subr.mxu0 0.0
        %5790 = vmatpush1.msra.mxu0 %v5772
        %5791 = vmatprep.subr.mxu0 0.0
        %5792 = vmatpush1.msra.mxu0 %v5773
        %5793 = vmatprep.subr.mxu0 0.0
        %5794 = vmatpush1.msra.mxu0 %v5774
        %5795 = vmatprep.subr.mxu0 0.0
        %5796 = vmatpush1.msra.mxu0 0.0
        %5797 = vmatprep.subr.mxu0 0.0
        %5798 = vmatpush1.msra.mxu0 0.0
        %5799 = vmatprep.subr.mxu0 0.0
        %5800 = vmatpush1.msra.mxu0 0.0
        %5801 = vmatprep.subr.mxu0 0.0
        %5802 = vmatpush1.msra.mxu0 0.0
        %5803 = vmatprep.subr.mxu0 0.0
        %5804 = vmatpush1.msra.mxu0 0.0
        %5805 = vmatprep.subr.mxu0 0.0
        %5806 = vmatpush1.msra.mxu0 0.0
        %5807 = vmatprep.subr.mxu0 0.0
        %5808 = vmatpush1.msra.mxu0 0.0
        %5809 = vmatprep.subr.mxu0 0.0
        %5810 = vmatpush1.msra.mxu0 0.0
        %5811 = vmatprep.subr.mxu0 0.0
        %5812 = vmatpush1.msra.mxu0 0.0
        %5813 = vmatprep.subr.mxu0 0.0
        %5814 = vmatpush1.msra.mxu0 0.0
        %5815 = vmatprep.subr.mxu0 0.0
        %5816 = vmatpush1.msra.mxu0 0.0
        %5817 = vmatprep.subr.mxu0 0.0
        %5818 = vmatpush1.msra.mxu0 0.0
        %5819 = vmatprep.subr.mxu0 0.0
        %5820 = vmatpush1.msra.mxu0 0.0
        %5821 = vmatprep.subr.mxu0 0.0
        %5822 = vmatpush1.msra.mxu0 0.0
        %5823 = vmatprep.subr.mxu0 0.0
        %5824 = vmatpush1.msra.mxu0 0.0
        %5825 = vmatprep.subr.mxu0 0.0
        %5826 = vmatpush1.msra.mxu0 0.0
        %5827 = vmatprep.subr.mxu0 0.0
        %5828 = vmatpush1.msra.mxu0 0.0
        %5829 = vmatprep.subr.mxu0 0.0
        %5830 = vmatpush1.msra.mxu0 0.0
        %5831 = vmatprep.subr.mxu0 0.0
        %5832 = vmatpush1.msra.mxu0 0.0
        %5833 = vmatprep.subr.mxu0 0.0
        %5834 = vmatpush1.msra.mxu0 0.0
        %5835 = vmatprep.subr.mxu0 0.0
        %5836 = vmatpush1.msra.mxu0 0.0
        %5837 = vmatprep.subr.mxu0 0.0
        %5838 = vmatpush1.msra.mxu0 0.0
        %5839 = vmatprep.subr.mxu0 0.0
        %5840 = vmatpush1.msra.mxu0 0.0
        %5841 = vmatprep.subr.mxu0 0.0
        %5842 = vmatpush1.msra.mxu0 0.0
        %5843 = vmatprep.mubr.f32.mxu0 0.0
        %5844 = vmatmul.mubr.f32.gmra.mrb[0].mxu0 %v5777
        %v5845 = vpop.f32.mrb[0].mxu0
        %v5846 = vadd.f32 0.0, %v5845
        %v5847 = vpop.f32.mrb[0].mxu0
        %5848 = vdwg.mxu0
        %v5849 = vadd.f32 %v5766, %v5846
        %s5850 = scalar_lea.vmem %s6, 64
        %v5851 = vld [vmem:[%s5850] sm:$0xff]
        %v5852 = vld [vmem:[%s5850 + $0x8] sm:$0xff]
        %v5853 = vld [vmem:[%s5850 + $0x10] sm:$0xff]
        %v5854 = vld [vmem:[%s5850 + $0x18] sm:$0xff]
        %v5855 = vld [vmem:[%s5850 + $0x20] sm:$0xff]
        %v5856 = vld [vmem:[%s5850 + $0x28] sm:$0xff]
        %v5857 = vld [vmem:[%s5850 + $0x30] sm:$0xff]
        %v5858 = vld [vmem:[%s5850 + $0x38] sm:$0xff]
        %v5859 = vrot.slane %v5765, 1
        %v5860 = vsel %vm5775, %v5859, 0
        %5862 = vmatprep.subr.mxu0 0.0
        %5863 = vmatpush1.msra.mxu0 %v5851
        %5864 = vmatprep.subr.mxu0 0.0
        %5865 = vmatpush1.msra.mxu0 %v5852
        %5866 = vmatprep.subr.mxu0 0.0
        %5867 = vmatpush1.msra.mxu0 %v5853
        %5868 = vmatprep.subr.mxu0 0.0
        %5869 = vmatpush1.msra.mxu0 %v5854
        %5870 = vmatprep.subr.mxu0 0.0
        %5871 = vmatpush1.msra.mxu0 %v5855
        %5872 = vmatprep.subr.mxu0 0.0
        %5873 = vmatpush1.msra.mxu0 %v5856
        %5874 = vmatprep.subr.mxu0 0.0
        %5875 = vmatpush1.msra.mxu0 %v5857
        %5876 = vmatprep.subr.mxu0 0.0
        %5877 = vmatpush1.msra.mxu0 %v5858
        %5878 = vmatprep.subr.mxu0 0.0
        %5879 = vmatpush1.msra.mxu0 0.0
        %5880 = vmatprep.subr.mxu0 0.0
        %5881 = vmatpush1.msra.mxu0 0.0
        %5882 = vmatprep.subr.mxu0 0.0
        %5883 = vmatpush1.msra.mxu0 0.0
        %5884 = vmatprep.subr.mxu0 0.0
        %5885 = vmatpush1.msra.mxu0 0.0
        %5886 = vmatprep.subr.mxu0 0.0
        %5887 = vmatpush1.msra.mxu0 0.0
        %5888 = vmatprep.subr.mxu0 0.0
        %5889 = vmatpush1.msra.mxu0 0.0
        %5890 = vmatprep.subr.mxu0 0.0
        %5891 = vmatpush1.msra.mxu0 0.0
        %5892 = vmatprep.subr.mxu0 0.0
        %5893 = vmatpush1.msra.mxu0 0.0
        %5894 = vmatprep.subr.mxu0 0.0
        %5895 = vmatpush1.msra.mxu0 0.0
        %5896 = vmatprep.subr.mxu0 0.0
        %5897 = vmatpush1.msra.mxu0 0.0
        %5898 = vmatprep.subr.mxu0 0.0
        %5899 = vmatpush1.msra.mxu0 0.0
        %5900 = vmatprep.subr.mxu0 0.0
        %5901 = vmatpush1.msra.mxu0 0.0
        %5902 = vmatprep.subr.mxu0 0.0
        %5903 = vmatpush1.msra.mxu0 0.0
        %5904 = vmatprep.subr.mxu0 0.0
        %5905 = vmatpush1.msra.mxu0 0.0
        %5906 = vmatprep.subr.mxu0 0.0
        %5907 = vmatpush1.msra.mxu0 0.0
        %5908 = vmatprep.subr.mxu0 0.0
        %5909 = vmatpush1.msra.mxu0 0.0
        %5910 = vmatprep.subr.mxu0 0.0
        %5911 = vmatpush1.msra.mxu0 0.0
        %5912 = vmatprep.subr.mxu0 0.0
        %5913 = vmatpush1.msra.mxu0 0.0
        %5914 = vmatprep.subr.mxu0 0.0
        %5915 = vmatpush1.msra.mxu0 0.0
        %5916 = vmatprep.subr.mxu0 0.0
        %5917 = vmatpush1.msra.mxu0 0.0
        %5918 = vmatprep.subr.mxu0 0.0
        %5919 = vmatpush1.msra.mxu0 0.0
        %5920 = vmatprep.subr.mxu0 0.0
        %5921 = vmatpush1.msra.mxu0 0.0
        %5922 = vmatprep.subr.mxu0 0.0
        %5923 = vmatpush1.msra.mxu0 0.0
        %5924 = vmatprep.subr.mxu0 0.0
        %5925 = vmatpush1.msra.mxu0 0.0
        %5926 = vmatprep.mubr.f32.mxu0 0.0
        %5927 = vmatmul.mubr.f32.gmra.mrb[0].mxu0 %v5860
        %v5928 = vpop.f32.mrb[0].mxu0
        %v5929 = vadd.f32 0.0, %v5928
        %v5930 = vpop.f32.mrb[0].mxu0
        %5931 = vdwg.mxu0
        %v5932 = vadd.f32 %v5849, %v5929
        %s5933 = scalar_lea.vmem %s6, 128
        %v5934 = vld [vmem:[%s5933] sm:$0xff]
        %v5935 = vld [vmem:[%s5933 + $0x8] sm:$0xff]
        %v5936 = vld [vmem:[%s5933 + $0x10] sm:$0xff]
        %v5937 = vld [vmem:[%s5933 + $0x18] sm:$0xff]
        %v5938 = vld [vmem:[%s5933 + $0x20] sm:$0xff]
        %v5939 = vld [vmem:[%s5933 + $0x28] sm:$0xff]
        %v5940 = vld [vmem:[%s5933 + $0x30] sm:$0xff]
        %v5941 = vld [vmem:[%s5933 + $0x38] sm:$0xff]
        %v5942 = vrot.slane %v5765, 2
        %v5943 = vsel %vm5775, %v5942, 0
        %5945 = vmatprep.subr.mxu0 0.0
        %5946 = vmatpush1.msra.mxu0 %v5934
        %5947 = vmatprep.subr.mxu0 0.0
        %5948 = vmatpush1.msra.mxu0 %v5935
        %5949 = vmatprep.subr.mxu0 0.0
        %5950 = vmatpush1.msra.mxu0 %v5936
        %5951 = vmatprep.subr.mxu0 0.0
        %5952 = vmatpush1.msra.mxu0 %v5937
        %5953 = vmatprep.subr.mxu0 0.0
        %5954 = vmatpush1.msra.mxu0 %v5938
        %5955 = vmatprep.subr.mxu0 0.0
        %5956 = vmatpush1.msra.mxu0 %v5939
        %5957 = vmatprep.subr.mxu0 0.0
        %5958 = vmatpush1.msra.mxu0 %v5940
        %5959 = vmatprep.subr.mxu0 0.0
        %5960 = vmatpush1.msra.mxu0 %v5941
        %5961 = vmatprep.subr.mxu0 0.0
        %5962 = vmatpush1.msra.mxu0 0.0
        %5963 = vmatprep.subr.mxu0 0.0
        %5964 = vmatpush1.msra.mxu0 0.0
        %5965 = vmatprep.subr.mxu0 0.0
        %5966 = vmatpush1.msra.mxu0 0.0
        %5967 = vmatprep.subr.mxu0 0.0
        %5968 = vmatpush1.msra.mxu0 0.0
        %5969 = vmatprep.subr.mxu0 0.0
        %5970 = vmatpush1.msra.mxu0 0.0
        %5971 = vmatprep.subr.mxu0 0.0
        %5972 = vmatpush1.msra.mxu0 0.0
        %5973 = vmatprep.subr.mxu0 0.0
        %5974 = vmatpush1.msra.mxu0 0.0
        %5975 = vmatprep.subr.mxu0 0.0
        %5976 = vmatpush1.msra.mxu0 0.0
        %5977 = vmatprep.subr.mxu0 0.0
        %5978 = vmatpush1.msra.mxu0 0.0
        %5979 = vmatprep.subr.mxu0 0.0
        %5980 = vmatpush1.msra.mxu0 0.0
        %5981 = vmatprep.subr.mxu0 0.0
        %5982 = vmatpush1.msra.mxu0 0.0
        %5983 = vmatprep.subr.mxu0 0.0
        %5984 = vmatpush1.msra.mxu0 0.0
        %5985 = vmatprep.subr.mxu0 0.0
        %5986 = vmatpush1.msra.mxu0 0.0
        %5987 = vmatprep.subr.mxu0 0.0
        %5988 = vmatpush1.msra.mxu0 0.0
        %5989 = vmatprep.subr.mxu0 0.0
        %5990 = vmatpush1.msra.mxu0 0.0
        %5991 = vmatprep.subr.mxu0 0.0
        %5992 = vmatpush1.msra.mxu0 0.0
        %5993 = vmatprep.subr.mxu0 0.0
        %5994 = vmatpush1.msra.mxu0 0.0
        %5995 = vmatprep.subr.mxu0 0.0
        %5996 = vmatpush1.msra.mxu0 0.0
        %5997 = vmatprep.subr.mxu0 0.0
        %5998 = vmatpush1.msra.mxu0 0.0
        %5999 = vmatprep.subr.mxu0 0.0
        %6000 = vmatpush1.msra.mxu0 0.0
        %6001 = vmatprep.subr.mxu0 0.0
        %6002 = vmatpush1.msra.mxu0 0.0
        %6003 = vmatprep.subr.mxu0 0.0
        %6004 = vmatpush1.msra.mxu0 0.0
        %6005 = vmatprep.subr.mxu0 0.0
        %6006 = vmatpush1.msra.mxu0 0.0
        %6007 = vmatprep.subr.mxu0 0.0
        %6008 = vmatpush1.msra.mxu0 0.0
        %6009 = vmatprep.mubr.f32.mxu0 0.0
        %6010 = vmatmul.mubr.f32.gmra.mrb[0].mxu0 %v5943
        %v6011 = vpop.f32.mrb[0].mxu0
        %v6012 = vadd.f32 0.0, %v6011
        %v6013 = vpop.f32.mrb[0].mxu0
        %6014 = vdwg.mxu0
        %v6015 = vadd.f32 %v5932, %v6012
        %s6016 = scalar_lea.vmem %s6, 192
        %v6017 = vld [vmem:[%s6016] sm:$0xff]
        %v6018 = vld [vmem:[%s6016 + $0x8] sm:$0xff]
        %v6019 = vld [vmem:[%s6016 + $0x10] sm:$0xff]
        %v6020 = vld [vmem:[%s6016 + $0x18] sm:$0xff]
        %v6021 = vld [vmem:[%s6016 + $0x20] sm:$0xff]
        %v6022 = vld [vmem:[%s6016 + $0x28] sm:$0xff]
        %v6023 = vld [vmem:[%s6016 + $0x30] sm:$0xff]
        %v6024 = vld [vmem:[%s6016 + $0x38] sm:$0xff]
        %v6025 = vrot.slane %v5765, 3
        %v6026 = vsel %vm5775, %v6025, 0
        %6028 = vmatprep.subr.mxu0 0.0
        %6029 = vmatpush1.msra.mxu0 %v6017
        %6030 = vmatprep.subr.mxu0 0.0
        %6031 = vmatpush1.msra.mxu0 %v6018
        %6032 = vmatprep.subr.mxu0 0.0
        %6033 = vmatpush1.msra.mxu0 %v6019
        %6034 = vmatprep.subr.mxu0 0.0
        %6035 = vmatpush1.msra.mxu0 %v6020
        %6036 = vmatprep.subr.mxu0 0.0
        %6037 = vmatpush1.msra.mxu0 %v6021
        %6038 = vmatprep.subr.mxu0 0.0
        %6039 = vmatpush1.msra.mxu0 %v6022
        %6040 = vmatprep.subr.mxu0 0.0
        %6041 = vmatpush1.msra.mxu0 %v6023
        %6042 = vmatprep.subr.mxu0 0.0
        %6043 = vmatpush1.msra.mxu0 %v6024
        %6044 = vmatprep.subr.mxu0 0.0
        %6045 = vmatpush1.msra.mxu0 0.0
        %6046 = vmatprep.subr.mxu0 0.0
        %6047 = vmatpush1.msra.mxu0 0.0
        %6048 = vmatprep.subr.mxu0 0.0
        %6049 = vmatpush1.msra.mxu0 0.0
        %6050 = vmatprep.subr.mxu0 0.0
        %6051 = vmatpush1.msra.mxu0 0.0
        %6052 = vmatprep.subr.mxu0 0.0
        %6053 = vmatpush1.msra.mxu0 0.0
        %6054 = vmatprep.subr.mxu0 0.0
        %6055 = vmatpush1.msra.mxu0 0.0
        %6056 = vmatprep.subr.mxu0 0.0
        %6057 = vmatpush1.msra.mxu0 0.0
        %6058 = vmatprep.subr.mxu0 0.0
        %6059 = vmatpush1.msra.mxu0 0.0
        %6060 = vmatprep.subr.mxu0 0.0
        %6061 = vmatpush1.msra.mxu0 0.0
        %6062 = vmatprep.subr.mxu0 0.0
        %6063 = vmatpush1.msra.mxu0 0.0
        %6064 = vmatprep.subr.mxu0 0.0
        %6065 = vmatpush1.msra.mxu0 0.0
        %6066 = vmatprep.subr.mxu0 0.0
        %6067 = vmatpush1.msra.mxu0 0.0
        %6068 = vmatprep.subr.mxu0 0.0
        %6069 = vmatpush1.msra.mxu0 0.0
        %6070 = vmatprep.subr.mxu0 0.0
        %6071 = vmatpush1.msra.mxu0 0.0
        %6072 = vmatprep.subr.mxu0 0.0
        %6073 = vmatpush1.msra.mxu0 0.0
        %6074 = vmatprep.subr.mxu0 0.0
        %6075 = vmatpush1.msra.mxu0 0.0
        %6076 = vmatprep.subr.mxu0 0.0
        %6077 = vmatpush1.msra.mxu0 0.0
        %6078 = vmatprep.subr.mxu0 0.0
        %6079 = vmatpush1.msra.mxu0 0.0
        %6080 = vmatprep.subr.mxu0 0.0
        %6081 = vmatpush1.msra.mxu0 0.0
        %6082 = vmatprep.subr.mxu0 0.0
        %6083 = vmatpush1.msra.mxu0 0.0
        %6084 = vmatprep.subr.mxu0 0.0
        %6085 = vmatpush1.msra.mxu0 0.0
        %6086 = vmatprep.subr.mxu0 0.0
        %6087 = vmatpush1.msra.mxu0 0.0
        %6088 = vmatprep.subr.mxu0 0.0
        %6089 = vmatpush1.msra.mxu0 0.0
        %6090 = vmatprep.subr.mxu0 0.0
        %6091 = vmatpush1.msra.mxu0 0.0
        %6092 = vmatprep.mubr.f32.mxu0 0.0
        %6093 = vmatmul.mubr.f32.gmra.mrb[0].mxu0 %v6026
        %v6094 = vpop.f32.mrb[0].mxu0
        %v6095 = vadd.f32 0.0, %v6094
        %v6096 = vpop.f32.mrb[0].mxu0
        %6097 = vdwg.mxu0
        %v6098 = vadd.f32 %v6015, %v6095
        %s6099 = scalar_lea.vmem %s6, 256
        %v6100 = vld [vmem:[%s6099] sm:$0xff]
        %v6101 = vld [vmem:[%s6099 + $0x8] sm:$0xff]
        %v6102 = vld [vmem:[%s6099 + $0x10] sm:$0xff]
        %v6103 = vld [vmem:[%s6099 + $0x18] sm:$0xff]
        %v6104 = vld [vmem:[%s6099 + $0x20] sm:$0xff]
        %v6105 = vld [vmem:[%s6099 + $0x28] sm:$0xff]
        %v6106 = vld [vmem:[%s6099 + $0x30] sm:$0xff]
        %v6107 = vld [vmem:[%s6099 + $0x38] sm:$0xff]
        %v6108 = vrot.slane %v5765, 4
        %v6109 = vsel %vm5775, %v6108, 0
        %6111 = vmatprep.subr.mxu0 0.0
        %6112 = vmatpush1.msra.mxu0 %v6100
        %6113 = vmatprep.subr.mxu0 0.0
        %6114 = vmatpush1.msra.mxu0 %v6101
        %6115 = vmatprep.subr.mxu0 0.0
        %6116 = vmatpush1.msra.mxu0 %v6102
        %6117 = vmatprep.subr.mxu0 0.0
        %6118 = vmatpush1.msra.mxu0 %v6103
        %6119 = vmatprep.subr.mxu0 0.0
        %6120 = vmatpush1.msra.mxu0 %v6104
        %6121 = vmatprep.subr.mxu0 0.0
        %6122 = vmatpush1.msra.mxu0 %v6105
        %6123 = vmatprep.subr.mxu0 0.0
        %6124 = vmatpush1.msra.mxu0 %v6106
        %6125 = vmatprep.subr.mxu0 0.0
        %6126 = vmatpush1.msra.mxu0 %v6107
        %6127 = vmatprep.subr.mxu0 0.0
        %6128 = vmatpush1.msra.mxu0 0.0
        %6129 = vmatprep.subr.mxu0 0.0
        %6130 = vmatpush1.msra.mxu0 0.0
        %6131 = vmatprep.subr.mxu0 0.0
        %6132 = vmatpush1.msra.mxu0 0.0
        %6133 = vmatprep.subr.mxu0 0.0
        %6134 = vmatpush1.msra.mxu0 0.0
        %6135 = vmatprep.subr.mxu0 0.0
        %6136 = vmatpush1.msra.mxu0 0.0
        %6137 = vmatprep.subr.mxu0 0.0
        %6138 = vmatpush1.msra.mxu0 0.0
        %6139 = vmatprep.subr.mxu0 0.0
        %6140 = vmatpush1.msra.mxu0 0.0
        %6141 = vmatprep.subr.mxu0 0.0
        %6142 = vmatpush1.msra.mxu0 0.0
        %6143 = vmatprep.subr.mxu0 0.0
        %6144 = vmatpush1.msra.mxu0 0.0
        %6145 = vmatprep.subr.mxu0 0.0
        %6146 = vmatpush1.msra.mxu0 0.0
        %6147 = vmatprep.subr.mxu0 0.0
        %6148 = vmatpush1.msra.mxu0 0.0
        %6149 = vmatprep.subr.mxu0 0.0
        %6150 = vmatpush1.msra.mxu0 0.0
        %6151 = vmatprep.subr.mxu0 0.0
        %6152 = vmatpush1.msra.mxu0 0.0
        %6153 = vmatprep.subr.mxu0 0.0
        %6154 = vmatpush1.msra.mxu0 0.0
        %6155 = vmatprep.subr.mxu0 0.0
        %6156 = vmatpush1.msra.mxu0 0.0
        %6157 = vmatprep.subr.mxu0 0.0
        %6158 = vmatpush1.msra.mxu0 0.0
        %6159 = vmatprep.subr.mxu0 0.0
        %6160 = vmatpush1.msra.mxu0 0.0
        %6161 = vmatprep.subr.mxu0 0.0
        %6162 = vmatpush1.msra.mxu0 0.0
        %6163 = vmatprep.subr.mxu0 0.0
        %6164 = vmatpush1.msra.mxu0 0.0
        %6165 = vmatprep.subr.mxu0 0.0
        %6166 = vmatpush1.msra.mxu0 0.0
        %6167 = vmatprep.subr.mxu0 0.0
        %6168 = vmatpush1.msra.mxu0 0.0
        %6169 = vmatprep.subr.mxu0 0.0
        %6170 = vmatpush1.msra.mxu0 0.0
        %6171 = vmatprep.subr.mxu0 0.0
        %6172 = vmatpush1.msra.mxu0 0.0
        %6173 = vmatprep.subr.mxu0 0.0
        %6174 = vmatpush1.msra.mxu0 0.0
        %6175 = vmatprep.mubr.f32.mxu0 0.0
        %6176 = vmatmul.mubr.f32.gmra.mrb[0].mxu0 %v6109
        %v6177 = vpop.f32.mrb[0].mxu0
        %v6178 = vadd.f32 0.0, %v6177
        %v6179 = vpop.f32.mrb[0].mxu0
        %6180 = vdwg.mxu0
        %v6181 = vadd.f32 %v6098, %v6178
        %v6182 = vmax.f32 %v6181, 0.0
        %v6183 = vld [vmem:[%s8] sm:$0xff]
        %v6184 = vld [vmem:[%s8 + $0x8] sm:$0xff]
        %v6185 = vld [vmem:[%s8 + $0x10] sm:$0xff]
        %v6186 = vld [vmem:[%s8 + $0x18] sm:$0xff]
        %v6187 = vld [vmem:[%s8 + $0x20] sm:$0xff]
        %v6188 = vld [vmem:[%s8 + $0x28] sm:$0xff]
        %v6189 = vld [vmem:[%s8 + $0x30] sm:$0xff]
        %v6190 = vld [vmem:[%s8 + $0x38] sm:$0xff]
        %v6191 = vld [vmem:[%s8 + $0x40] sm:$0xff]
        %v6192 = vld [vmem:[%s8 + $0x48] sm:$0xff]
        %v6193 = vld [vmem:[%s8 + $0x50] sm:$0xff]
        %v6194 = vld [vmem:[%s8 + $0x58] sm:$0xff]
        %v6195 = vld [vmem:[%s8 + $0x60] sm:$0xff]
        %v6196 = vld [vmem:[%s8 + $0x68] sm:$0xff]
        %v6197 = vld [vmem:[%s8 + $0x70] sm:$0xff]
        %v6198 = vld [vmem:[%s8 + $0x78] sm:$0xff]
        %v6199 = vld [vmem:[%s9] sm:$0x1]
        %6200 = vmatprep.subr.mxu0 0.0
        %6201 = vmatpush1.msra.mxu0 %v6183
        %6202 = vmatprep.subr.mxu0 0.0
        %6203 = vmatpush1.msra.mxu0 %v6184
        %6204 = vmatprep.subr.mxu0 0.0
        %6205 = vmatpush1.msra.mxu0 %v6185
        %6206 = vmatprep.subr.mxu0 0.0
        %6207 = vmatpush1.msra.mxu0 %v6186
        %6208 = vmatprep.subr.mxu0 0.0
        %6209 = vmatpush1.msra.mxu0 %v6187
        %6210 = vmatprep.subr.mxu0 0.0
        %6211 = vmatpush1.msra.mxu0 %v6188
        %6212 = vmatprep.subr.mxu0 0.0
        %6213 = vmatpush1.msra.mxu0 %v6189
        %6214 = vmatprep.subr.mxu0 0.0
        %6215 = vmatpush1.msra.mxu0 %v6190
        %6216 = vmatprep.subr.mxu0 0.0
        %6217 = vmatpush1.msra.mxu0 %v6191
        %6218 = vmatprep.subr.mxu0 0.0
        %6219 = vmatpush1.msra.mxu0 %v6192
        %6220 = vmatprep.subr.mxu0 0.0
        %6221 = vmatpush1.msra.mxu0 %v6193
        %6222 = vmatprep.subr.mxu0 0.0
        %6223 = vmatpush1.msra.mxu0 %v6194
        %6224 = vmatprep.subr.mxu0 0.0
        %6225 = vmatpush1.msra.mxu0 %v6195
        %6226 = vmatprep.subr.mxu0 0.0
        %6227 = vmatpush1.msra.mxu0 %v6196
        %6228 = vmatprep.subr.mxu0 0.0
        %6229 = vmatpush1.msra.mxu0 %v6197
        %6230 = vmatprep.subr.mxu0 0.0
        %6231 = vmatpush1.msra.mxu0 %v6198
        %6232 = vmatprep.subr.mxu0 0.0
        %6233 = vmatpush1.msra.mxu0 0.0
        %6234 = vmatprep.subr.mxu0 0.0
        %6235 = vmatpush1.msra.mxu0 0.0
        %6236 = vmatprep.subr.mxu0 0.0
        %6237 = vmatpush1.msra.mxu0 0.0
        %6238 = vmatprep.subr.mxu0 0.0
        %6239 = vmatpush1.msra.mxu0 0.0
        %6240 = vmatprep.subr.mxu0 0.0
        %6241 = vmatpush1.msra.mxu0 0.0
        %6242 = vmatprep.subr.mxu0 0.0
        %6243 = vmatpush1.msra.mxu0 0.0
        %6244 = vmatprep.subr.mxu0 0.0
        %6245 = vmatpush1.msra.mxu0 0.0
        %6246 = vmatprep.subr.mxu0 0.0
        %6247 = vmatpush1.msra.mxu0 0.0
        %6248 = vmatprep.subr.mxu0 0.0
        %6249 = vmatpush1.msra.mxu0 0.0
        %6250 = vmatprep.subr.mxu0 0.0
        %6251 = vmatpush1.msra.mxu0 0.0
        %6252 = vmatprep.subr.mxu0 0.0
        %6253 = vmatpush1.msra.mxu0 0.0
        %6254 = vmatprep.subr.mxu0 0.0
        %6255 = vmatpush1.msra.mxu0 0.0
        %6256 = vmatprep.subr.mxu0 0.0
        %6257 = vmatpush1.msra.mxu0 0.0
        %6258 = vmatprep.subr.mxu0 0.0
        %6259 = vmatpush1.msra.mxu0 0.0
        %6260 = vmatprep.subr.mxu0 0.0
        %6261 = vmatpush1.msra.mxu0 0.0
        %6262 = vmatprep.subr.mxu0 0.0
        %6263 = vmatpush1.msra.mxu0 0.0
        %6264 = vmatprep.mubr.f32.mxu0 0.0
        %6265 = vmatmul.mubr.f32.gmra.mrb[0].mxu0 %v6182
        %v6266 = vpop.f32.mrb[0].mxu0
        %v6267 = vadd.f32 %v6199, %v6266
        %v6268 = vpop.f32.mrb[0].mxu0
        %6269 = vdwg.mxu0
        %v6270 = vsub.f32 0.0, %v6267
        %v6271 = vmul.f32 %v6270, 1.442695
        %v6272 = vpow.pop %v6271
        %v6273 = vadd.f32 %v6272, 1.0
        %v6274 = vrcp.pop %v6273
        %v6275 = vmul.f32 1.0, %v6274
        %6276 = vst [vmem:[%s351] sm:$0x1] %v6275
        %s6277 = sand.u32 %s247, 1
        %s6278 = scalar_lea.sflag [#allocation3], %s6277
        %s6279 = sand.u32 %s247, 1
        %s6280 = scalar_lea.vmem [#allocation2], %s6279
        // Predicated region
        $region61: #{lane_exist_forward.1} parent=59 // pred_check
          %p6281 = pneg %p257
        $region62: #{lane_exist_forward.1} parent=59 // pred_check_branch
          %6283 = sbr.rel (%p6281) target = $region64
        $region63: #{lane_exist_forward.1} parent=59 // pred_region
          %s6285 = ssub.s32 16, 16
          %6286 = vsyncadd %s6278, %s6285
          %s6287 = smul.addr %s24, 16
          %s6288 = scalar_lea.hbm %s10, %s6287
          %s6290 = sshll.u32 %s6280, 4
          %s6291 = int_to_ptr.vmem [resolvable:$true] %s6290
          %6293 = dma.vmem_to_hbm [thread:$0]  %s6291, 16, %s6288, %s6278
        $region64: #{lane_exist_forward.1} parent=59 // pred_fallthru
          _
      $region60: #{lane_exist_forward.1} parent=5 // pred_fallthru
        _
      %p6294 = scmp.le.s32.totalorder 2, %s19
      // Predicated region
      $region65: #{lane_exist_forward.1} parent=5 // pred_check
        %p6295 = pneg %p6294
      $region66: #{lane_exist_forward.1} parent=5 // pred_check_branch
        %6297 = sbr.rel (%p6295) target = $region68
      $region67: #{lane_exist_forward.1} parent=5 // pred_region
        %s6298 = ssub.s32 %s19, 2
        // Predicated region
        $region69: #{lane_exist_forward.1} parent=67 // pred_check
          %p6299 = pneg %p263
        $region70: #{lane_exist_forward.1} parent=67 // pred_check_branch
          %6301 = sbr.rel (%p6299) target = $region72
        $region71: #{lane_exist_forward.1} parent=67 // pred_region
          %s6302 = sand.u32 %s248, 1
          %s6303 = scalar_lea.sflag [#allocation3], %s6302
          %s6304 = sand.u32 %s248, 1
          %s6305 = scalar_lea.vmem [#allocation2], %s6304
          %6306 = dma.done %s6303, 16
        $region72: #{lane_exist_forward.1} parent=67 // pred_fallthru
          _
      $region68: #{lane_exist_forward.1} parent=5 // pred_fallthru
        _
    $region6: #{lane_exist_forward.1} parent=1 // loop_footer
      %s23 = sadd.s32 1, %s19
    $region7: #{lane_exist_forward.1} parent=1 // loop_footer_branch
      %18 = sbr.rel target = $region3
    $region8: #{lane_exist_forward.1} parent=1 // loop_exit
      _
    %6307 = vsyncpa [#allocation3], 1
    %s6308 = scalar_lea.sflag [#allocation3], 1
    %6309 = vsyncpa %s6308, 1

</llo_original>
